<compile_context>
chip_gen: v7x
topology: tpu7x:2x2x1
jax: 0.10.0
libtpu: 0.0.40
codegen_flags: <defaults>
</compile_context>

<pallas_src>
import functools

import jax
import jax.numpy as jnp
from jax import lax
from jax.experimental import pallas as pl
from jax.experimental.pallas import tpu as pltpu


# ---------------------------------------------------------------------------
# Fused Pallas kernel: conv1 + pool + conv2 + pool + fc1 + fc2 + fc3
# ---------------------------------------------------------------------------
def _coolnet_kernel(x_ref, m1_ref, cb1_ref, m2_ref, cb2_ref,
                    w1_ref, fb1_ref, w2_ref, fb2_ref, w3_ref, fb3_ref,
                    o_ref, flat_ref, *, taps, co1, co2, oh2):
    """Fused CoolNet forward for one batch block.

    x_ref   : (BT, 2, 14, 480) bf16  K-stacked conv1 im2row, [even, odd] output rows
    m1_ref  : (480, 168) bf16        conv1 banded weights (im2col folded into weights)
    cb1_ref : (1, 168)   f32         conv1 bias tiled over output width
    m2_ref  : (840, 160) bf16        conv2 banded weights over the pooled stage-1 layout
    cb2_ref : (1, 800)   f32         conv2 bias tiled over the flattened pooled layout
    w1_ref  : (800, 120) bf16        fc1 remapped to the pooled lane layout (zero rows at
                                     pool-garbage lanes)
    w2_ref  : (120, 84)  bf16        fc2 (transposed)
    w3_ref  : (84, 128)  bf16        fc3 (transposed, zero-padded to 128 output lanes)
    o_ref   : (BT, 128)  f32         padded logits
    flat_ref: (BT, 800)  f32         VMEM scratch collecting per-sample pooled features
    """
    bt = x_ref.shape[0]
    ph1 = x_ref.shape[2]                  # 14 stage-1 pooled rows
    lanes1 = cb1_ref.shape[1]             # 168 = OW1 * CO1
    ph2 = oh2 // 2                        # 5 stage-2 pooled rows

    # Hoisted out of the per-sample loop (JAX does not CSE broadcast_in_dim).
    cb1 = jnp.broadcast_to(cb1_ref[...], (ph1, lanes1))
    cb2 = cb2_ref[...]                    # (1, 800)

    for s in range(bt):
        # ---- conv1: K-stacked banded GEMM; even/odd output rows -> row-pool is one max ----
        a_even = jnp.dot(x_ref[s, 0], m1_ref[...], preferred_element_type=jnp.float32)
        a_odd = jnp.dot(x_ref[s, 1], m1_ref[...], preferred_element_type=jnp.float32)
        r1 = jnp.maximum(a_even, a_odd)                                   # (14, 168)
        # Lane (width) pool: compare lane ow*6+co with (ow+1)*6+co; wrapped lanes only land
        # on odd-ow "garbage" lane groups whose downstream weights are zero.
        r1 = jnp.maximum(r1, jnp.concatenate([r1[:, co1:], r1[:, :co1]], axis=-1))
        # Per-channel bias + ReLU commute with max-pool (monotone), so apply once, post-pool.
        p1 = jnp.maximum(r1 + cb1, 0.0)                                   # (14, 168) f32

        # ---- conv2: K-stacked im2row via one lane concat of the 5 kh taps ----
        lhs2 = jnp.concatenate([p1[kh:kh + oh2, :] for kh in range(taps)], axis=-1)
        a2 = jnp.dot(lhs2.astype(jnp.bfloat16), m2_ref[...],
                     preferred_element_type=jnp.float32)                  # (10, 160)

        # ---- 2x2 pool flattened straight into the fc1 lane layout ----
        row_max = [jnp.maximum(a2[2 * q:2 * q + 1, :], a2[2 * q + 1:2 * q + 2, :])
                   for q in range(ph2)]
        f = jnp.concatenate(row_max, axis=-1)                             # (1, 800)
        f = jnp.maximum(f, jnp.concatenate([f[:, co2:], f[:, :co2]], axis=-1))
        f = jnp.maximum(f + cb2, 0.0)
        flat_ref[s:s + 1, :] = f

    # ---- fused fc1/fc2/fc3 tail, batched over the block (M = BT instead of 1) ----
    flat = flat_ref[...].astype(jnp.bfloat16)                             # (BT, 800)
    h1 = jnp.dot(flat, w1_ref[...], preferred_element_type=jnp.float32) + fb1_ref[...]
    h1 = jnp.maximum(h1, 0.0).astype(jnp.bfloat16)                        # (BT, 120)
    h2 = jnp.dot(h1, w2_ref[...], preferred_element_type=jnp.float32) + fb2_ref[...]
    h2 = jnp.maximum(h2, 0.0).astype(jnp.bfloat16)                        # (BT, 84)
    out = jnp.dot(h2, w3_ref[...], preferred_element_type=jnp.float32) + fb3_ref[...]
    o_ref[...] = out.astype(o_ref.dtype)                                  # (BT, 128)


# ---------------------------------------------------------------------------
# Weight-side layout plumbing (tiny tensors; pure placement, no arithmetic)
# ---------------------------------------------------------------------------
def _banded_conv_weights(w_oihw, in_width):
    """Fold im2col into the weights.

    Returns M with M[kh][(w*Cin + ci), (ow*Cout + co)] = w_oihw[co, ci, kh, w-ow]
    when 0 <= w-ow < KW, else 0.  Then  conv = sum_kh x2d[kh:kh+OH, :] @ M[kh].
    """
    c_out, c_in, k_h, k_w = w_oihw.shape
    out_width = in_width - k_w + 1
    band = (
        jnp.arange(in_width)[None, :, None]
        - jnp.arange(out_width)[None, None, :]
        == jnp.arange(k_w)[:, None, None]
    ).astype(w_oihw.dtype)                                       # (KW, W, OW)
    m = jnp.einsum("xwv,oiyx->ywivo", band, w_oihw)              # (KH, W, Cin, OW, Cout)
    return m.reshape(k_h, in_width * c_in, out_width * c_out).astype(jnp.bfloat16)


# ---------------------------------------------------------------------------
# CoolNet forward
# ---------------------------------------------------------------------------
def coolnet_forward(params, x, *, batch_tile=8):
    B = x.shape[0]
    K = 5
    C1, H1, W1, CO1 = 3, 32, 32, 6
    OH1, OW1 = H1 - K + 1, W1 - K + 1            # 28, 28
    PH1 = OH1 // 2                               # 14
    C2 = 2 * CO1                                 # 12 pooled lanes/pixel (6 real + 6 garbage)
    H2 = W2 = PH1                                # 14
    CO2 = 16
    OH2, OW2 = H2 - K + 1, W2 - K + 1            # 10, 10
    PH2, PW2 = OH2 // 2, OW2 // 2                # 5, 5
    NF1, NF2, NF3 = 120, 84, 10
    NOUT = 128                                   # fc3 output padded to one full lane tile

    lanes1 = OW1 * CO1                           # 168
    lanes2 = OW2 * CO2                           # 160
    kwc1 = K * W1 * C1                           # 480  conv1 contraction depth
    kl1 = K * lanes1                             # 840  conv2 contraction depth
    flat_len = PH2 * lanes2                      # 800  pooled stage-2 features (incl. garbage)

    # ---- weight-side layout plumbing (done once under jit) ----
    m1 = _banded_conv_weights(params["conv1_w"], W1).reshape(kwc1, lanes1)            # (480, 168)
    w2p = jnp.pad(params["conv2_w"], ((0, 0), (0, C2 - CO1), (0, 0), (0, 0)))
    m2 = _banded_conv_weights(w2p, W2).reshape(kl1, lanes2)                           # (840, 160)
    cb1 = jnp.tile(params["conv1_b"].astype(jnp.float32), OW1)[None, :]               # (1, 168)
    cb2 = jnp.tile(params["conv2_b"].astype(jnp.float32), OW2 * PH2)[None, :]         # (1, 800)

    # fc1 remapped to the kernel's flattened pooled layout: row = ph*160 + pw*32 + co'
    # (co' >= 16 rows correspond to pool-garbage lanes -> zero).
    w1 = params["fc1_w"].reshape(NF1, CO2, PH2, PW2).transpose(2, 3, 1, 0)            # (ph,pw,co,n)
    w1 = jnp.pad(w1, ((0, 0), (0, 0), (0, CO2), (0, 0)))
    w1f = w1.reshape(flat_len, NF1).astype(jnp.bfloat16)                              # (800, 120)
    w2t = params["fc2_w"].T.astype(jnp.bfloat16)                                      # (120, 84)
    w3t = jnp.pad(params["fc3_w"].T, ((0, 0), (0, NOUT - NF3))).astype(jnp.bfloat16)  # (84, 128)
    fb1 = params["fc1_b"].astype(jnp.float32)[None, :]
    fb2 = params["fc2_b"].astype(jnp.float32)[None, :]
    fb3 = jnp.pad(params["fc3_b"].astype(jnp.float32), (0, NOUT - NF3))[None, :]

    # ---- activations: NCHW -> NHWC-2D (bf16) -> K-stacked im2row, split into even/odd rows ----
    x2d = x.astype(jnp.bfloat16).transpose(0, 2, 3, 1).reshape(B, H1, W1 * C1)        # (B, 32, 96)
    rows = jnp.concatenate([x2d[:, kh:kh + OH1, :] for kh in range(K)], axis=-1)      # (B, 28, 480)
    x_in = jnp.stack([rows[:, 0::2, :], rows[:, 1::2, :]], axis=1)                    # (B, 2, 14, 480)

    # ---- batch blocking: BT samples per grid step; pad B so the (BT, 128) output block
    #      stays sublane-aligned (BT == padded B, or BT a multiple of 8). ----
    if B <= batch_tile:
        bt, bp = B, B
    else:
        bt = max(8, (batch_tile // 8) * 8)
        bp = pl.cdiv(B, bt) * bt
    if bp != B:
        x_in = jnp.pad(x_in, ((0, bp - B), (0, 0), (0, 0), (0, 0)))
    grid = (bp // bt,)

    flops = 2 * bp * (OH1 * kwc1 * lanes1 + OH2 * kl1 * lanes2
                      + flat_len * NF1 + NF1 * NF2 + NF2 * NOUT)
    bytes_accessed = (x_in.size * 2
                      + (m1.size + m2.size + w1f.size + w2t.size + w3t.size) * 2
                      + (cb1.size + cb2.size + fb1.size + fb2.size + fb3.size) * 4
                      + bp * NOUT * 4)

    out = pl.pallas_call(
        functools.partial(_coolnet_kernel, taps=K, co1=CO1, co2=CO2, oh2=OH2),
        out_shape=jax.ShapeDtypeStruct((bp, NOUT), jnp.float32),
        grid=grid,
        in_specs=[
            pl.BlockSpec((bt, 2, PH1, kwc1), lambda b: (b, 0, 0, 0)),   # im2row input
            pl.BlockSpec((kwc1, lanes1), lambda b: (0, 0)),             # conv1 banded weights
            pl.BlockSpec((1, lanes1), lambda b: (0, 0)),                # conv1 bias row
            pl.BlockSpec((kl1, lanes2), lambda b: (0, 0)),              # conv2 banded weights
            pl.BlockSpec((1, flat_len), lambda b: (0, 0)),              # conv2 bias (flat layout)
            pl.BlockSpec((flat_len, NF1), lambda b: (0, 0)),            # fc1
            pl.BlockSpec((1, NF1), lambda b: (0, 0)),
            pl.BlockSpec((NF1, NF2), lambda b: (0, 0)),                 # fc2
            pl.BlockSpec((1, NF2), lambda b: (0, 0)),
            pl.BlockSpec((NF2, NOUT), lambda b: (0, 0)),                # fc3 (padded)
            pl.BlockSpec((1, NOUT), lambda b: (0, 0)),
        ],
        out_specs=pl.BlockSpec((bt, NOUT), lambda b: (b, 0)),
        scratch_shapes=[pltpu.VMEM((bt, flat_len), jnp.float32)],
        compiler_params=pltpu.CompilerParams(dimension_semantics=("parallel",)),
        cost_estimate=pl.CostEstimate(flops=flops, transcendentals=0,
                                      bytes_accessed=bytes_accessed),
    )(x_in, m1, cb1, m2, cb2, w1f, fb1, w2t, fb2, w3t, fb3)

    return out[:B, :NF3]


# ---------------------------------------------------------------------------
# Pure-JAX reference replicating the kernel's bf16-operand / f32-accumulate math
# ---------------------------------------------------------------------------
def reference_forward(params, x):
    bf16 = jnp.bfloat16

    def conv(x_, w, b):
        y = lax.conv_general_dilated(
            x_.astype(bf16), w.astype(bf16), window_strides=(1, 1), padding="VALID",
            dimension_numbers=("NCHW", "OIHW", "NCHW"),
            preferred_element_type=jnp.float32,
        )
        return jnp.maximum(y + b[None, :, None, None], 0.0)

    def pool(y):
        return lax.reduce_window(
            y, -jnp.inf, lax.max,
            window_dimensions=(1, 1, 2, 2), window_strides=(1, 1, 2, 2),
            padding="VALID",
        )

    def dense(h, w, b, relu):
        y = jnp.dot(h.astype(bf16), w.T.astype(bf16),
                    preferred_element_type=jnp.float32) + b
        return jnp.maximum(y, 0.0) if relu else y

    y = pool(conv(x, params["conv1_w"], params["conv1_b"]))
    y = pool(conv(y, params["conv2_w"], params["conv2_b"]))
    flat = y.reshape(x.shape[0], 16 * 5 * 5)
    h = dense(flat, params["fc1_w"], params["fc1_b"], relu=True)
    h = dense(h, params["fc2_w"], params["fc2_b"], relu=True)
    return dense(h, params["fc3_w"], params["fc3_b"], relu=False)


# ---------------------------------------------------------------------------
# Deterministic parameter init (PyTorch default-style uniform bounds)
# ---------------------------------------------------------------------------
def init_params(key):
    ks = jax.random.split(key, 10)

    def u(k, shape, fan_in):
        bound = 1.0 / (fan_in ** 0.5)
        return jax.random.uniform(k, shape, jnp.float32, -bound, bound)

    return {
        "conv1_w": u(ks[0], (6, 3, 5, 5), 3 * 5 * 5),
        "conv1_b": u(ks[1], (6,), 3 * 5 * 5),
        "conv2_w": u(ks[2], (16, 6, 5, 5), 6 * 5 * 5),
        "conv2_b": u(ks[3], (16,), 6 * 5 * 5),
        "fc1_w": u(ks[4], (120, 400), 400),
        "fc1_b": u(ks[5], (120,), 400),
        "fc2_w": u(ks[6], (84, 120), 120),
        "fc2_b": u(ks[7], (84,), 120),
        "fc3_w": u(ks[8], (10, 84), 84),
        "fc3_b": u(ks[9], (10,), 84),
    }


if __name__ == "__main__":
    root = jax.random.PRNGKey(0)
    k_params, k_x = jax.random.split(root)
    params = init_params(k_params)

    # CoolNet implies CIFAR-style input: 3 channels, 32x32 spatial (so that the
    # flatten to 16*5*5 = 400 is exact). Small batch = 2.
    x = jax.random.normal(k_x, (2, 3, 32, 32), jnp.float32)

    fwd = jax.jit(coolnet_forward)
    out = jax.block_until_ready(fwd(params, x))
    assert out.shape == (2, 10), out.shape

    ref = jax.block_until_ready(reference_forward(params, x))
    max_err = float(jnp.max(jnp.abs(out - ref)))
    assert jnp.allclose(out, ref, rtol=5e-3, atol=5e-3), max_err

    print("KERNEL_OK")
</pallas_src>

<mosaic_0001>
module attributes {stable_mosaic.version = 11 : i64} {
  func.func @_coolnet_kernel(%arg0: i32, %arg1: memref<2x2x14x480xbf16, #tpu.memory_space<vmem>>, %arg2: memref<480x168xbf16, #tpu.memory_space<vmem>>, %arg3: memref<1x168xf32, #tpu.memory_space<vmem>>, %arg4: memref<840x160xbf16, #tpu.memory_space<vmem>>, %arg5: memref<1x800xf32, #tpu.memory_space<vmem>>, %arg6: memref<800x120xbf16, #tpu.memory_space<vmem>>, %arg7: memref<1x120xf32, #tpu.memory_space<vmem>>, %arg8: memref<120x84xbf16, #tpu.memory_space<vmem>>, %arg9: memref<1x84xf32, #tpu.memory_space<vmem>>, %arg10: memref<84x128xbf16, #tpu.memory_space<vmem>>, %arg11: memref<1x128xf32, #tpu.memory_space<vmem>>, %arg12: memref<2x128xf32, #tpu.memory_space<vmem>>, %arg13: memref<2x800xf32, #tpu.memory_space<vmem>>) attributes {dimension_semantics = [#tpu.dimension_semantics<parallel>], iteration_bounds = array<i64: 1>, scalar_prefetch = 0 : i64, scratch_operands = 1 : i64, tpu.core_type = #tpu.core_type<tc>, window_params = [{transform_indices = @transform_0, window_bounds = array<i64: 2, 2, 14, 480>}, {pipeline_mode = #tpu.pipeline_mode<synchronous>, transform_indices = @transform_1, window_bounds = array<i64: 480, 168>}, {pipeline_mode = #tpu.pipeline_mode<synchronous>, transform_indices = @transform_2, window_bounds = array<i64: 1, 168>}, {pipeline_mode = #tpu.pipeline_mode<synchronous>, transform_indices = @transform_3, window_bounds = array<i64: 840, 160>}, {pipeline_mode = #tpu.pipeline_mode<synchronous>, transform_indices = @transform_4, window_bounds = array<i64: 1, 800>}, {pipeline_mode = #tpu.pipeline_mode<synchronous>, transform_indices = @transform_5, window_bounds = array<i64: 800, 120>}, {pipeline_mode = #tpu.pipeline_mode<synchronous>, transform_indices = @transform_6, window_bounds = array<i64: 1, 120>}, {pipeline_mode = #tpu.pipeline_mode<synchronous>, transform_indices = @transform_7, window_bounds = array<i64: 120, 84>}, {pipeline_mode = #tpu.pipeline_mode<synchronous>, transform_indices = @transform_8, window_bounds = array<i64: 1, 84>}, {pipeline_mode = #tpu.pipeline_mode<synchronous>, transform_indices = @transform_9, window_bounds = array<i64: 84, 128>}, {pipeline_mode = #tpu.pipeline_mode<synchronous>, transform_indices = @transform_10, window_bounds = array<i64: 1, 128>}, {transform_indices = @transform_11, window_bounds = array<i64: 2, 128>}]} {
    %c0 = arith.constant 0 : index
    %c0_0 = arith.constant 0 : index
    %0 = vector.load %arg3[%c0, %c0_0] : memref<1x168xf32, #tpu.memory_space<vmem>>, vector<1x168xf32>
    %1 = vector.shape_cast %0 : vector<1x168xf32> to vector<1x168xf32>
    %2 = vector.broadcast %1 : vector<1x168xf32> to vector<14x168xf32>
    %c0_1 = arith.constant 0 : index
    %c0_2 = arith.constant 0 : index
    %3 = vector.load %arg5[%c0_1, %c0_2] : memref<1x800xf32, #tpu.memory_space<vmem>>, vector<1x800xf32>
    %c0_3 = arith.constant 0 : index
    %c0_4 = arith.constant 0 : index
    %c0_5 = arith.constant 0 : index
    %c0_6 = arith.constant 0 : index
    %4 = vector.load %arg1[%c0_3, %c0_4, %c0_5, %c0_6] : memref<2x2x14x480xbf16, #tpu.memory_space<vmem>>, vector<1x1x14x480xbf16>
    %5 = vector.shape_cast %4 : vector<1x1x14x480xbf16> to vector<14x480xbf16>
    %c0_7 = arith.constant 0 : index
    %c0_8 = arith.constant 0 : index
    %6 = vector.load %arg2[%c0_7, %c0_8] : memref<480x168xbf16, #tpu.memory_space<vmem>>, vector<480x168xbf16>
    %cst = arith.constant dense<0.000000e+00> : vector<14x168xf32>
    %7 = tpu.matmul %5, %6, %cst {dimension_numbers = #tpu.dot_dimension_numbers<[1], [0], [0], [1], [0, 0, 1, 1], [], []>} : vector<14x480xbf16>, vector<480x168xbf16>, vector<14x168xf32> -> vector<14x168xf32>
    %c0_9 = arith.constant 0 : index
    %c1 = arith.constant 1 : index
    %c0_10 = arith.constant 0 : index
    %c0_11 = arith.constant 0 : index
    %8 = vector.load %arg1[%c0_9, %c1, %c0_10, %c0_11] : memref<2x2x14x480xbf16, #tpu.memory_space<vmem>>, vector<1x1x14x480xbf16>
    %9 = vector.shape_cast %8 : vector<1x1x14x480xbf16> to vector<14x480xbf16>
    %c0_12 = arith.constant 0 : index
    %c0_13 = arith.constant 0 : index
    %10 = vector.load %arg2[%c0_12, %c0_13] : memref<480x168xbf16, #tpu.memory_space<vmem>>, vector<480x168xbf16>
    %cst_14 = arith.constant dense<0.000000e+00> : vector<14x168xf32>
    %11 = tpu.matmul %9, %10, %cst_14 {dimension_numbers = #tpu.dot_dimension_numbers<[1], [0], [0], [1], [0, 0, 1, 1], [], []>} : vector<14x480xbf16>, vector<480x168xbf16>, vector<14x168xf32> -> vector<14x168xf32>
    %12 = arith.maximumf %7, %11 : vector<14x168xf32>
    %13 = vector.extract_strided_slice %12 {offsets = [0, 6], sizes = [14, 162], strides = [1, 1]} : vector<14x168xf32> to vector<14x162xf32>
    %14 = vector.extract_strided_slice %12 {offsets = [0, 0], sizes = [14, 6], strides = [1, 1]} : vector<14x168xf32> to vector<14x6xf32>
    %15 = tpu.concatenate %13, %14 in 1 : vector<14x162xf32>, vector<14x6xf32> -> vector<14x168xf32>
    %16 = arith.maximumf %12, %15 : vector<14x168xf32>
    %17 = arith.addf %16, %2 : vector<14x168xf32>
    %cst_15 = arith.constant 0.000000e+00 : f32
    %18 = vector.broadcast %cst_15 : f32 to vector<14x168xf32>
    %19 = arith.maximumf %17, %18 : vector<14x168xf32>
    %20 = vector.extract_strided_slice %19 {offsets = [0, 0], sizes = [10, 168], strides = [1, 1]} : vector<14x168xf32> to vector<10x168xf32>
    %21 = vector.extract_strided_slice %19 {offsets = [1, 0], sizes = [10, 168], strides = [1, 1]} : vector<14x168xf32> to vector<10x168xf32>
    %22 = vector.extract_strided_slice %19 {offsets = [2, 0], sizes = [10, 168], strides = [1, 1]} : vector<14x168xf32> to vector<10x168xf32>
    %23 = vector.extract_strided_slice %19 {offsets = [3, 0], sizes = [10, 168], strides = [1, 1]} : vector<14x168xf32> to vector<10x168xf32>
    %24 = vector.extract_strided_slice %19 {offsets = [4, 0], sizes = [10, 168], strides = [1, 1]} : vector<14x168xf32> to vector<10x168xf32>
    %25 = tpu.concatenate %20, %21, %22, %23, %24 in 1 : vector<10x168xf32>, vector<10x168xf32>, vector<10x168xf32>, vector<10x168xf32>, vector<10x168xf32> -> vector<10x840xf32>
    %26 = arith.truncf %25 : vector<10x840xf32> to vector<10x840xbf16>
    %c0_16 = arith.constant 0 : index
    %c0_17 = arith.constant 0 : index
    %27 = vector.load %arg4[%c0_16, %c0_17] : memref<840x160xbf16, #tpu.memory_space<vmem>>, vector<840x160xbf16>
    %cst_18 = arith.constant dense<0.000000e+00> : vector<10x160xf32>
    %28 = tpu.matmul %26, %27, %cst_18 {dimension_numbers = #tpu.dot_dimension_numbers<[1], [0], [0], [1], [0, 0, 1, 1], [], []>} : vector<10x840xbf16>, vector<840x160xbf16>, vector<10x160xf32> -> vector<10x160xf32>
    %29 = vector.extract_strided_slice %28 {offsets = [0, 0], sizes = [1, 160], strides = [1, 1]} : vector<10x160xf32> to vector<1x160xf32>
    %30 = vector.extract_strided_slice %28 {offsets = [1, 0], sizes = [1, 160], strides = [1, 1]} : vector<10x160xf32> to vector<1x160xf32>
    %31 = arith.maximumf %29, %30 : vector<1x160xf32>
    %32 = vector.extract_strided_slice %28 {offsets = [2, 0], sizes = [1, 160], strides = [1, 1]} : vector<10x160xf32> to vector<1x160xf32>
    %33 = vector.extract_strided_slice %28 {offsets = [3, 0], sizes = [1, 160], strides = [1, 1]} : vector<10x160xf32> to vector<1x160xf32>
    %34 = arith.maximumf %32, %33 : vector<1x160xf32>
    %35 = vector.extract_strided_slice %28 {offsets = [4, 0], sizes = [1, 160], strides = [1, 1]} : vector<10x160xf32> to vector<1x160xf32>
    %36 = vector.extract_strided_slice %28 {offsets = [5, 0], sizes = [1, 160], strides = [1, 1]} : vector<10x160xf32> to vector<1x160xf32>
    %37 = arith.maximumf %35, %36 : vector<1x160xf32>
    %38 = vector.extract_strided_slice %28 {offsets = [6, 0], sizes = [1, 160], strides = [1, 1]} : vector<10x160xf32> to vector<1x160xf32>
    %39 = vector.extract_strided_slice %28 {offsets = [7, 0], sizes = [1, 160], strides = [1, 1]} : vector<10x160xf32> to vector<1x160xf32>
    %40 = arith.maximumf %38, %39 : vector<1x160xf32>
    %41 = vector.extract_strided_slice %28 {offsets = [8, 0], sizes = [1, 160], strides = [1, 1]} : vector<10x160xf32> to vector<1x160xf32>
    %42 = vector.extract_strided_slice %28 {offsets = [9, 0], sizes = [1, 160], strides = [1, 1]} : vector<10x160xf32> to vector<1x160xf32>
    %43 = arith.maximumf %41, %42 : vector<1x160xf32>
    %44 = tpu.concatenate %31, %34, %37, %40, %43 in 1 : vector<1x160xf32>, vector<1x160xf32>, vector<1x160xf32>, vector<1x160xf32>, vector<1x160xf32> -> vector<1x800xf32>
    %45 = vector.extract_strided_slice %44 {offsets = [0, 16], sizes = [1, 784], strides = [1, 1]} : vector<1x800xf32> to vector<1x784xf32>
    %46 = vector.extract_strided_slice %44 {offsets = [0, 0], sizes = [1, 16], strides = [1, 1]} : vector<1x800xf32> to vector<1x16xf32>
    %47 = tpu.concatenate %45, %46 in 1 : vector<1x784xf32>, vector<1x16xf32> -> vector<1x800xf32>
    %48 = arith.maximumf %44, %47 : vector<1x800xf32>
    %49 = arith.addf %48, %3 : vector<1x800xf32>
    %cst_19 = arith.constant 0.000000e+00 : f32
    %50 = vector.broadcast %cst_19 : f32 to vector<1x800xf32>
    %51 = arith.maximumf %49, %50 : vector<1x800xf32>
    %c0_20 = arith.constant 0 : index
    %c0_21 = arith.constant 0 : index
    %52 = vector.load %arg13[%c0_20, %c0_21] : memref<2x800xf32, #tpu.memory_space<vmem>>, vector<1x800xf32>
    tpu.vector_store %arg13[%c0_20, %c0_21], %51 {strides = array<i32>} : memref<2x800xf32, #tpu.memory_space<vmem>>, vector<1x800xf32>,
    %c1_22 = arith.constant 1 : index
    %c0_23 = arith.constant 0 : index
    %c0_24 = arith.constant 0 : index
    %c0_25 = arith.constant 0 : index
    %53 = vector.load %arg1[%c1_22, %c0_23, %c0_24, %c0_25] : memref<2x2x14x480xbf16, #tpu.memory_space<vmem>>, vector<1x1x14x480xbf16>
    %54 = vector.shape_cast %53 : vector<1x1x14x480xbf16> to vector<14x480xbf16>
    %c0_26 = arith.constant 0 : index
    %c0_27 = arith.constant 0 : index
    %55 = vector.load %arg2[%c0_26, %c0_27] : memref<480x168xbf16, #tpu.memory_space<vmem>>, vector<480x168xbf16>
    %cst_28 = arith.constant dense<0.000000e+00> : vector<14x168xf32>
    %56 = tpu.matmul %54, %55, %cst_28 {dimension_numbers = #tpu.dot_dimension_numbers<[1], [0], [0], [1], [0, 0, 1, 1], [], []>} : vector<14x480xbf16>, vector<480x168xbf16>, vector<14x168xf32> -> vector<14x168xf32>
    %c1_29 = arith.constant 1 : index
    %c1_30 = arith.constant 1 : index
    %c0_31 = arith.constant 0 : index
    %c0_32 = arith.constant 0 : index
    %57 = vector.load %arg1[%c1_29, %c1_30, %c0_31, %c0_32] : memref<2x2x14x480xbf16, #tpu.memory_space<vmem>>, vector<1x1x14x480xbf16>
    %58 = vector.shape_cast %57 : vector<1x1x14x480xbf16> to vector<14x480xbf16>
    %c0_33 = arith.constant 0 : index
    %c0_34 = arith.constant 0 : index
    %59 = vector.load %arg2[%c0_33, %c0_34] : memref<480x168xbf16, #tpu.memory_space<vmem>>, vector<480x168xbf16>
    %cst_35 = arith.constant dense<0.000000e+00> : vector<14x168xf32>
    %60 = tpu.matmul %58, %59, %cst_35 {dimension_numbers = #tpu.dot_dimension_numbers<[1], [0], [0], [1], [0, 0, 1, 1], [], []>} : vector<14x480xbf16>, vector<480x168xbf16>, vector<14x168xf32> -> vector<14x168xf32>
    %61 = arith.maximumf %56, %60 : vector<14x168xf32>
    %62 = vector.extract_strided_slice %61 {offsets = [0, 6], sizes = [14, 162], strides = [1, 1]} : vector<14x168xf32> to vector<14x162xf32>
    %63 = vector.extract_strided_slice %61 {offsets = [0, 0], sizes = [14, 6], strides = [1, 1]} : vector<14x168xf32> to vector<14x6xf32>
    %64 = tpu.concatenate %62, %63 in 1 : vector<14x162xf32>, vector<14x6xf32> -> vector<14x168xf32>
    %65 = arith.maximumf %61, %64 : vector<14x168xf32>
    %66 = arith.addf %65, %2 : vector<14x168xf32>
    %cst_36 = arith.constant 0.000000e+00 : f32
    %67 = vector.broadcast %cst_36 : f32 to vector<14x168xf32>
    %68 = arith.maximumf %66, %67 : vector<14x168xf32>
    %69 = vector.extract_strided_slice %68 {offsets = [0, 0], sizes = [10, 168], strides = [1, 1]} : vector<14x168xf32> to vector<10x168xf32>
    %70 = vector.extract_strided_slice %68 {offsets = [1, 0], sizes = [10, 168], strides = [1, 1]} : vector<14x168xf32> to vector<10x168xf32>
    %71 = vector.extract_strided_slice %68 {offsets = [2, 0], sizes = [10, 168], strides = [1, 1]} : vector<14x168xf32> to vector<10x168xf32>
    %72 = vector.extract_strided_slice %68 {offsets = [3, 0], sizes = [10, 168], strides = [1, 1]} : vector<14x168xf32> to vector<10x168xf32>
    %73 = vector.extract_strided_slice %68 {offsets = [4, 0], sizes = [10, 168], strides = [1, 1]} : vector<14x168xf32> to vector<10x168xf32>
    %74 = tpu.concatenate %69, %70, %71, %72, %73 in 1 : vector<10x168xf32>, vector<10x168xf32>, vector<10x168xf32>, vector<10x168xf32>, vector<10x168xf32> -> vector<10x840xf32>
    %75 = arith.truncf %74 : vector<10x840xf32> to vector<10x840xbf16>
    %c0_37 = arith.constant 0 : index
    %c0_38 = arith.constant 0 : index
    %76 = vector.load %arg4[%c0_37, %c0_38] : memref<840x160xbf16, #tpu.memory_space<vmem>>, vector<840x160xbf16>
    %cst_39 = arith.constant dense<0.000000e+00> : vector<10x160xf32>
    %77 = tpu.matmul %75, %76, %cst_39 {dimension_numbers = #tpu.dot_dimension_numbers<[1], [0], [0], [1], [0, 0, 1, 1], [], []>} : vector<10x840xbf16>, vector<840x160xbf16>, vector<10x160xf32> -> vector<10x160xf32>
    %78 = vector.extract_strided_slice %77 {offsets = [0, 0], sizes = [1, 160], strides = [1, 1]} : vector<10x160xf32> to vector<1x160xf32>
    %79 = vector.extract_strided_slice %77 {offsets = [1, 0], sizes = [1, 160], strides = [1, 1]} : vector<10x160xf32> to vector<1x160xf32>
    %80 = arith.maximumf %78, %79 : vector<1x160xf32>
    %81 = vector.extract_strided_slice %77 {offsets = [2, 0], sizes = [1, 160], strides = [1, 1]} : vector<10x160xf32> to vector<1x160xf32>
    %82 = vector.extract_strided_slice %77 {offsets = [3, 0], sizes = [1, 160], strides = [1, 1]} : vector<10x160xf32> to vector<1x160xf32>
    %83 = arith.maximumf %81, %82 : vector<1x160xf32>
    %84 = vector.extract_strided_slice %77 {offsets = [4, 0], sizes = [1, 160], strides = [1, 1]} : vector<10x160xf32> to vector<1x160xf32>
    %85 = vector.extract_strided_slice %77 {offsets = [5, 0], sizes = [1, 160], strides = [1, 1]} : vector<10x160xf32> to vector<1x160xf32>
    %86 = arith.maximumf %84, %85 : vector<1x160xf32>
    %87 = vector.extract_strided_slice %77 {offsets = [6, 0], sizes = [1, 160], strides = [1, 1]} : vector<10x160xf32> to vector<1x160xf32>
    %88 = vector.extract_strided_slice %77 {offsets = [7, 0], sizes = [1, 160], strides = [1, 1]} : vector<10x160xf32> to vector<1x160xf32>
    %89 = arith.maximumf %87, %88 : vector<1x160xf32>
    %90 = vector.extract_strided_slice %77 {offsets = [8, 0], sizes = [1, 160], strides = [1, 1]} : vector<10x160xf32> to vector<1x160xf32>
    %91 = vector.extract_strided_slice %77 {offsets = [9, 0], sizes = [1, 160], strides = [1, 1]} : vector<10x160xf32> to vector<1x160xf32>
    %92 = arith.maximumf %90, %91 : vector<1x160xf32>
    %93 = tpu.concatenate %80, %83, %86, %89, %92 in 1 : vector<1x160xf32>, vector<1x160xf32>, vector<1x160xf32>, vector<1x160xf32>, vector<1x160xf32> -> vector<1x800xf32>
    %94 = vector.extract_strided_slice %93 {offsets = [0, 16], sizes = [1, 784], strides = [1, 1]} : vector<1x800xf32> to vector<1x784xf32>
    %95 = vector.extract_strided_slice %93 {offsets = [0, 0], sizes = [1, 16], strides = [1, 1]} : vector<1x800xf32> to vector<1x16xf32>
    %96 = tpu.concatenate %94, %95 in 1 : vector<1x784xf32>, vector<1x16xf32> -> vector<1x800xf32>
    %97 = arith.maximumf %93, %96 : vector<1x800xf32>
    %98 = arith.addf %97, %3 : vector<1x800xf32>
    %cst_40 = arith.constant 0.000000e+00 : f32
    %99 = vector.broadcast %cst_40 : f32 to vector<1x800xf32>
    %100 = arith.maximumf %98, %99 : vector<1x800xf32>
    %c1_41 = arith.constant 1 : index
    %c0_42 = arith.constant 0 : index
    %101 = vector.load %arg13[%c1_41, %c0_42] : memref<2x800xf32, #tpu.memory_space<vmem>>, vector<1x800xf32>
    tpu.vector_store %arg13[%c1_41, %c0_42], %100 {strides = array<i32>} : memref<2x800xf32, #tpu.memory_space<vmem>>, vector<1x800xf32>,
    %c0_43 = arith.constant 0 : index
    %c0_44 = arith.constant 0 : index
    %102 = vector.load %arg13[%c0_43, %c0_44] : memref<2x800xf32, #tpu.memory_space<vmem>>, vector<2x800xf32>
    %103 = arith.truncf %102 : vector<2x800xf32> to vector<2x800xbf16>
    %c0_45 = arith.constant 0 : index
    %c0_46 = arith.constant 0 : index
    %104 = vector.load %arg6[%c0_45, %c0_46] : memref<800x120xbf16, #tpu.memory_space<vmem>>, vector<800x120xbf16>
    %cst_47 = arith.constant dense<0.000000e+00> : vector<2x120xf32>
    %105 = tpu.matmul %103, %104, %cst_47 {dimension_numbers = #tpu.dot_dimension_numbers<[1], [0], [0], [1], [0, 0, 1, 1], [], []>} : vector<2x800xbf16>, vector<800x120xbf16>, vector<2x120xf32> -> vector<2x120xf32>
    %c0_48 = arith.constant 0 : index
    %c0_49 = arith.constant 0 : index
    %106 = vector.load %arg7[%c0_48, %c0_49] : memref<1x120xf32, #tpu.memory_space<vmem>>, vector<1x120xf32>
    %107 = vector.broadcast %106 : vector<1x120xf32> to vector<2x120xf32>
    %108 = arith.addf %105, %107 : vector<2x120xf32>
    %cst_50 = arith.constant 0.000000e+00 : f32
    %109 = vector.broadcast %cst_50 : f32 to vector<2x120xf32>
    %110 = arith.maximumf %108, %109 : vector<2x120xf32>
    %111 = arith.truncf %110 : vector<2x120xf32> to vector<2x120xbf16>
    %c0_51 = arith.constant 0 : index
    %c0_52 = arith.constant 0 : index
    %112 = vector.load %arg8[%c0_51, %c0_52] : memref<120x84xbf16, #tpu.memory_space<vmem>>, vector<120x84xbf16>
    %cst_53 = arith.constant dense<0.000000e+00> : vector<2x84xf32>
    %113 = tpu.matmul %111, %112, %cst_53 {dimension_numbers = #tpu.dot_dimension_numbers<[1], [0], [0], [1], [0, 0, 1, 1], [], []>} : vector<2x120xbf16>, vector<120x84xbf16>, vector<2x84xf32> -> vector<2x84xf32>
    %c0_54 = arith.constant 0 : index
    %c0_55 = arith.constant 0 : index
    %114 = vector.load %arg9[%c0_54, %c0_55] : memref<1x84xf32, #tpu.memory_space<vmem>>, vector<1x84xf32>
    %115 = vector.broadcast %114 : vector<1x84xf32> to vector<2x84xf32>
    %116 = arith.addf %113, %115 : vector<2x84xf32>
    %cst_56 = arith.constant 0.000000e+00 : f32
    %117 = vector.broadcast %cst_56 : f32 to vector<2x84xf32>
    %118 = arith.maximumf %116, %117 : vector<2x84xf32>
    %119 = arith.truncf %118 : vector<2x84xf32> to vector<2x84xbf16>
    %c0_57 = arith.constant 0 : index
    %c0_58 = arith.constant 0 : index
    %120 = vector.load %arg10[%c0_57, %c0_58] : memref<84x128xbf16, #tpu.memory_space<vmem>>, vector<84x128xbf16>
    %cst_59 = arith.constant dense<0.000000e+00> : vector<2x128xf32>
    %121 = tpu.matmul %119, %120, %cst_59 {dimension_numbers = #tpu.dot_dimension_numbers<[1], [0], [0], [1], [0, 0, 1, 1], [], []>} : vector<2x84xbf16>, vector<84x128xbf16>, vector<2x128xf32> -> vector<2x128xf32>
    %c0_60 = arith.constant 0 : index
    %c0_61 = arith.constant 0 : index
    %122 = vector.load %arg11[%c0_60, %c0_61] : memref<1x128xf32, #tpu.memory_space<vmem>>, vector<1x128xf32>
    %123 = vector.broadcast %122 : vector<1x128xf32> to vector<2x128xf32>
    %124 = arith.addf %121, %123 : vector<2x128xf32>
    %c0_62 = arith.constant 0 : index
    %c0_63 = arith.constant 0 : index
    %125 = vector.load %arg12[%c0_62, %c0_63] : memref<2x128xf32, #tpu.memory_space<vmem>>, vector<2x128xf32>
    tpu.vector_store %arg12[%c0_62, %c0_63], %124 {strides = array<i32>} : memref<2x128xf32, #tpu.memory_space<vmem>>, vector<2x128xf32>,
    return
  }
  func.func @transform_0(%arg0: i32) -> (i32, i32, i32, i32) {
    %c0_i32 = arith.constant 0 : i32
    %c0_i32_0 = arith.constant 0 : i32
    %c0_i32_1 = arith.constant 0 : i32
    %c0_i32_2 = arith.constant 0 : i32
    return %arg0, %c0_i32, %c0_i32_0, %c0_i32_1 : i32, i32, i32, i32
  }
  func.func @transform_1(%arg0: i32) -> (i32, i32) {
    %c0_i32 = arith.constant 0 : i32
    %c0_i32_0 = arith.constant 0 : i32
    %c0_i32_1 = arith.constant 0 : i32
    return %c0_i32, %c0_i32_0 : i32, i32
  }
  func.func @transform_2(%arg0: i32) -> (i32, i32) {
    %c0_i32 = arith.constant 0 : i32
    %c0_i32_0 = arith.constant 0 : i32
    %c0_i32_1 = arith.constant 0 : i32
    return %c0_i32, %c0_i32_0 : i32, i32
  }
  func.func @transform_3(%arg0: i32) -> (i32, i32) {
    %c0_i32 = arith.constant 0 : i32
    %c0_i32_0 = arith.constant 0 : i32
    %c0_i32_1 = arith.constant 0 : i32
    return %c0_i32, %c0_i32_0 : i32, i32
  }
  func.func @transform_4(%arg0: i32) -> (i32, i32) {
    %c0_i32 = arith.constant 0 : i32
    %c0_i32_0 = arith.constant 0 : i32
    %c0_i32_1 = arith.constant 0 : i32
    return %c0_i32, %c0_i32_0 : i32, i32
  }
  func.func @transform_5(%arg0: i32) -> (i32, i32) {
    %c0_i32 = arith.constant 0 : i32
    %c0_i32_0 = arith.constant 0 : i32
    %c0_i32_1 = arith.constant 0 : i32
    return %c0_i32, %c0_i32_0 : i32, i32
  }
  func.func @transform_6(%arg0: i32) -> (i32, i32) {
    %c0_i32 = arith.constant 0 : i32
    %c0_i32_0 = arith.constant 0 : i32
    %c0_i32_1 = arith.constant 0 : i32
    return %c0_i32, %c0_i32_0 : i32, i32
  }
  func.func @transform_7(%arg0: i32) -> (i32, i32) {
    %c0_i32 = arith.constant 0 : i32
    %c0_i32_0 = arith.constant 0 : i32
    %c0_i32_1 = arith.constant 0 : i32
    return %c0_i32, %c0_i32_0 : i32, i32
  }
  func.func @transform_8(%arg0: i32) -> (i32, i32) {
    %c0_i32 = arith.constant 0 : i32
    %c0_i32_0 = arith.constant 0 : i32
    %c0_i32_1 = arith.constant 0 : i32
    return %c0_i32, %c0_i32_0 : i32, i32
  }
  func.func @transform_9(%arg0: i32) -> (i32, i32) {
    %c0_i32 = arith.constant 0 : i32
    %c0_i32_0 = arith.constant 0 : i32
    %c0_i32_1 = arith.constant 0 : i32
    return %c0_i32, %c0_i32_0 : i32, i32
  }
  func.func @transform_10(%arg0: i32) -> (i32, i32) {
    %c0_i32 = arith.constant 0 : i32
    %c0_i32_0 = arith.constant 0 : i32
    %c0_i32_1 = arith.constant 0 : i32
    return %c0_i32, %c0_i32_0 : i32, i32
  }
  func.func @transform_11(%arg0: i32) -> (i32, i32) {
    %c0_i32 = arith.constant 0 : i32
    %c0_i32_0 = arith.constant 0 : i32
    return %arg0, %c0_i32 : i32, i32
  }
}

</mosaic_0001>

<llo_original>
// kernel: tile.18
$region0: #{tile.18}
  #allocation0 [shape = 's32[1]{0}', space=sflag, size = 0x4, scoped, tag = 'scoped memory for tile.18']
  %s0 = inlined_call_operand.vmem [shape: f32[16], index: 0, kind: input, shape index: {}]
  %s1 = inlined_call_operand.vmem [shape: f32[50,16], index: 1, kind: output, shape index: {}]
  // Predicated region
  $region2: #{tile.18} parent=0 // pred_check
    _
  $region3: #{tile.18} parent=0 // pred_check_branch
    %3 = sbr.rel (0) target = $region5
  $region4: #{tile.18} parent=0 // pred_region
    _
  $region5: #{tile.18} parent=0 // pred_fallthru
    _
  %v4 = vld [vmem:[%s0] ss:$0 sm:$0xff]
  %5 = vst [vmem:[%s1] sm:$0xff] %v4
  %s6 = scalar_lea.vmem %s1, 8
  %7 = vst [vmem:[%s6] sm:$0xff] %v4
  %s8 = scalar_lea.vmem %s1, 16
  %9 = vst [vmem:[%s8] sm:$0xff] %v4
  %s10 = scalar_lea.vmem %s1, 24
  %11 = vst [vmem:[%s10] sm:$0xff] %v4
  %s12 = scalar_lea.vmem %s1, 32
  %13 = vst [vmem:[%s12] sm:$0xff] %v4
  %s14 = scalar_lea.vmem %s1, 40
  %15 = vst [vmem:[%s14] sm:$0xff] %v4
  %s16 = scalar_lea.vmem %s1, 48
  %17 = vst [vmem:[%s16] sm:$0xff] %v4

// kernel: tile.19
$region0: #{tile.19}
  %s0 = inlined_call_operand.vmem [shape: f32[50,16], index: 0, kind: input, shape index: {}]
  %s1 = inlined_call_operand.vmem [shape: f32[1,800], index: 1, kind: output, shape index: {}]
  $region1: #{tile.19} parent=0
    #allocation0 [shape = 'u8[28672]{0}', space=vmem, size = 0x7000, scoped, tag = 'scoped mem for output reshape']
    %v2 = vld [vmem:[%s0] ss:$8 sm:$0xf]
    %v3 = vld [vmem:[%s0] ss:$8 sm:$0x70]
    %vm4 = vcmask 1046532
    %v5 = vsel %vm4, %v3, %v2
    %vm6 = vcmask 130048
    %7 = vst.msk [vmem:[#allocation0] ss:$8 sm:$0xf] %vm6, %v5
    %8 = vst.msk [vmem:[#allocation0] ss:$8 sm:$0x70] %vm6, %v5
    %s9 = scalar_lea.vmem %s0, 7
    %v10 = vld [vmem:[%s9] ss:$8 sm:$0xf]
    %s11 = scalar_lea.vmem %s0, 7
    %s12 = smov 48
    %v13 = vld [vmem:[%s11] ss:$8 sm:%s12]
    %vm14 = vcmask 1045508
    %v15 = vsel %vm14, %v13, %v10
    %16 = vrot.lane.b32.xlu0 %v15, 112
    %v17 = vpop.permute.xlu0 %16
    %vm18 = vcmask 1048448
    %19 = vst.msk [vmem:[#allocation0] ss:$8 sm:$0xf] %vm18, %v17
    %20 = vst.msk [vmem:[#allocation0] ss:$8 sm:$0x30] %vm18, %v17
    %s21 = scalar_lea.vmem %s0, 6
    %v22 = vld [vmem:[%s21] ss:$8 sm:$0xf]
    %s23 = scalar_lea.vmem %s0, 6
    %s24 = smov 48
    %v25 = vld [vmem:[%s23] ss:$8 sm:%s24]
    %vm26 = vcmask 1045508
    %v27 = vsel %vm26, %v25, %v22
    %28 = vrot.lane.b32.xlu0 %v27, 96
    %v29 = vpop.permute.xlu0 %28
    %vm30 = vcmask 917248
    %31 = vst.msk [vmem:[#allocation0] ss:$8 sm:$0xf] %vm30, %v29
    %32 = vst.msk [vmem:[#allocation0] ss:$8 sm:$0x30] %vm30, %v29
    %s33 = scalar_lea.vmem %s0, 5
    %v34 = vld [vmem:[%s33] ss:$8 sm:$0xf]
    %s35 = scalar_lea.vmem %s0, 5
    %s36 = smov 48
    %v37 = vld [vmem:[%s35] ss:$8 sm:%s36]
    %vm38 = vcmask 1045508
    %v39 = vsel %vm38, %v37, %v34
    %40 = vrot.lane.b32.xlu0 %v39, 80
    %v41 = vpop.permute.xlu0 %40
    %vm42 = vcmask 786048
    %43 = vst.msk [vmem:[#allocation0] ss:$8 sm:$0xf] %vm42, %v41
    %44 = vst.msk [vmem:[#allocation0] ss:$8 sm:$0x30] %vm42, %v41
    %s45 = scalar_lea.vmem %s0, 4
    %v46 = vld [vmem:[%s45] ss:$8 sm:$0xf]
    %s47 = scalar_lea.vmem %s0, 4
    %s48 = smov 48
    %v49 = vld [vmem:[%s47] ss:$8 sm:%s48]
    %vm50 = vcmask 1045508
    %v51 = vsel %vm50, %v49, %v46
    %52 = vrot.lane.b32.xlu0 %v51, 64
    %v53 = vpop.permute.xlu0 %52
    %vm54 = vcmask 654848
    %55 = vst.msk [vmem:[#allocation0] ss:$8 sm:$0xf] %vm54, %v53
    %56 = vst.msk [vmem:[#allocation0] ss:$8 sm:$0x30] %vm54, %v53
    %s57 = scalar_lea.vmem %s0, 3
    %v58 = vld [vmem:[%s57] ss:$8 sm:$0xf]
    %s59 = scalar_lea.vmem %s0, 3
    %s60 = smov 48
    %v61 = vld [vmem:[%s59] ss:$8 sm:%s60]
    %vm62 = vcmask 1045508
    %v63 = vsel %vm62, %v61, %v58
    %64 = vrot.lane.b32.xlu0 %v63, 48
    %v65 = vpop.permute.xlu0 %64
    %vm66 = vcmask 523648
    %67 = vst.msk [vmem:[#allocation0] ss:$8 sm:$0xf] %vm66, %v65
    %68 = vst.msk [vmem:[#allocation0] ss:$8 sm:$0x30] %vm66, %v65
    %s69 = scalar_lea.vmem %s0, 2
    %v70 = vld [vmem:[%s69] ss:$8 sm:$0xf]
    %s71 = scalar_lea.vmem %s0, 2
    %s72 = smov 48
    %v73 = vld [vmem:[%s71] ss:$8 sm:%s72]
    %vm74 = vcmask 1045508
    %v75 = vsel %vm74, %v73, %v70
    %76 = vrot.lane.b32.xlu0 %v75, 32
    %v77 = vpop.permute.xlu0 %76
    %vm78 = vcmask 392448
    %79 = vst.msk [vmem:[#allocation0] ss:$8 sm:$0xf] %vm78, %v77
    %80 = vst.msk [vmem:[#allocation0] ss:$8 sm:$0x30] %vm78, %v77
    %s81 = scalar_lea.vmem %s0, 1
    %v82 = vld [vmem:[%s81] ss:$8 sm:$0xf]
    %s83 = scalar_lea.vmem %s0, 1
    %v84 = vld [vmem:[%s83] ss:$8 sm:$0x70]
    %vm85 = vcmask 1046532
    %v86 = vsel %vm85, %v84, %v82
    %87 = vrot.lane.b32.xlu0 %v86, 16
    %v88 = vpop.permute.xlu0 %87
    %vm89 = vcmask 261248
    %90 = vst.msk [vmem:[#allocation0] ss:$8 sm:$0xf] %vm89, %v88
    %91 = vst.msk [vmem:[#allocation0] ss:$8 sm:$0x70] %vm89, %v88
    %s93 = sshllo.u32 0, 1
    %v95 = vld [vmem:[#allocation0] sm:%s93]
    %s96 = sshllo.u32 0, 1
    %97 = vst [vmem:[%s1] sm:%s96] %v95
    %s98 = scalar_lea.vmem [#allocation0], 8
    %v99 = vld [vmem:[%s98] sm:%s93]
    %s100 = sshllo.u32 0, 1
    %s101 = scalar_lea.vmem %s1, 1
    %102 = vst [vmem:[%s101] sm:%s100] %v99
    %s103 = scalar_lea.vmem [#allocation0], 16
    %v104 = vld [vmem:[%s103] sm:%s93]
    %s105 = sshllo.u32 0, 1
    %s106 = smul.addr 1, 2
    %s107 = scalar_lea.vmem %s1, %s106
    %108 = vst [vmem:[%s107] sm:%s105] %v104
    %s109 = scalar_lea.vmem [#allocation0], 24
    %v110 = vld [vmem:[%s109] sm:%s93]
    %s111 = sshllo.u32 0, 1
    %s112 = smul.addr 1, 3
    %s113 = scalar_lea.vmem %s1, %s112
    %114 = vst [vmem:[%s113] sm:%s111] %v110
    %s115 = scalar_lea.vmem [#allocation0], 32
    %v116 = vld [vmem:[%s115] sm:%s93]
    %s117 = sshllo.u32 0, 1
    %s118 = smul.addr 1, 4
    %s119 = scalar_lea.vmem %s1, %s118
    %120 = vst [vmem:[%s119] sm:%s117] %v116
    %s121 = scalar_lea.vmem [#allocation0], 40
    %v122 = vld [vmem:[%s121] sm:%s93]
    %s123 = sshllo.u32 0, 1
    %s124 = smul.addr 1, 5
    %s125 = scalar_lea.vmem %s1, %s124
    %126 = vst [vmem:[%s125] sm:%s123] %v122
    %s127 = scalar_lea.vmem [#allocation0], 48
    %v128 = vld [vmem:[%s127] sm:%s93]
    %s129 = sshllo.u32 0, 1
    %s130 = smul.addr 1, 6
    %s131 = scalar_lea.vmem %s1, %s130
    %132 = vst [vmem:[%s131] sm:%s129] %v128

// kernel: tile.13
$region0: #{tile.13}
  #allocation0 [shape = 's32[1]{0}', space=sflag, size = 0x4, scoped, tag = 'scoped memory for tile.13']
  %s0 = inlined_call_operand.vmem [shape: f32[6], index: 0, kind: input, shape index: {}]
  %s1 = inlined_call_operand.vmem [shape: f32[28,6], index: 1, kind: output, shape index: {}]
  // Predicated region
  $region2: #{tile.13} parent=0 // pred_check
    _
  $region3: #{tile.13} parent=0 // pred_check_branch
    %3 = sbr.rel (0) target = $region5
  $region4: #{tile.13} parent=0 // pred_region
    _
  $region5: #{tile.13} parent=0 // pred_fallthru
    _
  %v4 = vld [vmem:[%s0] ss:$0 sm:$0xff]
  %5 = vst [vmem:[%s1] sm:$0xff] %v4
  %s6 = scalar_lea.vmem %s1, 8
  %7 = vst [vmem:[%s6] sm:$0xff] %v4
  %s8 = scalar_lea.vmem %s1, 16
  %9 = vst [vmem:[%s8] sm:$0xff] %v4
  %s10 = scalar_lea.vmem %s1, 24
  %11 = vst [vmem:[%s10] sm:$0xff] %v4

// kernel: tile.14
$region0: #{tile.14}
  %s0 = inlined_call_operand.vmem [shape: f32[28,6], index: 0, kind: input, shape index: {}]
  %s1 = inlined_call_operand.vmem [shape: f32[1,168], index: 1, kind: output, shape index: {}]
  $region1: #{tile.14} parent=0
    #allocation0 [shape = 'u8[8192]{0}', space=vmem, size = 0x2000, scoped, tag = 'scoped mem for output reshape']
    %v2 = vld [vmem:[%s0] sm:$0x1]
    %vm3 = vcmask 48128
    %4 = vst.msk [vmem:[#allocation0] sm:$0x1] %vm3, %v2
    %s5 = scalar_lea.vmem %s0, 21
    %v6 = vld [vmem:[%s5] sm:$0x1]
    %s7 = scalar_lea.vmem %s0, 21
    %v8 = vld [vmem:[%s7] sm:$0x1]
    %vm9 = vcmask 15360
    %v10 = vsel %vm9, %v8, %v6
    %11 = vrot.lane.b32.xlu0 %v10, 126
    %v12 = vpop.permute.xlu0 %11
    %vm13 = vcmask 31744
    %s14 = scalar_lea.vmem [#allocation0], 8
    %15 = vst.msk [vmem:[%s14] sm:$0x1] %vm13, %v12
    %vm16 = vcmask 1048560
    %17 = vst.msk [vmem:[#allocation0] sm:$0x1] %vm16, %v12
    %s18 = scalar_lea.vmem %s0, 20
    %v19 = vld [vmem:[%s18] sm:$0x1]
    %20 = vrot.lane.b32.xlu0 %v19, 120
    %v21 = vpop.permute.xlu0 %20
    %vm22 = vcmask 1032128
    %23 = vst.msk [vmem:[#allocation0] sm:$0x1] %vm22, %v21
    %s24 = scalar_lea.vmem %s0, 19
    %v25 = vld [vmem:[%s24] sm:$0x1]
    %26 = vrot.lane.b32.xlu0 %v25, 114
    %v27 = vpop.permute.xlu0 %26
    %vm28 = vcmask 982928
    %29 = vst.msk [vmem:[#allocation0] sm:$0x1] %vm28, %v27
    %s30 = scalar_lea.vmem %s0, 18
    %v31 = vld [vmem:[%s30] sm:$0x1]
    %32 = vrot.lane.b32.xlu0 %v31, 108
    %v33 = vpop.permute.xlu0 %32
    %vm34 = vcmask 933728
    %35 = vst.msk [vmem:[#allocation0] sm:$0x1] %vm34, %v33
    %s36 = scalar_lea.vmem %s0, 17
    %v37 = vld [vmem:[%s36] sm:$0x1]
    %38 = vrot.lane.b32.xlu0 %v37, 102
    %v39 = vpop.permute.xlu0 %38
    %vm40 = vcmask 884528
    %41 = vst.msk [vmem:[#allocation0] sm:$0x1] %vm40, %v39
    %s42 = scalar_lea.vmem %s0, 16
    %v43 = vld [vmem:[%s42] sm:$0x1]
    %44 = vrot.lane.b32.xlu0 %v43, 96
    %v45 = vpop.permute.xlu0 %44
    %vm46 = vcmask 835328
    %47 = vst.msk [vmem:[#allocation0] sm:$0x1] %vm46, %v45
    %s48 = scalar_lea.vmem %s0, 15
    %v49 = vld [vmem:[%s48] sm:$0x1]
    %50 = vrot.lane.b32.xlu0 %v49, 90
    %v51 = vpop.permute.xlu0 %50
    %vm52 = vcmask 786128
    %53 = vst.msk [vmem:[#allocation0] sm:$0x1] %vm52, %v51
    %s54 = scalar_lea.vmem %s0, 14
    %v55 = vld [vmem:[%s54] sm:$0x1]
    %56 = vrot.lane.b32.xlu0 %v55, 84
    %v57 = vpop.permute.xlu0 %56
    %vm58 = vcmask 736928
    %59 = vst.msk [vmem:[#allocation0] sm:$0x1] %vm58, %v57
    %s60 = scalar_lea.vmem %s0, 13
    %v61 = vld [vmem:[%s60] sm:$0x1]
    %62 = vrot.lane.b32.xlu0 %v61, 78
    %v63 = vpop.permute.xlu0 %62
    %vm64 = vcmask 687728
    %65 = vst.msk [vmem:[#allocation0] sm:$0x1] %vm64, %v63
    %s66 = scalar_lea.vmem %s0, 12
    %v67 = vld [vmem:[%s66] sm:$0x1]
    %68 = vrot.lane.b32.xlu0 %v67, 72
    %v69 = vpop.permute.xlu0 %68
    %vm70 = vcmask 638528
    %71 = vst.msk [vmem:[#allocation0] sm:$0x1] %vm70, %v69
    %s72 = scalar_lea.vmem %s0, 11
    %v73 = vld [vmem:[%s72] sm:$0x1]
    %74 = vrot.lane.b32.xlu0 %v73, 66
    %v75 = vpop.permute.xlu0 %74
    %vm76 = vcmask 589328
    %77 = vst.msk [vmem:[#allocation0] sm:$0x1] %vm76, %v75
    %s78 = scalar_lea.vmem %s0, 10
    %v79 = vld [vmem:[%s78] sm:$0x1]
    %80 = vrot.lane.b32.xlu0 %v79, 60
    %v81 = vpop.permute.xlu0 %80
    %vm82 = vcmask 540128
    %83 = vst.msk [vmem:[#allocation0] sm:$0x1] %vm82, %v81
    %s84 = scalar_lea.vmem %s0, 9
    %v85 = vld [vmem:[%s84] sm:$0x1]
    %86 = vrot.lane.b32.xlu0 %v85, 54
    %v87 = vpop.permute.xlu0 %86
    %vm88 = vcmask 490928
    %89 = vst.msk [vmem:[#allocation0] sm:$0x1] %vm88, %v87
    %s90 = scalar_lea.vmem %s0, 8
    %v91 = vld [vmem:[%s90] sm:$0x1]
    %92 = vrot.lane.b32.xlu0 %v91, 48
    %v93 = vpop.permute.xlu0 %92
    %vm94 = vcmask 441728
    %95 = vst.msk [vmem:[#allocation0] sm:$0x1] %vm94, %v93
    %s96 = scalar_lea.vmem %s0, 7
    %v97 = vld [vmem:[%s96] sm:$0x1]
    %98 = vrot.lane.b32.xlu0 %v97, 42
    %v99 = vpop.permute.xlu0 %98
    %vm100 = vcmask 392528
    %101 = vst.msk [vmem:[#allocation0] sm:$0x1] %vm100, %v99
    %s102 = scalar_lea.vmem %s0, 6
    %v103 = vld [vmem:[%s102] sm:$0x1]
    %104 = vrot.lane.b32.xlu0 %v103, 36
    %v105 = vpop.permute.xlu0 %104
    %vm106 = vcmask 343328
    %107 = vst.msk [vmem:[#allocation0] sm:$0x1] %vm106, %v105
    %s108 = scalar_lea.vmem %s0, 27
    %v109 = vld [vmem:[%s108] sm:$0x1]
    %110 = vrot.lane.b32.xlu0 %v109, 34
    %v111 = vpop.permute.xlu0 %110
    %vm112 = vcmask 326928
    %s113 = scalar_lea.vmem [#allocation0], 8
    %114 = vst.msk [vmem:[%s113] sm:$0x1] %vm112, %v111
    %s115 = scalar_lea.vmem %s0, 5
    %v116 = vld [vmem:[%s115] sm:$0x1]
    %117 = vrot.lane.b32.xlu0 %v116, 30
    %v118 = vpop.permute.xlu0 %117
    %vm119 = vcmask 294128
    %120 = vst.msk [vmem:[#allocation0] sm:$0x1] %vm119, %v118
    %s121 = scalar_lea.vmem %s0, 26
    %v122 = vld [vmem:[%s121] sm:$0x1]
    %123 = vrot.lane.b32.xlu0 %v122, 28
    %v124 = vpop.permute.xlu0 %123
    %vm125 = vcmask 277728
    %s126 = scalar_lea.vmem [#allocation0], 8
    %127 = vst.msk [vmem:[%s126] sm:$0x1] %vm125, %v124
    %s128 = scalar_lea.vmem %s0, 4
    %v129 = vld [vmem:[%s128] sm:$0x1]
    %130 = vrot.lane.b32.xlu0 %v129, 24
    %v131 = vpop.permute.xlu0 %130
    %vm132 = vcmask 244928
    %133 = vst.msk [vmem:[#allocation0] sm:$0x1] %vm132, %v131
    %s134 = scalar_lea.vmem %s0, 25
    %v135 = vld [vmem:[%s134] sm:$0x1]
    %136 = vrot.lane.b32.xlu0 %v135, 22
    %v137 = vpop.permute.xlu0 %136
    %vm138 = vcmask 228528
    %s139 = scalar_lea.vmem [#allocation0], 8
    %140 = vst.msk [vmem:[%s139] sm:$0x1] %vm138, %v137
    %s141 = scalar_lea.vmem %s0, 3
    %v142 = vld [vmem:[%s141] sm:$0x1]
    %143 = vrot.lane.b32.xlu0 %v142, 18
    %v144 = vpop.permute.xlu0 %143
    %vm145 = vcmask 195728
    %146 = vst.msk [vmem:[#allocation0] sm:$0x1] %vm145, %v144
    %s147 = scalar_lea.vmem %s0, 24
    %v148 = vld [vmem:[%s147] sm:$0x1]
    %149 = vrot.lane.b32.xlu0 %v148, 16
    %v150 = vpop.permute.xlu0 %149
    %vm151 = vcmask 179328
    %s152 = scalar_lea.vmem [#allocation0], 8
    %153 = vst.msk [vmem:[%s152] sm:$0x1] %vm151, %v150
    %s154 = scalar_lea.vmem %s0, 2
    %v155 = vld [vmem:[%s154] sm:$0x1]
    %156 = vrot.lane.b32.xlu0 %v155, 12
    %v157 = vpop.permute.xlu0 %156
    %vm158 = vcmask 146528
    %159 = vst.msk [vmem:[#allocation0] sm:$0x1] %vm158, %v157
    %s160 = scalar_lea.vmem %s0, 23
    %v161 = vld [vmem:[%s160] sm:$0x1]
    %162 = vrot.lane.b32.xlu0 %v161, 10
    %v163 = vpop.permute.xlu0 %162
    %vm164 = vcmask 130128
    %s165 = scalar_lea.vmem [#allocation0], 8
    %166 = vst.msk [vmem:[%s165] sm:$0x1] %vm164, %v163
    %s167 = scalar_lea.vmem %s0, 1
    %v168 = vld [vmem:[%s167] sm:$0x1]
    %169 = vrot.lane.b32.xlu0 %v168, 6
    %v170 = vpop.permute.xlu0 %169
    %vm171 = vcmask 97328
    %172 = vst.msk [vmem:[#allocation0] sm:$0x1] %vm171, %v170
    %s173 = scalar_lea.vmem %s0, 22
    %v174 = vld [vmem:[%s173] sm:$0x1]
    %175 = vrot.lane.b32.xlu0 %v174, 4
    %v176 = vpop.permute.xlu0 %175
    %vm177 = vcmask 80928
    %s178 = scalar_lea.vmem [#allocation0], 8
    %179 = vst.msk [vmem:[%s178] sm:$0x1] %vm177, %v176
    %s181 = sshllo.u32 0, 1
    %v183 = vld [vmem:[#allocation0] sm:%s181]
    %s184 = sshllo.u32 0, 1
    %185 = vst [vmem:[%s1] sm:%s184] %v183
    %s186 = scalar_lea.vmem [#allocation0], 8
    %v187 = vld [vmem:[%s186] sm:%s181]
    %s188 = sshllo.u32 0, 1
    %s189 = scalar_lea.vmem %s1, 1
    %190 = vst [vmem:[%s189] sm:%s188] %v187

// kernel: coolnet_forward.1
$region0: #{coolnet_forward.1}
  #allocation0 [shape = 'u32[]', space=smem, size = 0x4, offset = 0x4, fixed_abs, tag = 'smem constant byte address 0x4 - core index']
  #allocation1 [shape = 'u32[144,128]{1,0:T(1,128)}', space=vmem, size = 0x12000, scoped, tag = 'internal scratch']
  #allocation2 [shape = 'f32[2,800]{1,0:T(2,128)}', space=vmem, size = 0x1c00, scoped, tag = 'scratch operand']
  %s0 = inlined_call_operand.vmem [shape: bf16[2,2,14,480], index: 0, kind: input, shape index: {}]
  %s1 = inlined_call_operand.vmem [shape: bf16[480,168], index: 1, kind: input, shape index: {}]
  %s2 = inlined_call_operand.vmem [shape: f32[1,168], index: 2, kind: input, shape index: {}]
  %s3 = inlined_call_operand.vmem [shape: bf16[840,160], index: 3, kind: input, shape index: {}]
  %s4 = inlined_call_operand.vmem [shape: f32[1,800], index: 4, kind: input, shape index: {}]
  %s5 = inlined_call_operand.vmem [shape: bf16[800,120], index: 5, kind: input, shape index: {}]
  %s6 = inlined_call_operand.vmem [shape: f32[1,120], index: 6, kind: input, shape index: {}]
  %s7 = inlined_call_operand.vmem [shape: bf16[120,84], index: 7, kind: input, shape index: {}]
  %s8 = inlined_call_operand.vmem [shape: f32[1,84], index: 8, kind: input, shape index: {}]
  %s9 = inlined_call_operand.vmem [shape: bf16[84,128], index: 9, kind: input, shape index: {}]
  %s10 = inlined_call_operand.vmem [shape: f32[1,128], index: 10, kind: input, shape index: {}]
  %s11 = inlined_call_operand.hbm [shape: f32[2,128], index: 11, kind: output, shape index: {}]
  %s12 = sld [smem:[#allocation0]]
  $region54: #{coolnet_forward.1} parent=0
    _
  %s14 = ssub.s32 1, %s12
  %s15 = scalar_select 0, %s14, %s12
  $region1: #{coolnet_forward.1} parent=0
    #allocation3 [shape = 'u8[1024]{0}', space=vmem, size = 0x400, scoped, tag = 'output window, operand 0, single buffered']
    #allocation4 [shape = 's32[1]{0}', space=sflag, size = 0x4, scoped, tag = 'scoped memory for coolnet_forward.1']
    %16 = vsyncpa [#allocation4], 0
    // Predicated region
    $region2: #{coolnet_forward.1} parent=1 // pred_check
      _
    $region3: #{coolnet_forward.1} parent=1 // pred_check_branch
      %18 = sbr.rel (0) target = $region5
    $region4: #{coolnet_forward.1} parent=1 // pred_region
      _
    $region5: #{coolnet_forward.1} parent=1 // pred_fallthru
      _
    // Predicated region
    $region6: #{coolnet_forward.1} parent=1 // pred_check
      _
    $region7: #{coolnet_forward.1} parent=1 // pred_check_branch
      %20 = sbr.rel (0) target = $region9
    $region8: #{coolnet_forward.1} parent=1 // pred_region
      _
    $region9: #{coolnet_forward.1} parent=1 // pred_fallthru
      _
    // Predicated region
    $region10: #{coolnet_forward.1} parent=1 // pred_check
      _
    $region11: #{coolnet_forward.1} parent=1 // pred_check_branch
      %22 = sbr.rel (0) target = $region13
    $region12: #{coolnet_forward.1} parent=1 // pred_region
      _
    $region13: #{coolnet_forward.1} parent=1 // pred_fallthru
      _
    // Predicated region
    $region14: #{coolnet_forward.1} parent=1 // pred_check
      _
    $region15: #{coolnet_forward.1} parent=1 // pred_check_branch
      %24 = sbr.rel (0) target = $region17
    $region16: #{coolnet_forward.1} parent=1 // pred_region
      _
    $region17: #{coolnet_forward.1} parent=1 // pred_fallthru
      _
    // Predicated region
    $region18: #{coolnet_forward.1} parent=1 // pred_check
      _
    $region19: #{coolnet_forward.1} parent=1 // pred_check_branch
      %26 = sbr.rel (0) target = $region21
    $region20: #{coolnet_forward.1} parent=1 // pred_region
      _
    $region21: #{coolnet_forward.1} parent=1 // pred_fallthru
      _
    // Predicated region
    $region22: #{coolnet_forward.1} parent=1 // pred_check
      _
    $region23: #{coolnet_forward.1} parent=1 // pred_check_branch
      %28 = sbr.rel (0) target = $region25
    $region24: #{coolnet_forward.1} parent=1 // pred_region
      _
    $region25: #{coolnet_forward.1} parent=1 // pred_fallthru
      _
    // Predicated region
    $region26: #{coolnet_forward.1} parent=1 // pred_check
      _
    $region27: #{coolnet_forward.1} parent=1 // pred_check_branch
      %30 = sbr.rel (0) target = $region29
    $region28: #{coolnet_forward.1} parent=1 // pred_region
      _
    $region29: #{coolnet_forward.1} parent=1 // pred_fallthru
      _
    // Predicated region
    $region30: #{coolnet_forward.1} parent=1 // pred_check
      _
    $region31: #{coolnet_forward.1} parent=1 // pred_check_branch
      %32 = sbr.rel (0) target = $region33
    $region32: #{coolnet_forward.1} parent=1 // pred_region
      _
    $region33: #{coolnet_forward.1} parent=1 // pred_fallthru
      _
    // Predicated region
    $region34: #{coolnet_forward.1} parent=1 // pred_check
      _
    $region35: #{coolnet_forward.1} parent=1 // pred_check_branch
      %34 = sbr.rel (0) target = $region37
    $region36: #{coolnet_forward.1} parent=1 // pred_region
      _
    $region37: #{coolnet_forward.1} parent=1 // pred_fallthru
      _
    // Predicated region
    $region38: #{coolnet_forward.1} parent=1 // pred_check
      _
    $region39: #{coolnet_forward.1} parent=1 // pred_check_branch
      %36 = sbr.rel (0) target = $region41
    $region40: #{coolnet_forward.1} parent=1 // pred_region
      _
    $region41: #{coolnet_forward.1} parent=1 // pred_fallthru
      _
    // Predicated region
    $region42: #{coolnet_forward.1} parent=1 // pred_check
      _
    $region43: #{coolnet_forward.1} parent=1 // pred_check_branch
      %38 = sbr.rel (0) target = $region45
    $region44: #{coolnet_forward.1} parent=1 // pred_region
      _
    $region45: #{coolnet_forward.1} parent=1 // pred_fallthru
      _
    %v40 = vld [vmem:[%s2] sm:$0x3]
    %v42 = vlaneseq
    %v43 = vshrl.u32 %v42, 7
    %v44 = vsub.s32 0, %v43
    %v45 = vrot.slane %v40, %v44
    %v46 = vlaneseq
    %v47 = vshrl.u32 %v46, 7
    %v48 = vsub.s32 1, %v47
    %v49 = vrot.slane %v40, %v48
    %v52 = vld [vmem:[%s4] sm:$0x7f]
    %v53 = vld [vmem:[%s0] sm:$0xff]
    %v54 = vld [vmem:[%s0 + $0x8] sm:$0xff]
    %v55 = vld [vmem:[%s0 + $0x10] sm:$0x77]
    %v56 = vld [vmem:[%s0 + $0x18] sm:$0x77]
    %v57 = vld [vmem:[%s1] sm:$0xff]
    %v58 = vld [vmem:[%s1 + $0x8] sm:$0xff]
    %v59 = vld [vmem:[%s1 + $0x10] sm:$0xff]
    %v60 = vld [vmem:[%s1 + $0x18] sm:$0xff]
    %v61 = vld [vmem:[%s1 + $0x20] sm:$0xff]
    %v62 = vld [vmem:[%s1 + $0x28] sm:$0xff]
    %v63 = vld [vmem:[%s1 + $0x30] sm:$0xff]
    %v64 = vld [vmem:[%s1 + $0x38] sm:$0xff]
    %v65 = vld [vmem:[%s1 + $0x40] sm:$0xff]
    %v66 = vld [vmem:[%s1 + $0x48] sm:$0xff]
    %v67 = vld [vmem:[%s1 + $0x50] sm:$0xff]
    %v68 = vld [vmem:[%s1 + $0x58] sm:$0xff]
    %v69 = vld [vmem:[%s1 + $0x60] sm:$0xff]
    %v70 = vld [vmem:[%s1 + $0x68] sm:$0xff]
    %v71 = vld [vmem:[%s1 + $0x70] sm:$0xff]
    %v72 = vld [vmem:[%s1 + $0x78] sm:$0xff]
    %v73 = vld [vmem:[%s1 + $0x80] sm:$0xff]
    %v74 = vld [vmem:[%s1 + $0x88] sm:$0xff]
    %v75 = vld [vmem:[%s1 + $0x90] sm:$0xff]
    %v76 = vld [vmem:[%s1 + $0x98] sm:$0xff]
    %v77 = vld [vmem:[%s1 + $0xa0] sm:$0xff]
    %v78 = vld [vmem:[%s1 + $0xa8] sm:$0xff]
    %v79 = vld [vmem:[%s1 + $0xb0] sm:$0xff]
    %v80 = vld [vmem:[%s1 + $0xb8] sm:$0xff]
    %v81 = vld [vmem:[%s1 + $0xc0] sm:$0xff]
    %v82 = vld [vmem:[%s1 + $0xc8] sm:$0xff]
    %v83 = vld [vmem:[%s1 + $0xd0] sm:$0xff]
    %v84 = vld [vmem:[%s1 + $0xd8] sm:$0xff]
    %v85 = vld [vmem:[%s1 + $0xe0] sm:$0xff]
    %v86 = vld [vmem:[%s1 + $0xe8] sm:$0xff]
    %v87 = vld [vmem:[%s1 + $0xf0] sm:$0xff]
    %v88 = vld [vmem:[%s1 + $0xf8] sm:$0xff]
    %v89 = vld [vmem:[%s1 + $0x100] sm:$0xff]
    %v90 = vld [vmem:[%s1 + $0x108] sm:$0xff]
    %v91 = vld [vmem:[%s1 + $0x110] sm:$0xff]
    %v92 = vld [vmem:[%s1 + $0x118] sm:$0xff]
    %v93 = vld [vmem:[%s1 + $0x120] sm:$0xff]
    %v94 = vld [vmem:[%s1 + $0x128] sm:$0xff]
    %v95 = vld [vmem:[%s1 + $0x130] sm:$0xff]
    %v96 = vld [vmem:[%s1 + $0x138] sm:$0xff]
    %v97 = vld [vmem:[%s1 + $0x140] sm:$0xff]
    %v98 = vld [vmem:[%s1 + $0x148] sm:$0xff]
    %v99 = vld [vmem:[%s1 + $0x150] sm:$0xff]
    %v100 = vld [vmem:[%s1 + $0x158] sm:$0xff]
    %v101 = vld [vmem:[%s1 + $0x160] sm:$0xff]
    %v102 = vld [vmem:[%s1 + $0x168] sm:$0xff]
    %v103 = vld [vmem:[%s1 + $0x170] sm:$0xff]
    %v104 = vld [vmem:[%s1 + $0x178] sm:$0xff]
    %v105 = vld [vmem:[%s1 + $0x180] sm:$0xff]
    %v106 = vld [vmem:[%s1 + $0x188] sm:$0xff]
    %v107 = vld [vmem:[%s1 + $0x190] sm:$0xff]
    %v108 = vld [vmem:[%s1 + $0x198] sm:$0xff]
    %v109 = vld [vmem:[%s1 + $0x1a0] sm:$0xff]
    %v110 = vld [vmem:[%s1 + $0x1a8] sm:$0xff]
    %v111 = vld [vmem:[%s1 + $0x1b0] sm:$0xff]
    %v112 = vld [vmem:[%s1 + $0x1b8] sm:$0xff]
    %v113 = vld [vmem:[%s1 + $0x1c0] sm:$0xff]
    %v114 = vld [vmem:[%s1 + $0x1c8] sm:$0xff]
    %v115 = vld [vmem:[%s1 + $0x1d0] sm:$0xff]
    %v116 = vld [vmem:[%s1 + $0x1d8] sm:$0xff]
    %v121 = vunpack.c.l.b16 %v53
    %v122 = vunpack.c.h.b16 %v53
    %v123 = vunpack.c.l.b16 %v54
    %v124 = vunpack.c.h.b16 %v54
    %v125 = vunpack.c.l.b16 %v55
    %v126 = vunpack.c.h.b16 %v55
    %v127 = vunpack.c.l.b16 %v56
    %v128 = vunpack.c.h.b16 %v56
    %v129 = vpack.c.b16 %v125, %v121
    %v130 = vpack.c.b16 %v126, %v122
    %v131 = vpack.c.b16 %v127, %v123
    %v132 = vpack.c.b16 %v128, %v124
    %v196 = vunpack.c.l.b16 %v57
    %v197 = vunpack.c.h.b16 %v57
    %v198 = vunpack.c.l.b16 %v58
    %v199 = vunpack.c.h.b16 %v58
    %v200 = vunpack.c.l.b16 %v59
    %v201 = vunpack.c.h.b16 %v59
    %v202 = vunpack.c.l.b16 %v60
    %v203 = vunpack.c.h.b16 %v60
    %v204 = vunpack.c.l.b16 %v61
    %v205 = vunpack.c.h.b16 %v61
    %v206 = vunpack.c.l.b16 %v62
    %v207 = vunpack.c.h.b16 %v62
    %v208 = vunpack.c.l.b16 %v63
    %v209 = vunpack.c.h.b16 %v63
    %v210 = vunpack.c.l.b16 %v64
    %v211 = vunpack.c.h.b16 %v64
    %v212 = vunpack.c.l.b16 %v65
    %v213 = vunpack.c.h.b16 %v65
    %v214 = vunpack.c.l.b16 %v66
    %v215 = vunpack.c.h.b16 %v66
    %v216 = vunpack.c.l.b16 %v67
    %v217 = vunpack.c.h.b16 %v67
    %v218 = vunpack.c.l.b16 %v68
    %v219 = vunpack.c.h.b16 %v68
    %v220 = vunpack.c.l.b16 %v69
    %v221 = vunpack.c.h.b16 %v69
    %v222 = vunpack.c.l.b16 %v70
    %v223 = vunpack.c.h.b16 %v70
    %v224 = vunpack.c.l.b16 %v71
    %v225 = vunpack.c.h.b16 %v71
    %v226 = vunpack.c.l.b16 %v72
    %v227 = vunpack.c.h.b16 %v72
    %v228 = vunpack.c.l.b16 %v73
    %v229 = vunpack.c.h.b16 %v73
    %v230 = vunpack.c.l.b16 %v74
    %v231 = vunpack.c.h.b16 %v74
    %v232 = vunpack.c.l.b16 %v75
    %v233 = vunpack.c.h.b16 %v75
    %v234 = vunpack.c.l.b16 %v76
    %v235 = vunpack.c.h.b16 %v76
    %v236 = vunpack.c.l.b16 %v77
    %v237 = vunpack.c.h.b16 %v77
    %v238 = vunpack.c.l.b16 %v78
    %v239 = vunpack.c.h.b16 %v78
    %v240 = vunpack.c.l.b16 %v79
    %v241 = vunpack.c.h.b16 %v79
    %v242 = vunpack.c.l.b16 %v80
    %v243 = vunpack.c.h.b16 %v80
    %v244 = vunpack.c.l.b16 %v81
    %v245 = vunpack.c.h.b16 %v81
    %v246 = vunpack.c.l.b16 %v82
    %v247 = vunpack.c.h.b16 %v82
    %v248 = vunpack.c.l.b16 %v83
    %v249 = vunpack.c.h.b16 %v83
    %v250 = vunpack.c.l.b16 %v84
    %v251 = vunpack.c.h.b16 %v84
    %v252 = vunpack.c.l.b16 %v85
    %v253 = vunpack.c.h.b16 %v85
    %v254 = vunpack.c.l.b16 %v86
    %v255 = vunpack.c.h.b16 %v86
    %v256 = vunpack.c.l.b16 %v87
    %v257 = vunpack.c.h.b16 %v87
    %v258 = vunpack.c.l.b16 %v88
    %v259 = vunpack.c.h.b16 %v88
    %v260 = vunpack.c.l.b16 %v89
    %v261 = vunpack.c.h.b16 %v89
    %v262 = vunpack.c.l.b16 %v90
    %v263 = vunpack.c.h.b16 %v90
    %v264 = vunpack.c.l.b16 %v91
    %v265 = vunpack.c.h.b16 %v91
    %v266 = vunpack.c.l.b16 %v92
    %v267 = vunpack.c.h.b16 %v92
    %v268 = vunpack.c.l.b16 %v93
    %v269 = vunpack.c.h.b16 %v93
    %v270 = vunpack.c.l.b16 %v94
    %v271 = vunpack.c.h.b16 %v94
    %v272 = vunpack.c.l.b16 %v95
    %v273 = vunpack.c.h.b16 %v95
    %v274 = vunpack.c.l.b16 %v96
    %v275 = vunpack.c.h.b16 %v96
    %v276 = vunpack.c.l.b16 %v97
    %v277 = vunpack.c.h.b16 %v97
    %v278 = vunpack.c.l.b16 %v98
    %v279 = vunpack.c.h.b16 %v98
    %v280 = vunpack.c.l.b16 %v99
    %v281 = vunpack.c.h.b16 %v99
    %v282 = vunpack.c.l.b16 %v100
    %v283 = vunpack.c.h.b16 %v100
    %v284 = vunpack.c.l.b16 %v101
    %v285 = vunpack.c.h.b16 %v101
    %v286 = vunpack.c.l.b16 %v102
    %v287 = vunpack.c.h.b16 %v102
    %v288 = vunpack.c.l.b16 %v103
    %v289 = vunpack.c.h.b16 %v103
    %v290 = vunpack.c.l.b16 %v104
    %v291 = vunpack.c.h.b16 %v104
    %v292 = vunpack.c.l.b16 %v105
    %v293 = vunpack.c.h.b16 %v105
    %v294 = vunpack.c.l.b16 %v106
    %v295 = vunpack.c.h.b16 %v106
    %v296 = vunpack.c.l.b16 %v107
    %v297 = vunpack.c.h.b16 %v107
    %v298 = vunpack.c.l.b16 %v108
    %v299 = vunpack.c.h.b16 %v108
    %v300 = vunpack.c.l.b16 %v109
    %v301 = vunpack.c.h.b16 %v109
    %v302 = vunpack.c.l.b16 %v110
    %v303 = vunpack.c.h.b16 %v110
    %v304 = vunpack.c.l.b16 %v111
    %v305 = vunpack.c.h.b16 %v111
    %v306 = vunpack.c.l.b16 %v112
    %v307 = vunpack.c.h.b16 %v112
    %v308 = vunpack.c.l.b16 %v113
    %v309 = vunpack.c.h.b16 %v113
    %v310 = vunpack.c.l.b16 %v114
    %v311 = vunpack.c.h.b16 %v114
    %v312 = vunpack.c.l.b16 %v115
    %v313 = vunpack.c.h.b16 %v115
    %v314 = vunpack.c.l.b16 %v116
    %v315 = vunpack.c.h.b16 %v116
    %v316 = vpack.c.b16 %v198, %v196
    %v317 = vpack.c.b16 %v199, %v197
    %v318 = vpack.c.b16 %v202, %v200
    %v319 = vpack.c.b16 %v203, %v201
    %v320 = vpack.c.b16 %v206, %v204
    %v321 = vpack.c.b16 %v207, %v205
    %v322 = vpack.c.b16 %v210, %v208
    %v323 = vpack.c.b16 %v211, %v209
    %v324 = vpack.c.b16 %v214, %v212
    %v325 = vpack.c.b16 %v215, %v213
    %v326 = vpack.c.b16 %v218, %v216
    %v327 = vpack.c.b16 %v219, %v217
    %v328 = vpack.c.b16 %v222, %v220
    %v329 = vpack.c.b16 %v223, %v221
    %v330 = vpack.c.b16 %v226, %v224
    %v331 = vpack.c.b16 %v227, %v225
    %v332 = vpack.c.b16 %v230, %v228
    %v333 = vpack.c.b16 %v231, %v229
    %v334 = vpack.c.b16 %v234, %v232
    %v335 = vpack.c.b16 %v235, %v233
    %v336 = vpack.c.b16 %v238, %v236
    %v337 = vpack.c.b16 %v239, %v237
    %v338 = vpack.c.b16 %v242, %v240
    %v339 = vpack.c.b16 %v243, %v241
    %v340 = vpack.c.b16 %v246, %v244
    %v341 = vpack.c.b16 %v247, %v245
    %v342 = vpack.c.b16 %v250, %v248
    %v343 = vpack.c.b16 %v251, %v249
    %v344 = vpack.c.b16 %v254, %v252
    %v345 = vpack.c.b16 %v255, %v253
    %v346 = vpack.c.b16 %v258, %v256
    %v347 = vpack.c.b16 %v259, %v257
    %v348 = vpack.c.b16 %v262, %v260
    %v349 = vpack.c.b16 %v263, %v261
    %v350 = vpack.c.b16 %v266, %v264
    %v351 = vpack.c.b16 %v267, %v265
    %v352 = vpack.c.b16 %v270, %v268
    %v353 = vpack.c.b16 %v271, %v269
    %v354 = vpack.c.b16 %v274, %v272
    %v355 = vpack.c.b16 %v275, %v273
    %v356 = vpack.c.b16 %v278, %v276
    %v357 = vpack.c.b16 %v279, %v277
    %v358 = vpack.c.b16 %v282, %v280
    %v359 = vpack.c.b16 %v283, %v281
    %v360 = vpack.c.b16 %v286, %v284
    %v361 = vpack.c.b16 %v287, %v285
    %v362 = vpack.c.b16 %v290, %v288
    %v363 = vpack.c.b16 %v291, %v289
    %v364 = vpack.c.b16 %v294, %v292
    %v365 = vpack.c.b16 %v295, %v293
    %v366 = vpack.c.b16 %v298, %v296
    %v367 = vpack.c.b16 %v299, %v297
    %v368 = vpack.c.b16 %v302, %v300
    %v369 = vpack.c.b16 %v303, %v301
    %v370 = vpack.c.b16 %v306, %v304
    %v371 = vpack.c.b16 %v307, %v305
    %v372 = vpack.c.b16 %v310, %v308
    %v373 = vpack.c.b16 %v311, %v309
    %v374 = vpack.c.b16 %v314, %v312
    %v375 = vpack.c.b16 %v315, %v313
    %vm436 = vcmask 785408
    %v438 = vsel %vm436, %v132, 0
    %440 = vmatprep.subr.bf16.mxu0 %v317
    %441 = vmatpush1.bf16.msra.mxu0 %v316
    %442 = vmatprep.subr.bf16.mxu0 %v319
    %443 = vmatpush1.bf16.msra.mxu0 %v318
    %444 = vmatprep.subr.bf16.mxu0 %v321
    %445 = vmatpush1.bf16.msra.mxu0 %v320
    %446 = vmatprep.subr.bf16.mxu0 %v323
    %447 = vmatpush1.bf16.msra.mxu0 %v322
    %448 = vmatprep.subr.bf16.mxu0 %v325
    %449 = vmatpush1.bf16.msra.mxu0 %v324
    %450 = vmatprep.subr.bf16.mxu0 %v327
    %451 = vmatpush1.bf16.msra.mxu0 %v326
    %452 = vmatprep.subr.bf16.mxu0 %v329
    %453 = vmatpush1.bf16.msra.mxu0 %v328
    %454 = vmatprep.subr.bf16.mxu0 %v331
    %455 = vmatpush1.bf16.msra.mxu0 %v330
    %456 = vmatprep.subr.bf16.mxu0 %v333
    %457 = vmatpush1.bf16.msra.mxu0 %v332
    %458 = vmatprep.subr.bf16.mxu0 %v335
    %459 = vmatpush1.bf16.msra.mxu0 %v334
    %460 = vmatprep.subr.bf16.mxu0 %v337
    %461 = vmatpush1.bf16.msra.mxu0 %v336
    %462 = vmatprep.subr.bf16.mxu0 %v339
    %463 = vmatpush1.bf16.msra.mxu0 %v338
    %464 = vmatprep.subr.bf16.mxu0 %v341
    %465 = vmatpush1.bf16.msra.mxu0 %v340
    %466 = vmatprep.subr.bf16.mxu0 %v343
    %467 = vmatpush1.bf16.msra.mxu0 %v342
    %468 = vmatprep.subr.bf16.mxu0 %v345
    %469 = vmatpush1.bf16.msra.mxu0 %v344
    %470 = vmatprep.subr.bf16.mxu0 %v347
    %471 = vmatpush1.bf16.msra.mxu0 %v346
    %472 = vmatprep.mubr.bf16.mxu0 %v130
    %473 = vmatmul.mubr.bf16.gmra.mrb[0].mxu0 %v129
    %v474 = vpop.f32.mrb[0].mxu0
    %v475 = vadd.f32 0.0, %v474
    %v476 = vpop.f32.mrb[0].mxu0
    %v477 = vadd.f32 0.0, %v476
    %v478 = vpop.f32.mrb[0].mxu0
    %v479 = vadd.f32 0.0, %v478
    %v480 = vpop.f32.mrb[0].mxu0
    %v481 = vadd.f32 0.0, %v480
    %482 = vdwg.mxu0
    %483 = vmatprep.subr.bf16.mxu0 %v349
    %484 = vmatpush1.bf16.msra.mxu0 %v348
    %485 = vmatprep.subr.bf16.mxu0 %v351
    %486 = vmatpush1.bf16.msra.mxu0 %v350
    %487 = vmatprep.subr.bf16.mxu0 %v353
    %488 = vmatpush1.bf16.msra.mxu0 %v352
    %489 = vmatprep.subr.bf16.mxu0 %v355
    %490 = vmatpush1.bf16.msra.mxu0 %v354
    %491 = vmatprep.subr.bf16.mxu0 %v357
    %492 = vmatpush1.bf16.msra.mxu0 %v356
    %493 = vmatprep.subr.bf16.mxu0 %v359
    %494 = vmatpush1.bf16.msra.mxu0 %v358
    %495 = vmatprep.subr.bf16.mxu0 %v361
    %496 = vmatpush1.bf16.msra.mxu0 %v360
    %497 = vmatprep.subr.bf16.mxu0 %v363
    %498 = vmatpush1.bf16.msra.mxu0 %v362
    %499 = vmatprep.subr.bf16.mxu0 %v365
    %500 = vmatpush1.bf16.msra.mxu0 %v364
    %501 = vmatprep.subr.bf16.mxu0 %v367
    %502 = vmatpush1.bf16.msra.mxu0 %v366
    %503 = vmatprep.subr.bf16.mxu0 %v369
    %504 = vmatpush1.bf16.msra.mxu0 %v368
    %505 = vmatprep.subr.bf16.mxu0 %v371
    %506 = vmatpush1.bf16.msra.mxu0 %v370
    %507 = vmatprep.subr.bf16.mxu0 %v373
    %508 = vmatpush1.bf16.msra.mxu0 %v372
    %509 = vmatprep.subr.bf16.mxu0 %v375
    %510 = vmatpush1.bf16.msra.mxu0 %v374
    %511 = vmatprep.subr.bf16.mxu0 0
    %512 = vmatpush1.bf16.msra.mxu0 0
    %513 = vmatprep.subr.bf16.mxu0 0
    %514 = vmatpush1.bf16.msra.mxu0 0
    %515 = vmatprep.mubr.bf16.mxu0 %v438
    %516 = vmatmul.mubr.bf16.gmra.mrb[0].mxu0 %v131
    %v517 = vpop.f32.mrb[0].mxu0
    %v518 = vadd.f32 %v475, %v517
    %v519 = vpop.f32.mrb[0].mxu0
    %v520 = vadd.f32 %v477, %v519
    %v521 = vpop.f32.mrb[0].mxu0
    %v522 = vadd.f32 %v479, %v521
    %v523 = vpop.f32.mrb[0].mxu0
    %v524 = vadd.f32 %v481, %v523
    %525 = vdwg.mxu0
    %s526 = scalar_lea.vmem %s0, 32
    %v527 = vld [vmem:[%s526] sm:$0xff]
    %v528 = vld [vmem:[%s526 + $0x8] sm:$0xff]
    %v529 = vld [vmem:[%s526 + $0x10] sm:$0x77]
    %v530 = vld [vmem:[%s526 + $0x18] sm:$0x77]
    %v535 = vunpack.c.l.b16 %v527
    %v536 = vunpack.c.h.b16 %v527
    %v537 = vunpack.c.l.b16 %v528
    %v538 = vunpack.c.h.b16 %v528
    %v539 = vunpack.c.l.b16 %v529
    %v540 = vunpack.c.h.b16 %v529
    %v541 = vunpack.c.l.b16 %v530
    %v542 = vunpack.c.h.b16 %v530
    %v543 = vpack.c.b16 %v539, %v535
    %v544 = vpack.c.b16 %v540, %v536
    %v545 = vpack.c.b16 %v541, %v537
    %v546 = vpack.c.b16 %v542, %v538
    %v551 = vsel %vm436, %v546, 0
    %553 = vmatprep.subr.bf16.mxu0 %v317
    %554 = vmatpush1.bf16.msra.mxu0 %v316
    %555 = vmatprep.subr.bf16.mxu0 %v319
    %556 = vmatpush1.bf16.msra.mxu0 %v318
    %557 = vmatprep.subr.bf16.mxu0 %v321
    %558 = vmatpush1.bf16.msra.mxu0 %v320
    %559 = vmatprep.subr.bf16.mxu0 %v323
    %560 = vmatpush1.bf16.msra.mxu0 %v322
    %561 = vmatprep.subr.bf16.mxu0 %v325
    %562 = vmatpush1.bf16.msra.mxu0 %v324
    %563 = vmatprep.subr.bf16.mxu0 %v327
    %564 = vmatpush1.bf16.msra.mxu0 %v326
    %565 = vmatprep.subr.bf16.mxu0 %v329
    %566 = vmatpush1.bf16.msra.mxu0 %v328
    %567 = vmatprep.subr.bf16.mxu0 %v331
    %568 = vmatpush1.bf16.msra.mxu0 %v330
    %569 = vmatprep.subr.bf16.mxu0 %v333
    %570 = vmatpush1.bf16.msra.mxu0 %v332
    %571 = vmatprep.subr.bf16.mxu0 %v335
    %572 = vmatpush1.bf16.msra.mxu0 %v334
    %573 = vmatprep.subr.bf16.mxu0 %v337
    %574 = vmatpush1.bf16.msra.mxu0 %v336
    %575 = vmatprep.subr.bf16.mxu0 %v339
    %576 = vmatpush1.bf16.msra.mxu0 %v338
    %577 = vmatprep.subr.bf16.mxu0 %v341
    %578 = vmatpush1.bf16.msra.mxu0 %v340
    %579 = vmatprep.subr.bf16.mxu0 %v343
    %580 = vmatpush1.bf16.msra.mxu0 %v342
    %581 = vmatprep.subr.bf16.mxu0 %v345
    %582 = vmatpush1.bf16.msra.mxu0 %v344
    %583 = vmatprep.subr.bf16.mxu0 %v347
    %584 = vmatpush1.bf16.msra.mxu0 %v346
    %585 = vmatprep.mubr.bf16.mxu0 %v544
    %586 = vmatmul.mubr.bf16.gmra.mrb[0].mxu0 %v543
    %v587 = vpop.f32.mrb[0].mxu0
    %v588 = vadd.f32 0.0, %v587
    %v589 = vpop.f32.mrb[0].mxu0
    %v590 = vadd.f32 0.0, %v589
    %v591 = vpop.f32.mrb[0].mxu0
    %v592 = vadd.f32 0.0, %v591
    %v593 = vpop.f32.mrb[0].mxu0
    %v594 = vadd.f32 0.0, %v593
    %595 = vdwg.mxu0
    %596 = vmatprep.subr.bf16.mxu0 %v349
    %597 = vmatpush1.bf16.msra.mxu0 %v348
    %598 = vmatprep.subr.bf16.mxu0 %v351
    %599 = vmatpush1.bf16.msra.mxu0 %v350
    %600 = vmatprep.subr.bf16.mxu0 %v353
    %601 = vmatpush1.bf16.msra.mxu0 %v352
    %602 = vmatprep.subr.bf16.mxu0 %v355
    %603 = vmatpush1.bf16.msra.mxu0 %v354
    %604 = vmatprep.subr.bf16.mxu0 %v357
    %605 = vmatpush1.bf16.msra.mxu0 %v356
    %606 = vmatprep.subr.bf16.mxu0 %v359
    %607 = vmatpush1.bf16.msra.mxu0 %v358
    %608 = vmatprep.subr.bf16.mxu0 %v361
    %609 = vmatpush1.bf16.msra.mxu0 %v360
    %610 = vmatprep.subr.bf16.mxu0 %v363
    %611 = vmatpush1.bf16.msra.mxu0 %v362
    %612 = vmatprep.subr.bf16.mxu0 %v365
    %613 = vmatpush1.bf16.msra.mxu0 %v364
    %614 = vmatprep.subr.bf16.mxu0 %v367
    %615 = vmatpush1.bf16.msra.mxu0 %v366
    %616 = vmatprep.subr.bf16.mxu0 %v369
    %617 = vmatpush1.bf16.msra.mxu0 %v368
    %618 = vmatprep.subr.bf16.mxu0 %v371
    %619 = vmatpush1.bf16.msra.mxu0 %v370
    %620 = vmatprep.subr.bf16.mxu0 %v373
    %621 = vmatpush1.bf16.msra.mxu0 %v372
    %622 = vmatprep.subr.bf16.mxu0 %v375
    %623 = vmatpush1.bf16.msra.mxu0 %v374
    %624 = vmatprep.subr.bf16.mxu0 0
    %625 = vmatpush1.bf16.msra.mxu0 0
    %626 = vmatprep.subr.bf16.mxu0 0
    %627 = vmatpush1.bf16.msra.mxu0 0
    %628 = vmatprep.mubr.bf16.mxu0 %v551
    %629 = vmatmul.mubr.bf16.gmra.mrb[0].mxu0 %v545
    %v630 = vpop.f32.mrb[0].mxu0
    %v631 = vadd.f32 %v588, %v630
    %v632 = vpop.f32.mrb[0].mxu0
    %v633 = vadd.f32 %v590, %v632
    %v634 = vpop.f32.mrb[0].mxu0
    %v635 = vadd.f32 %v592, %v634
    %v636 = vpop.f32.mrb[0].mxu0
    %v637 = vadd.f32 %v594, %v636
    %638 = vdwg.mxu0
    %v639 = vmax.f32 %v518, %v631
    %v640 = vmax.f32 %v520, %v633
    %v641 = vmax.f32 %v522, %v635
    %v642 = vmax.f32 %v524, %v637
    %647 = vrot.lane.b32.xlu0 %v639, 122
    %v648 = vpop.permute.xlu0 %647
    %649 = vrot.lane.b32.xlu0 %v640, 122
    %v650 = vpop.permute.xlu0 %649
    %651 = vrot.lane.b32.xlu0 %v641, 122
    %v652 = vpop.permute.xlu0 %651
    %653 = vrot.lane.b32.xlu0 %v642, 122
    %v654 = vpop.permute.xlu0 %653
    %vm655 = vcmask 998400
    %v656 = vsel %vm655, %v648, %v650
    %v657 = vsel %vm655, %v652, %v654
    %662 = vrot.lane.b32.xlu0 %v639, 34
    %v663 = vpop.permute.xlu0 %662
    %664 = vrot.lane.b32.xlu0 %v641, 34
    %v665 = vpop.permute.xlu0 %664
    %vm668 = vcmask 277504
    %v669 = vsel %vm668, %v650, %v663
    %v670 = vsel %vm668, %v654, %v665
    %v671 = vmax.f32 %v639, %v656
    %v672 = vmax.f32 %v640, %v669
    %v673 = vmax.f32 %v641, %v657
    %v674 = vmax.f32 %v642, %v670
    %v675 = vadd.f32 %v671, %v45
    %v676 = vadd.f32 %v672, %v49
    %v677 = vadd.f32 %v673, %v45
    %v678 = vadd.f32 %v674, %v49
    %v679 = vmax.f32 %v675, 0.0
    %v680 = vmax.f32 %v676, 0.0
    %v681 = vmax.f32 %v677, 0.0
    %v682 = vmax.f32 %v678, 0.0
    %vm687 = vcmask 1046528
    %v688 = vrot.slane %v679, 1
    %v689 = vrot.slane %v681, 1
    %v690 = vsel %vm687, %v688, %v689
    %v691 = vrot.slane %v680, 1
    %v692 = vrot.slane %v682, 1
    %v693 = vsel %vm687, %v691, %v692
    %694 = vrot.lane.b32.xlu0 %v690, 40
    %v695 = vpop.permute.xlu0 %694
    %696 = vrot.lane.b32.xlu0 %v693, 40
    %v697 = vpop.permute.xlu0 %696
    %698 = vrot.lane.b32.xlu0 %v689, 40
    %v699 = vpop.permute.xlu0 %698
    %700 = vrot.lane.b32.xlu0 %v692, 40
    %v701 = vpop.permute.xlu0 %700
    %vm702 = vcmask 326656
    %v703 = vsel %vm702, %v695, %v697
    %v704 = vsel %vm702, %v699, %v701
    %vm709 = vcmask 1045504
    %v710 = vrot.slane %v679, 2
    %v711 = vrot.slane %v681, 2
    %v712 = vsel %vm709, %v710, %v711
    %v713 = vrot.slane %v680, 2
    %v714 = vrot.slane %v682, 2
    %v715 = vsel %vm709, %v713, %v714
    %716 = vrot.lane.b32.xlu0 %v712, 80
    %v717 = vpop.permute.xlu0 %716
    %718 = vrot.lane.b32.xlu0 %v715, 80
    %v719 = vpop.permute.xlu0 %718
    %720 = vrot.lane.b32.xlu0 %v711, 80
    %v721 = vpop.permute.xlu0 %720
    %722 = vrot.lane.b32.xlu0 %v714, 80
    %v723 = vpop.permute.xlu0 %722
    %vm724 = vcmask 654336
    %v725 = vsel %vm724, %v717, %v719
    %v726 = vsel %vm724, %v721, %v723
    %vm731 = vcmask 1044480
    %v732 = vrot.slane %v679, 3
    %v733 = vrot.slane %v681, 3
    %v734 = vsel %vm731, %v732, %v733
    %v735 = vrot.slane %v680, 3
    %v736 = vrot.slane %v682, 3
    %v737 = vsel %vm731, %v735, %v736
    %738 = vrot.lane.b32.xlu0 %v734, 120
    %v739 = vpop.permute.xlu0 %738
    %740 = vrot.lane.b32.xlu0 %v737, 120
    %v741 = vpop.permute.xlu0 %740
    %742 = vrot.lane.b32.xlu0 %v733, 120
    %v743 = vpop.permute.xlu0 %742
    %744 = vrot.lane.b32.xlu0 %v736, 120
    %v745 = vpop.permute.xlu0 %744
    %vm746 = vcmask 982016
    %v747 = vsel %vm746, %v739, %v741
    %v748 = vsel %vm746, %v743, %v745
    %vm755 = vcmask 1043456
    %v756 = vrot.slane %v679, 4
    %v757 = vrot.slane %v681, 4
    %v758 = vsel %vm755, %v756, %v757
    %v759 = vrot.slane %v680, 4
    %v760 = vrot.slane %v682, 4
    %v761 = vsel %vm755, %v759, %v760
    %762 = vrot.lane.b32.xlu0 %v758, 32
    %v763 = vpop.permute.xlu0 %762
    %764 = vrot.lane.b32.xlu0 %v761, 32
    %v765 = vpop.permute.xlu0 %764
    %766 = vrot.lane.b32.xlu0 %v757, 32
    %v767 = vpop.permute.xlu0 %766
    %768 = vrot.lane.b32.xlu0 %v760, 32
    %v769 = vpop.permute.xlu0 %768
    %vm770 = vcmask 261120
    %v771 = vsel %vm770, %v763, %v765
    %v772 = vsel %vm770, %v767, %v769
    %v777 = vsel %vm702, %v680, %v695
    %v778 = vsel %vm702, %v682, %v699
    %v779 = vsel %vm724, %v703, %v717
    %v780 = vsel %vm724, %v704, %v721
    %v781 = vsel %vm746, %v725, %v739
    %v782 = vsel %vm746, %v726, %v743
    %v783 = vsel %vm770, %v741, %v763
    %v784 = vsel %vm770, %v745, %v767
    %v785 = vpack.c.bf16 %v681, %v679
    %v786 = vpack.c.bf16 %v778, %v777
    %v787 = vpack.c.bf16 %v780, %v779
    %v788 = vpack.c.bf16 %v782, %v781
    %v789 = vpack.c.bf16 %v748, %v747
    %v790 = vpack.c.bf16 %v784, %v783
    %v791 = vpack.c.bf16 %v772, %v771
    %v792 = vld [vmem:[%s3] sm:$0xff]
    %v793 = vld [vmem:[%s3 + $0x8] sm:$0xff]
    %v794 = vld [vmem:[%s3 + $0x10] sm:$0xff]
    %v795 = vld [vmem:[%s3 + $0x18] sm:$0xff]
    %v796 = vld [vmem:[%s3 + $0x20] sm:$0xff]
    %v797 = vld [vmem:[%s3 + $0x28] sm:$0xff]
    %v798 = vld [vmem:[%s3 + $0x30] sm:$0xff]
    %v799 = vld [vmem:[%s3 + $0x38] sm:$0xff]
    %v800 = vld [vmem:[%s3 + $0x40] sm:$0xff]
    %v801 = vld [vmem:[%s3 + $0x48] sm:$0xff]
    %v802 = vld [vmem:[%s3 + $0x50] sm:$0xff]
    %v803 = vld [vmem:[%s3 + $0x58] sm:$0xff]
    %v804 = vld [vmem:[%s3 + $0x60] sm:$0xff]
    %v805 = vld [vmem:[%s3 + $0x68] sm:$0xff]
    %v806 = vld [vmem:[%s3 + $0x70] sm:$0xff]
    %v807 = vld [vmem:[%s3 + $0x78] sm:$0xff]
    %v808 = vld [vmem:[%s3 + $0x80] sm:$0xff]
    %v809 = vld [vmem:[%s3 + $0x88] sm:$0xff]
    %v810 = vld [vmem:[%s3 + $0x90] sm:$0xff]
    %v811 = vld [vmem:[%s3 + $0x98] sm:$0xff]
    %v812 = vld [vmem:[%s3 + $0xa0] sm:$0xff]
    %v813 = vld [vmem:[%s3 + $0xa8] sm:$0xff]
    %v814 = vld [vmem:[%s3 + $0xb0] sm:$0xff]
    %v815 = vld [vmem:[%s3 + $0xb8] sm:$0xff]
    %v816 = vld [vmem:[%s3 + $0xc0] sm:$0xff]
    %v817 = vld [vmem:[%s3 + $0xc8] sm:$0xff]
    %v818 = vld [vmem:[%s3 + $0xd0] sm:$0xff]
    %v819 = vld [vmem:[%s3 + $0xd8] sm:$0xff]
    %v820 = vld [vmem:[%s3 + $0xe0] sm:$0xff]
    %v821 = vld [vmem:[%s3 + $0xe8] sm:$0xff]
    %v822 = vld [vmem:[%s3 + $0xf0] sm:$0xff]
    %v823 = vld [vmem:[%s3 + $0xf8] sm:$0xff]
    %v824 = vld [vmem:[%s3 + $0x100] sm:$0xff]
    %v825 = vld [vmem:[%s3 + $0x108] sm:$0xff]
    %v826 = vld [vmem:[%s3 + $0x110] sm:$0xff]
    %v827 = vld [vmem:[%s3 + $0x118] sm:$0xff]
    %v828 = vld [vmem:[%s3 + $0x120] sm:$0xff]
    %v829 = vld [vmem:[%s3 + $0x128] sm:$0xff]
    %v830 = vld [vmem:[%s3 + $0x130] sm:$0xff]
    %v831 = vld [vmem:[%s3 + $0x138] sm:$0xff]
    %v832 = vld [vmem:[%s3 + $0x140] sm:$0xff]
    %v833 = vld [vmem:[%s3 + $0x148] sm:$0xff]
    %v834 = vld [vmem:[%s3 + $0x150] sm:$0xff]
    %v835 = vld [vmem:[%s3 + $0x158] sm:$0xff]
    %v836 = vld [vmem:[%s3 + $0x160] sm:$0xff]
    %v837 = vld [vmem:[%s3 + $0x168] sm:$0xff]
    %v838 = vld [vmem:[%s3 + $0x170] sm:$0xff]
    %v839 = vld [vmem:[%s3 + $0x178] sm:$0xff]
    %v840 = vld [vmem:[%s3 + $0x180] sm:$0xff]
    %v841 = vld [vmem:[%s3 + $0x188] sm:$0xff]
    %v842 = vld [vmem:[%s3 + $0x190] sm:$0xff]
    %v843 = vld [vmem:[%s3 + $0x198] sm:$0xff]
    %v844 = vld [vmem:[%s3 + $0x1a0] sm:$0xff]
    %v845 = vld [vmem:[%s3 + $0x1a8] sm:$0xff]
    %v846 = vld [vmem:[%s3 + $0x1b0] sm:$0xff]
    %v847 = vld [vmem:[%s3 + $0x1b8] sm:$0xff]
    %v848 = vld [vmem:[%s3 + $0x1c0] sm:$0xff]
    %v849 = vld [vmem:[%s3 + $0x1c8] sm:$0xff]
    %v850 = vld [vmem:[%s3 + $0x1d0] sm:$0xff]
    %v851 = vld [vmem:[%s3 + $0x1d8] sm:$0xff]
    %v852 = vld [vmem:[%s3 + $0x1e0] sm:$0xff]
    %v853 = vld [vmem:[%s3 + $0x1e8] sm:$0xff]
    %v854 = vld [vmem:[%s3 + $0x1f0] sm:$0xff]
    %v855 = vld [vmem:[%s3 + $0x1f8] sm:$0xff]
    %v856 = vld [vmem:[%s3 + $0x200] sm:$0xff]
    %v857 = vld [vmem:[%s3 + $0x208] sm:$0xff]
    %v858 = vld [vmem:[%s3 + $0x210] sm:$0xff]
    %v859 = vld [vmem:[%s3 + $0x218] sm:$0xff]
    %v860 = vld [vmem:[%s3 + $0x220] sm:$0xff]
    %v861 = vld [vmem:[%s3 + $0x228] sm:$0xff]
    %v862 = vld [vmem:[%s3 + $0x230] sm:$0xff]
    %v863 = vld [vmem:[%s3 + $0x238] sm:$0xff]
    %v864 = vld [vmem:[%s3 + $0x240] sm:$0xff]
    %v865 = vld [vmem:[%s3 + $0x248] sm:$0xff]
    %v866 = vld [vmem:[%s3 + $0x250] sm:$0xff]
    %v867 = vld [vmem:[%s3 + $0x258] sm:$0xff]
    %v868 = vld [vmem:[%s3 + $0x260] sm:$0xff]
    %v869 = vld [vmem:[%s3 + $0x268] sm:$0xff]
    %v870 = vld [vmem:[%s3 + $0x270] sm:$0xff]
    %v871 = vld [vmem:[%s3 + $0x278] sm:$0xff]
    %v872 = vld [vmem:[%s3 + $0x280] sm:$0xff]
    %v873 = vld [vmem:[%s3 + $0x288] sm:$0xff]
    %v874 = vld [vmem:[%s3 + $0x290] sm:$0xff]
    %v875 = vld [vmem:[%s3 + $0x298] sm:$0xff]
    %v876 = vld [vmem:[%s3 + $0x2a0] sm:$0xff]
    %v877 = vld [vmem:[%s3 + $0x2a8] sm:$0xff]
    %v878 = vld [vmem:[%s3 + $0x2b0] sm:$0xff]
    %v879 = vld [vmem:[%s3 + $0x2b8] sm:$0xff]
    %v880 = vld [vmem:[%s3 + $0x2c0] sm:$0xff]
    %v881 = vld [vmem:[%s3 + $0x2c8] sm:$0xff]
    %v882 = vld [vmem:[%s3 + $0x2d0] sm:$0xff]
    %v883 = vld [vmem:[%s3 + $0x2d8] sm:$0xff]
    %v884 = vld [vmem:[%s3 + $0x2e0] sm:$0xff]
    %v885 = vld [vmem:[%s3 + $0x2e8] sm:$0xff]
    %v886 = vld [vmem:[%s3 + $0x2f0] sm:$0xff]
    %v887 = vld [vmem:[%s3 + $0x2f8] sm:$0xff]
    %v888 = vld [vmem:[%s3 + $0x300] sm:$0xff]
    %v889 = vld [vmem:[%s3 + $0x308] sm:$0xff]
    %v890 = vld [vmem:[%s3 + $0x310] sm:$0xff]
    %v891 = vld [vmem:[%s3 + $0x318] sm:$0xff]
    %v892 = vld [vmem:[%s3 + $0x320] sm:$0xff]
    %v893 = vld [vmem:[%s3 + $0x328] sm:$0xff]
    %v894 = vld [vmem:[%s3 + $0x330] sm:$0xff]
    %v895 = vld [vmem:[%s3 + $0x338] sm:$0xff]
    %v896 = vld [vmem:[%s3 + $0x340] sm:$0xff]
    %v1002 = vunpack.c.l.b16 %v792
    %v1003 = vunpack.c.h.b16 %v792
    %v1004 = vunpack.c.l.b16 %v793
    %v1005 = vunpack.c.h.b16 %v793
    %v1006 = vunpack.c.l.b16 %v794
    %v1007 = vunpack.c.h.b16 %v794
    %v1008 = vunpack.c.l.b16 %v795
    %v1009 = vunpack.c.h.b16 %v795
    %v1010 = vunpack.c.l.b16 %v796
    %v1011 = vunpack.c.h.b16 %v796
    %v1012 = vunpack.c.l.b16 %v797
    %v1013 = vunpack.c.h.b16 %v797
    %v1014 = vunpack.c.l.b16 %v798
    %v1015 = vunpack.c.h.b16 %v798
    %v1016 = vunpack.c.l.b16 %v799
    %v1017 = vunpack.c.h.b16 %v799
    %v1018 = vunpack.c.l.b16 %v800
    %v1019 = vunpack.c.h.b16 %v800
    %v1020 = vunpack.c.l.b16 %v801
    %v1021 = vunpack.c.h.b16 %v801
    %v1022 = vunpack.c.l.b16 %v802
    %v1023 = vunpack.c.h.b16 %v802
    %v1024 = vunpack.c.l.b16 %v803
    %v1025 = vunpack.c.h.b16 %v803
    %v1026 = vunpack.c.l.b16 %v804
    %v1027 = vunpack.c.h.b16 %v804
    %v1028 = vunpack.c.l.b16 %v805
    %v1029 = vunpack.c.h.b16 %v805
    %v1030 = vunpack.c.l.b16 %v806
    %v1031 = vunpack.c.h.b16 %v806
    %v1032 = vunpack.c.l.b16 %v807
    %v1033 = vunpack.c.h.b16 %v807
    %v1034 = vunpack.c.l.b16 %v808
    %v1035 = vunpack.c.h.b16 %v808
    %v1036 = vunpack.c.l.b16 %v809
    %v1037 = vunpack.c.h.b16 %v809
    %v1038 = vunpack.c.l.b16 %v810
    %v1039 = vunpack.c.h.b16 %v810
    %v1040 = vunpack.c.l.b16 %v811
    %v1041 = vunpack.c.h.b16 %v811
    %v1042 = vunpack.c.l.b16 %v812
    %v1043 = vunpack.c.h.b16 %v812
    %v1044 = vunpack.c.l.b16 %v813
    %v1045 = vunpack.c.h.b16 %v813
    %v1046 = vunpack.c.l.b16 %v814
    %v1047 = vunpack.c.h.b16 %v814
    %v1048 = vunpack.c.l.b16 %v815
    %v1049 = vunpack.c.h.b16 %v815
    %v1050 = vunpack.c.l.b16 %v816
    %v1051 = vunpack.c.h.b16 %v816
    %v1052 = vunpack.c.l.b16 %v817
    %v1053 = vunpack.c.h.b16 %v817
    %v1054 = vunpack.c.l.b16 %v818
    %v1055 = vunpack.c.h.b16 %v818
    %v1056 = vunpack.c.l.b16 %v819
    %v1057 = vunpack.c.h.b16 %v819
    %v1058 = vunpack.c.l.b16 %v820
    %v1059 = vunpack.c.h.b16 %v820
    %v1060 = vunpack.c.l.b16 %v821
    %v1061 = vunpack.c.h.b16 %v821
    %v1062 = vunpack.c.l.b16 %v822
    %v1063 = vunpack.c.h.b16 %v822
    %v1064 = vunpack.c.l.b16 %v823
    %v1065 = vunpack.c.h.b16 %v823
    %v1066 = vunpack.c.l.b16 %v824
    %v1067 = vunpack.c.h.b16 %v824
    %v1068 = vunpack.c.l.b16 %v825
    %v1069 = vunpack.c.h.b16 %v825
    %v1070 = vunpack.c.l.b16 %v826
    %v1071 = vunpack.c.h.b16 %v826
    %v1072 = vunpack.c.l.b16 %v827
    %v1073 = vunpack.c.h.b16 %v827
    %v1074 = vunpack.c.l.b16 %v828
    %v1075 = vunpack.c.h.b16 %v828
    %v1076 = vunpack.c.l.b16 %v829
    %v1077 = vunpack.c.h.b16 %v829
    %v1078 = vunpack.c.l.b16 %v830
    %v1079 = vunpack.c.h.b16 %v830
    %v1080 = vunpack.c.l.b16 %v831
    %v1081 = vunpack.c.h.b16 %v831
    %v1082 = vunpack.c.l.b16 %v832
    %v1083 = vunpack.c.h.b16 %v832
    %v1084 = vunpack.c.l.b16 %v833
    %v1085 = vunpack.c.h.b16 %v833
    %v1086 = vunpack.c.l.b16 %v834
    %v1087 = vunpack.c.h.b16 %v834
    %v1088 = vunpack.c.l.b16 %v835
    %v1089 = vunpack.c.h.b16 %v835
    %v1090 = vunpack.c.l.b16 %v836
    %v1091 = vunpack.c.h.b16 %v836
    %v1092 = vunpack.c.l.b16 %v837
    %v1093 = vunpack.c.h.b16 %v837
    %v1094 = vunpack.c.l.b16 %v838
    %v1095 = vunpack.c.h.b16 %v838
    %v1096 = vunpack.c.l.b16 %v839
    %v1097 = vunpack.c.h.b16 %v839
    %v1098 = vunpack.c.l.b16 %v840
    %v1099 = vunpack.c.h.b16 %v840
    %v1100 = vunpack.c.l.b16 %v841
    %v1101 = vunpack.c.h.b16 %v841
    %v1102 = vunpack.c.l.b16 %v842
    %v1103 = vunpack.c.h.b16 %v842
    %v1104 = vunpack.c.l.b16 %v843
    %v1105 = vunpack.c.h.b16 %v843
    %v1106 = vunpack.c.l.b16 %v844
    %v1107 = vunpack.c.h.b16 %v844
    %v1108 = vunpack.c.l.b16 %v845
    %v1109 = vunpack.c.h.b16 %v845
    %v1110 = vunpack.c.l.b16 %v846
    %v1111 = vunpack.c.h.b16 %v846
    %v1112 = vunpack.c.l.b16 %v847
    %v1113 = vunpack.c.h.b16 %v847
    %v1114 = vunpack.c.l.b16 %v848
    %v1115 = vunpack.c.h.b16 %v848
    %v1116 = vunpack.c.l.b16 %v849
    %v1117 = vunpack.c.h.b16 %v849
    %v1118 = vunpack.c.l.b16 %v850
    %v1119 = vunpack.c.h.b16 %v850
    %v1120 = vunpack.c.l.b16 %v851
    %v1121 = vunpack.c.h.b16 %v851
    %v1122 = vunpack.c.l.b16 %v852
    %v1123 = vunpack.c.h.b16 %v852
    %v1124 = vunpack.c.l.b16 %v853
    %v1125 = vunpack.c.h.b16 %v853
    %v1126 = vunpack.c.l.b16 %v854
    %v1127 = vunpack.c.h.b16 %v854
    %v1128 = vunpack.c.l.b16 %v855
    %v1129 = vunpack.c.h.b16 %v855
    %v1130 = vunpack.c.l.b16 %v856
    %v1131 = vunpack.c.h.b16 %v856
    %v1132 = vunpack.c.l.b16 %v857
    %v1133 = vunpack.c.h.b16 %v857
    %v1134 = vunpack.c.l.b16 %v858
    %v1135 = vunpack.c.h.b16 %v858
    %v1136 = vunpack.c.l.b16 %v859
    %v1137 = vunpack.c.h.b16 %v859
    %v1138 = vunpack.c.l.b16 %v860
    %v1139 = vunpack.c.h.b16 %v860
    %v1140 = vunpack.c.l.b16 %v861
    %v1141 = vunpack.c.h.b16 %v861
    %v1142 = vunpack.c.l.b16 %v862
    %v1143 = vunpack.c.h.b16 %v862
    %v1144 = vunpack.c.l.b16 %v863
    %v1145 = vunpack.c.h.b16 %v863
    %v1146 = vunpack.c.l.b16 %v864
    %v1147 = vunpack.c.h.b16 %v864
    %v1148 = vunpack.c.l.b16 %v865
    %v1149 = vunpack.c.h.b16 %v865
    %v1150 = vunpack.c.l.b16 %v866
    %v1151 = vunpack.c.h.b16 %v866
    %v1152 = vunpack.c.l.b16 %v867
    %v1153 = vunpack.c.h.b16 %v867
    %v1154 = vunpack.c.l.b16 %v868
    %v1155 = vunpack.c.h.b16 %v868
    %v1156 = vunpack.c.l.b16 %v869
    %v1157 = vunpack.c.h.b16 %v869
    %v1158 = vunpack.c.l.b16 %v870
    %v1159 = vunpack.c.h.b16 %v870
    %v1160 = vunpack.c.l.b16 %v871
    %v1161 = vunpack.c.h.b16 %v871
    %v1162 = vunpack.c.l.b16 %v872
    %v1163 = vunpack.c.h.b16 %v872
    %v1164 = vunpack.c.l.b16 %v873
    %v1165 = vunpack.c.h.b16 %v873
    %v1166 = vunpack.c.l.b16 %v874
    %v1167 = vunpack.c.h.b16 %v874
    %v1168 = vunpack.c.l.b16 %v875
    %v1169 = vunpack.c.h.b16 %v875
    %v1170 = vunpack.c.l.b16 %v876
    %v1171 = vunpack.c.h.b16 %v876
    %v1172 = vunpack.c.l.b16 %v877
    %v1173 = vunpack.c.h.b16 %v877
    %v1174 = vunpack.c.l.b16 %v878
    %v1175 = vunpack.c.h.b16 %v878
    %v1176 = vunpack.c.l.b16 %v879
    %v1177 = vunpack.c.h.b16 %v879
    %v1178 = vunpack.c.l.b16 %v880
    %v1179 = vunpack.c.h.b16 %v880
    %v1180 = vunpack.c.l.b16 %v881
    %v1181 = vunpack.c.h.b16 %v881
    %v1182 = vunpack.c.l.b16 %v882
    %v1183 = vunpack.c.h.b16 %v882
    %v1184 = vunpack.c.l.b16 %v883
    %v1185 = vunpack.c.h.b16 %v883
    %v1186 = vunpack.c.l.b16 %v884
    %v1187 = vunpack.c.h.b16 %v884
    %v1188 = vunpack.c.l.b16 %v885
    %v1189 = vunpack.c.h.b16 %v885
    %v1190 = vunpack.c.l.b16 %v886
    %v1191 = vunpack.c.h.b16 %v886
    %v1192 = vunpack.c.l.b16 %v887
    %v1193 = vunpack.c.h.b16 %v887
    %v1194 = vunpack.c.l.b16 %v888
    %v1195 = vunpack.c.h.b16 %v888
    %v1196 = vunpack.c.l.b16 %v889
    %v1197 = vunpack.c.h.b16 %v889
    %v1198 = vunpack.c.l.b16 %v890
    %v1199 = vunpack.c.h.b16 %v890
    %v1200 = vunpack.c.l.b16 %v891
    %v1201 = vunpack.c.h.b16 %v891
    %v1202 = vunpack.c.l.b16 %v892
    %v1203 = vunpack.c.h.b16 %v892
    %v1204 = vunpack.c.l.b16 %v893
    %v1205 = vunpack.c.h.b16 %v893
    %v1206 = vunpack.c.l.b16 %v894
    %v1207 = vunpack.c.h.b16 %v894
    %v1208 = vunpack.c.l.b16 %v895
    %v1209 = vunpack.c.h.b16 %v895
    %v1210 = vunpack.c.l.b16 %v896
    %v1211 = vunpack.c.h.b16 %v896
    %v1212 = vpack.c.b16 %v1004, %v1002
    %v1213 = vpack.c.b16 %v1005, %v1003
    %v1214 = vpack.c.b16 %v1008, %v1006
    %v1215 = vpack.c.b16 %v1009, %v1007
    %v1216 = vpack.c.b16 %v1012, %v1010
    %v1217 = vpack.c.b16 %v1013, %v1011
    %v1218 = vpack.c.b16 %v1016, %v1014
    %v1219 = vpack.c.b16 %v1017, %v1015
    %v1220 = vpack.c.b16 %v1020, %v1018
    %v1221 = vpack.c.b16 %v1021, %v1019
    %v1222 = vpack.c.b16 %v1024, %v1022
    %v1223 = vpack.c.b16 %v1025, %v1023
    %v1224 = vpack.c.b16 %v1028, %v1026
    %v1225 = vpack.c.b16 %v1029, %v1027
    %v1226 = vpack.c.b16 %v1032, %v1030
    %v1227 = vpack.c.b16 %v1033, %v1031
    %v1228 = vpack.c.b16 %v1036, %v1034
    %v1229 = vpack.c.b16 %v1037, %v1035
    %v1230 = vpack.c.b16 %v1040, %v1038
    %v1231 = vpack.c.b16 %v1041, %v1039
    %v1232 = vpack.c.b16 %v1044, %v1042
    %v1233 = vpack.c.b16 %v1045, %v1043
    %v1234 = vpack.c.b16 %v1048, %v1046
    %v1235 = vpack.c.b16 %v1049, %v1047
    %v1236 = vpack.c.b16 %v1052, %v1050
    %v1237 = vpack.c.b16 %v1053, %v1051
    %v1238 = vpack.c.b16 %v1056, %v1054
    %v1239 = vpack.c.b16 %v1057, %v1055
    %v1240 = vpack.c.b16 %v1060, %v1058
    %v1241 = vpack.c.b16 %v1061, %v1059
    %v1242 = vpack.c.b16 %v1064, %v1062
    %v1243 = vpack.c.b16 %v1065, %v1063
    %v1244 = vpack.c.b16 %v1068, %v1066
    %v1245 = vpack.c.b16 %v1069, %v1067
    %v1246 = vpack.c.b16 %v1072, %v1070
    %v1247 = vpack.c.b16 %v1073, %v1071
    %v1248 = vpack.c.b16 %v1076, %v1074
    %v1249 = vpack.c.b16 %v1077, %v1075
    %v1250 = vpack.c.b16 %v1080, %v1078
    %v1251 = vpack.c.b16 %v1081, %v1079
    %v1252 = vpack.c.b16 %v1084, %v1082
    %v1253 = vpack.c.b16 %v1085, %v1083
    %v1254 = vpack.c.b16 %v1088, %v1086
    %v1255 = vpack.c.b16 %v1089, %v1087
    %v1256 = vpack.c.b16 %v1092, %v1090
    %v1257 = vpack.c.b16 %v1093, %v1091
    %v1258 = vpack.c.b16 %v1096, %v1094
    %v1259 = vpack.c.b16 %v1097, %v1095
    %v1260 = vpack.c.b16 %v1100, %v1098
    %v1261 = vpack.c.b16 %v1101, %v1099
    %v1262 = vpack.c.b16 %v1104, %v1102
    %v1263 = vpack.c.b16 %v1105, %v1103
    %v1264 = vpack.c.b16 %v1108, %v1106
    %v1265 = vpack.c.b16 %v1109, %v1107
    %v1266 = vpack.c.b16 %v1112, %v1110
    %v1267 = vpack.c.b16 %v1113, %v1111
    %v1268 = vpack.c.b16 %v1116, %v1114
    %v1269 = vpack.c.b16 %v1117, %v1115
    %v1270 = vpack.c.b16 %v1120, %v1118
    %v1271 = vpack.c.b16 %v1121, %v1119
    %v1272 = vpack.c.b16 %v1124, %v1122
    %v1273 = vpack.c.b16 %v1125, %v1123
    %v1274 = vpack.c.b16 %v1128, %v1126
    %v1275 = vpack.c.b16 %v1129, %v1127
    %v1276 = vpack.c.b16 %v1132, %v1130
    %v1277 = vpack.c.b16 %v1133, %v1131
    %v1278 = vpack.c.b16 %v1136, %v1134
    %v1279 = vpack.c.b16 %v1137, %v1135
    %v1280 = vpack.c.b16 %v1140, %v1138
    %v1281 = vpack.c.b16 %v1141, %v1139
    %v1282 = vpack.c.b16 %v1144, %v1142
    %v1283 = vpack.c.b16 %v1145, %v1143
    %v1284 = vpack.c.b16 %v1148, %v1146
    %v1285 = vpack.c.b16 %v1149, %v1147
    %v1286 = vpack.c.b16 %v1152, %v1150
    %v1287 = vpack.c.b16 %v1153, %v1151
    %v1288 = vpack.c.b16 %v1156, %v1154
    %v1289 = vpack.c.b16 %v1157, %v1155
    %v1290 = vpack.c.b16 %v1160, %v1158
    %v1291 = vpack.c.b16 %v1161, %v1159
    %v1292 = vpack.c.b16 %v1164, %v1162
    %v1293 = vpack.c.b16 %v1165, %v1163
    %v1294 = vpack.c.b16 %v1168, %v1166
    %v1295 = vpack.c.b16 %v1169, %v1167
    %v1296 = vpack.c.b16 %v1172, %v1170
    %v1297 = vpack.c.b16 %v1173, %v1171
    %v1298 = vpack.c.b16 %v1176, %v1174
    %v1299 = vpack.c.b16 %v1177, %v1175
    %v1300 = vpack.c.b16 %v1180, %v1178
    %v1301 = vpack.c.b16 %v1181, %v1179
    %v1302 = vpack.c.b16 %v1184, %v1182
    %v1303 = vpack.c.b16 %v1185, %v1183
    %v1304 = vpack.c.b16 %v1188, %v1186
    %v1305 = vpack.c.b16 %v1189, %v1187
    %v1306 = vpack.c.b16 %v1192, %v1190
    %v1307 = vpack.c.b16 %v1193, %v1191
    %v1308 = vpack.c.b16 %v1196, %v1194
    %v1309 = vpack.c.b16 %v1197, %v1195
    %v1310 = vpack.c.b16 %v1200, %v1198
    %v1311 = vpack.c.b16 %v1201, %v1199
    %v1312 = vpack.c.b16 %v1204, %v1202
    %v1313 = vpack.c.b16 %v1205, %v1203
    %v1314 = vpack.c.b16 %v1208, %v1206
    %v1315 = vpack.c.b16 %v1209, %v1207
    %v1316 = vpack.c.b16 %v1210, %v1210
    %v1317 = vpack.c.b16 %v1211, %v1211
    %vm1422 = vcmask 588800
    %v1424 = vsel %vm1422, %v791, 0
    %v1427 = vsel %vm755, %v1316, 0
    %v1430 = vsel %vm755, %v1317, 0
    %1432 = vmatprep.subr.bf16.mxu0 %v1213
    %1433 = vmatpush1.bf16.msra.mxu0 %v1212
    %1434 = vmatprep.subr.bf16.mxu0 %v1215
    %1435 = vmatpush1.bf16.msra.mxu0 %v1214
    %1436 = vmatprep.subr.bf16.mxu0 %v1217
    %1437 = vmatpush1.bf16.msra.mxu0 %v1216
    %1438 = vmatprep.subr.bf16.mxu0 %v1219
    %1439 = vmatpush1.bf16.msra.mxu0 %v1218
    %1440 = vmatprep.subr.bf16.mxu0 %v1221
    %1441 = vmatpush1.bf16.msra.mxu0 %v1220
    %1442 = vmatprep.subr.bf16.mxu0 %v1223
    %1443 = vmatpush1.bf16.msra.mxu0 %v1222
    %1444 = vmatprep.subr.bf16.mxu0 %v1225
    %1445 = vmatpush1.bf16.msra.mxu0 %v1224
    %1446 = vmatprep.subr.bf16.mxu0 %v1227
    %1447 = vmatpush1.bf16.msra.mxu0 %v1226
    %1448 = vmatprep.subr.bf16.mxu0 %v1229
    %1449 = vmatpush1.bf16.msra.mxu0 %v1228
    %1450 = vmatprep.subr.bf16.mxu0 %v1231
    %1451 = vmatpush1.bf16.msra.mxu0 %v1230
    %1452 = vmatprep.subr.bf16.mxu0 %v1233
    %1453 = vmatpush1.bf16.msra.mxu0 %v1232
    %1454 = vmatprep.subr.bf16.mxu0 %v1235
    %1455 = vmatpush1.bf16.msra.mxu0 %v1234
    %1456 = vmatprep.subr.bf16.mxu0 %v1237
    %1457 = vmatpush1.bf16.msra.mxu0 %v1236
    %1458 = vmatprep.subr.bf16.mxu0 %v1239
    %1459 = vmatpush1.bf16.msra.mxu0 %v1238
    %1460 = vmatprep.subr.bf16.mxu0 %v1241
    %1461 = vmatpush1.bf16.msra.mxu0 %v1240
    %1462 = vmatprep.subr.bf16.mxu0 %v1243
    %1463 = vmatpush1.bf16.msra.mxu0 %v1242
    %1464 = vmatprep.mubr.bf16.mxu0 %v786
    %1465 = vmatmul.mubr.bf16.gmra.mrb[0].mxu0 %v785
    %v1466 = vpop.f32.mrb[0].mxu0
    %v1467 = vadd.f32 0.0, %v1466
    %v1468 = vpop.f32.mrb[0].mxu0
    %v1469 = vadd.f32 0.0, %v1468
    %v1470 = vpop.f32.mrb[0].mxu0
    %v1471 = vadd.f32 0.0, %v1470
    %v1472 = vpop.f32.mrb[0].mxu0
    %v1473 = vadd.f32 0.0, %v1472
    %1474 = vdwg.mxu0
    %1475 = vmatprep.subr.bf16.mxu0 %v1245
    %1476 = vmatpush1.bf16.msra.mxu0 %v1244
    %1477 = vmatprep.subr.bf16.mxu0 %v1247
    %1478 = vmatpush1.bf16.msra.mxu0 %v1246
    %1479 = vmatprep.subr.bf16.mxu0 %v1249
    %1480 = vmatpush1.bf16.msra.mxu0 %v1248
    %1481 = vmatprep.subr.bf16.mxu0 %v1251
    %1482 = vmatpush1.bf16.msra.mxu0 %v1250
    %1483 = vmatprep.subr.bf16.mxu0 %v1253
    %1484 = vmatpush1.bf16.msra.mxu0 %v1252
    %1485 = vmatprep.subr.bf16.mxu0 %v1255
    %1486 = vmatpush1.bf16.msra.mxu0 %v1254
    %1487 = vmatprep.subr.bf16.mxu0 %v1257
    %1488 = vmatpush1.bf16.msra.mxu0 %v1256
    %1489 = vmatprep.subr.bf16.mxu0 %v1259
    %1490 = vmatpush1.bf16.msra.mxu0 %v1258
    %1491 = vmatprep.subr.bf16.mxu0 %v1261
    %1492 = vmatpush1.bf16.msra.mxu0 %v1260
    %1493 = vmatprep.subr.bf16.mxu0 %v1263
    %1494 = vmatpush1.bf16.msra.mxu0 %v1262
    %1495 = vmatprep.subr.bf16.mxu0 %v1265
    %1496 = vmatpush1.bf16.msra.mxu0 %v1264
    %1497 = vmatprep.subr.bf16.mxu0 %v1267
    %1498 = vmatpush1.bf16.msra.mxu0 %v1266
    %1499 = vmatprep.subr.bf16.mxu0 %v1269
    %1500 = vmatpush1.bf16.msra.mxu0 %v1268
    %1501 = vmatprep.subr.bf16.mxu0 %v1271
    %1502 = vmatpush1.bf16.msra.mxu0 %v1270
    %1503 = vmatprep.subr.bf16.mxu0 %v1273
    %1504 = vmatpush1.bf16.msra.mxu0 %v1272
    %1505 = vmatprep.subr.bf16.mxu0 %v1275
    %1506 = vmatpush1.bf16.msra.mxu0 %v1274
    %1507 = vmatprep.mubr.bf16.mxu0 %v788
    %1508 = vmatmul.mubr.bf16.gmra.mrb[0].mxu0 %v787
    %v1509 = vpop.f32.mrb[0].mxu0
    %v1510 = vadd.f32 %v1467, %v1509
    %v1511 = vpop.f32.mrb[0].mxu0
    %v1512 = vadd.f32 %v1469, %v1511
    %v1513 = vpop.f32.mrb[0].mxu0
    %v1514 = vadd.f32 %v1471, %v1513
    %v1515 = vpop.f32.mrb[0].mxu0
    %v1516 = vadd.f32 %v1473, %v1515
    %1517 = vdwg.mxu0
    %1518 = vmatprep.subr.bf16.mxu0 %v1277
    %1519 = vmatpush1.bf16.msra.mxu0 %v1276
    %1520 = vmatprep.subr.bf16.mxu0 %v1279
    %1521 = vmatpush1.bf16.msra.mxu0 %v1278
    %1522 = vmatprep.subr.bf16.mxu0 %v1281
    %1523 = vmatpush1.bf16.msra.mxu0 %v1280
    %1524 = vmatprep.subr.bf16.mxu0 %v1283
    %1525 = vmatpush1.bf16.msra.mxu0 %v1282
    %1526 = vmatprep.subr.bf16.mxu0 %v1285
    %1527 = vmatpush1.bf16.msra.mxu0 %v1284
    %1528 = vmatprep.subr.bf16.mxu0 %v1287
    %1529 = vmatpush1.bf16.msra.mxu0 %v1286
    %1530 = vmatprep.subr.bf16.mxu0 %v1289
    %1531 = vmatpush1.bf16.msra.mxu0 %v1288
    %1532 = vmatprep.subr.bf16.mxu0 %v1291
    %1533 = vmatpush1.bf16.msra.mxu0 %v1290
    %1534 = vmatprep.subr.bf16.mxu0 %v1293
    %1535 = vmatpush1.bf16.msra.mxu0 %v1292
    %1536 = vmatprep.subr.bf16.mxu0 %v1295
    %1537 = vmatpush1.bf16.msra.mxu0 %v1294
    %1538 = vmatprep.subr.bf16.mxu0 %v1297
    %1539 = vmatpush1.bf16.msra.mxu0 %v1296
    %1540 = vmatprep.subr.bf16.mxu0 %v1299
    %1541 = vmatpush1.bf16.msra.mxu0 %v1298
    %1542 = vmatprep.subr.bf16.mxu0 %v1301
    %1543 = vmatpush1.bf16.msra.mxu0 %v1300
    %1544 = vmatprep.subr.bf16.mxu0 %v1303
    %1545 = vmatpush1.bf16.msra.mxu0 %v1302
    %1546 = vmatprep.subr.bf16.mxu0 %v1305
    %1547 = vmatpush1.bf16.msra.mxu0 %v1304
    %1548 = vmatprep.subr.bf16.mxu0 %v1307
    %1549 = vmatpush1.bf16.msra.mxu0 %v1306
    %1550 = vmatprep.mubr.bf16.mxu0 %v790
    %1551 = vmatmul.mubr.bf16.gmra.mrb[0].mxu0 %v789
    %v1552 = vpop.f32.mrb[0].mxu0
    %v1553 = vadd.f32 %v1510, %v1552
    %v1554 = vpop.f32.mrb[0].mxu0
    %v1555 = vadd.f32 %v1512, %v1554
    %v1556 = vpop.f32.mrb[0].mxu0
    %v1557 = vadd.f32 %v1514, %v1556
    %v1558 = vpop.f32.mrb[0].mxu0
    %v1559 = vadd.f32 %v1516, %v1558
    %1560 = vdwg.mxu0
    %1561 = vmatprep.subr.bf16.mxu0 %v1309
    %1562 = vmatpush1.bf16.msra.mxu0 %v1308
    %1563 = vmatprep.subr.bf16.mxu0 %v1311
    %1564 = vmatpush1.bf16.msra.mxu0 %v1310
    %1565 = vmatprep.subr.bf16.mxu0 %v1313
    %1566 = vmatpush1.bf16.msra.mxu0 %v1312
    %1567 = vmatprep.subr.bf16.mxu0 %v1315
    %1568 = vmatpush1.bf16.msra.mxu0 %v1314
    %1569 = vmatprep.subr.bf16.mxu0 %v1430
    %1570 = vmatpush1.bf16.msra.mxu0 %v1427
    %1571 = vmatprep.subr.bf16.mxu0 0
    %1572 = vmatpush1.bf16.msra.mxu0 0
    %1573 = vmatprep.subr.bf16.mxu0 0
    %1574 = vmatpush1.bf16.msra.mxu0 0
    %1575 = vmatprep.subr.bf16.mxu0 0
    %1576 = vmatpush1.bf16.msra.mxu0 0
    %1577 = vmatprep.subr.bf16.mxu0 0
    %1578 = vmatpush1.bf16.msra.mxu0 0
    %1579 = vmatprep.subr.bf16.mxu0 0
    %1580 = vmatpush1.bf16.msra.mxu0 0
    %1581 = vmatprep.subr.bf16.mxu0 0
    %1582 = vmatpush1.bf16.msra.mxu0 0
    %1583 = vmatprep.subr.bf16.mxu0 0
    %1584 = vmatpush1.bf16.msra.mxu0 0
    %1585 = vmatprep.subr.bf16.mxu0 0
    %1586 = vmatpush1.bf16.msra.mxu0 0
    %1587 = vmatprep.subr.bf16.mxu0 0
    %1588 = vmatpush1.bf16.msra.mxu0 0
    %1589 = vmatprep.subr.bf16.mxu0 0
    %1590 = vmatpush1.bf16.msra.mxu0 0
    %1591 = vmatprep.subr.bf16.mxu0 0
    %1592 = vmatpush1.bf16.msra.mxu0 0
    %1593 = vmatprep.mubr.bf16.mxu0 0
    %1594 = vmatmul.mubr.bf16.gmra.mrb[0].mxu0 %v1424
    %v1595 = vpop.f32.mrb[0].mxu0
    %v1596 = vadd.f32 %v1553, %v1595
    %v1597 = vpop.f32.mrb[0].mxu0
    %v1598 = vadd.f32 %v1555, %v1597
    %v1599 = vpop.f32.mrb[0].mxu0
    %v1600 = vadd.f32 %v1557, %v1599
    %v1601 = vpop.f32.mrb[0].mxu0
    %v1602 = vadd.f32 %v1559, %v1601
    %1603 = vdwg.mxu0
    %v1606 = vrot.slane %v1596, 1
    %v1607 = vrot.slane %v1598, 1
    %v1610 = vmax.f32 %v1596, %v1606
    %v1611 = vmax.f32 %v1598, %v1607
    %v1614 = vrot.slane %v1600, 1
    %v1615 = vrot.slane %v1602, 1
    %v1618 = vmax.f32 %v1600, %v1614
    %v1619 = vmax.f32 %v1602, %v1615
    %v1622 = vrot.slane %v1610, 2
    %v1623 = vrot.slane %v1611, 2
    %1624 = vrot.lane.b32.xlu0 %v1622, 32
    %v1625 = vpop.permute.xlu0 %1624
    %1626 = vrot.lane.b32.xlu0 %v1623, 32
    %v1627 = vpop.permute.xlu0 %1626
    %v1628 = vsel %vm770, %v1625, %v1627
    %v1631 = vrot.slane %v1610, 4
    %v1632 = vrot.slane %v1611, 4
    %1633 = vrot.lane.b32.xlu0 %v1631, 64
    %v1634 = vpop.permute.xlu0 %1633
    %1635 = vrot.lane.b32.xlu0 %v1632, 64
    %v1636 = vpop.permute.xlu0 %1635
    %vm1637 = vcmask 523264
    %v1638 = vsel %vm1637, %v1634, %v1636
    %v1641 = vrot.slane %v1610, 6
    %v1642 = vrot.slane %v1611, 6
    %1643 = vrot.lane.b32.xlu0 %v1641, 96
    %v1644 = vpop.permute.xlu0 %1643
    %1645 = vrot.lane.b32.xlu0 %v1642, 96
    %v1646 = vpop.permute.xlu0 %1645
    %v1647 = vsel %vm436, %v1644, %v1646
    %v1650 = vsel %vm770, %v1611, %v1625
    %v1651 = vsel %vm1637, %v1628, %v1634
    %v1652 = vsel %vm436, %v1638, %v1644
    %1658 = vrot.lane.b32.xlu0 %v1610, 112
    %v1659 = vpop.permute.xlu0 %1658
    %1660 = vrot.lane.b32.xlu0 %v1650, 112
    %v1661 = vpop.permute.xlu0 %1660
    %1662 = vrot.lane.b32.xlu0 %v1651, 112
    %v1663 = vpop.permute.xlu0 %1662
    %1664 = vrot.lane.b32.xlu0 %v1652, 112
    %v1665 = vpop.permute.xlu0 %1664
    %1666 = vrot.lane.b32.xlu0 %v1647, 112
    %v1667 = vpop.permute.xlu0 %1666
    %1668 = vrot.lane.b32.xlu0 %v1618, 112
    %v1669 = vpop.permute.xlu0 %1668
    %1670 = vrot.lane.b32.xlu0 %v1619, 112
    %v1671 = vpop.permute.xlu0 %1670
    %vm1672 = vcmask 916480
    %v1673 = vsel %vm1672, %v1659, %v1661
    %v1674 = vsel %vm1672, %v1661, %v1663
    %v1675 = vsel %vm1672, %v1663, %v1665
    %v1676 = vsel %vm1672, %v1665, %v1667
    %v1677 = vsel %vm1672, %v1667, %v1669
    %v1678 = vsel %vm1672, %v1669, %v1671
    %1686 = vrot.lane.b32.xlu0 %v1610, 16
    %v1687 = vpop.permute.xlu0 %1686
    %vm1689 = vcmask 130048
    %v1690 = vsel %vm1689, %v1671, %v1687
    %v1691 = vmax.f32 %v1610, %v1673
    %v1692 = vmax.f32 %v1650, %v1674
    %v1693 = vmax.f32 %v1651, %v1675
    %v1694 = vmax.f32 %v1652, %v1676
    %v1695 = vmax.f32 %v1647, %v1677
    %v1696 = vmax.f32 %v1618, %v1678
    %v1697 = vmax.f32 %v1619, %v1690
    %v1699 = vlaneseq
    %v1700 = vshrl.u32 %v1699, 7
    %v1701 = vsub.s32 0, %v1700
    %v1702 = vrot.slane %v52, %v1701
    %v1703 = vlaneseq
    %v1704 = vshrl.u32 %v1703, 7
    %v1705 = vsub.s32 1, %v1704
    %v1706 = vrot.slane %v52, %v1705
    %v1707 = vlaneseq
    %v1708 = vshrl.u32 %v1707, 7
    %v1709 = vsub.s32 2, %v1708
    %v1710 = vrot.slane %v52, %v1709
    %v1711 = vlaneseq
    %v1712 = vshrl.u32 %v1711, 7
    %v1713 = vsub.s32 3, %v1712
    %v1714 = vrot.slane %v52, %v1713
    %v1715 = vlaneseq
    %v1716 = vshrl.u32 %v1715, 7
    %v1717 = vsub.s32 4, %v1716
    %v1718 = vrot.slane %v52, %v1717
    %v1719 = vlaneseq
    %v1720 = vshrl.u32 %v1719, 7
    %v1721 = vsub.s32 5, %v1720
    %v1722 = vrot.slane %v52, %v1721
    %v1723 = vlaneseq
    %v1724 = vshrl.u32 %v1723, 7
    %v1725 = vsub.s32 6, %v1724
    %v1726 = vrot.slane %v52, %v1725
    %v1734 = vadd.f32 %v1691, %v1702
    %v1735 = vadd.f32 %v1692, %v1706
    %v1736 = vadd.f32 %v1693, %v1710
    %v1737 = vadd.f32 %v1694, %v1714
    %v1738 = vadd.f32 %v1695, %v1718
    %v1739 = vadd.f32 %v1696, %v1722
    %v1740 = vadd.f32 %v1697, %v1726
    %v1741 = vmax.f32 %v1734, 0.0
    %v1742 = vmax.f32 %v1735, 0.0
    %v1743 = vmax.f32 %v1736, 0.0
    %v1744 = vmax.f32 %v1737, 0.0
    %v1745 = vmax.f32 %v1738, 0.0
    %v1746 = vmax.f32 %v1739, 0.0
    %v1747 = vmax.f32 %v1740, 0.0
    %v1755 = vcombine.low %v1741, %v1742
    %v1756 = vcombine.low %v1743, %v1744
    %v1757 = vcombine.low %v1745, %v1746
    %v1759 = vunpack.c.l.s4 1966171168
    %v1760 = vunpack.c.0.s8 %v1759
    %v1761 = vlaneseq
    %v1762 = vshrl.u32 %v1761, 7
    %v1763 = vsub.s32 %v1760, %v1762
    %v1764 = vrot.slane %v1755, %v1763
    %v1766 = vunpack.c.l.s4 1966171168
    %v1767 = vunpack.c.0.s8 %v1766
    %v1768 = vlaneseq
    %v1769 = vshrl.u32 %v1768, 7
    %v1770 = vsub.s32 %v1767, %v1769
    %v1771 = vrot.slane %v1756, %v1770
    %v1773 = vunpack.c.l.s4 1966171168
    %v1774 = vunpack.c.0.s8 %v1773
    %v1775 = vlaneseq
    %v1776 = vshrl.u32 %v1775, 7
    %v1777 = vsub.s32 %v1774, %v1776
    %v1778 = vrot.slane %v1757, %v1777
    %v1780 = vunpack.c.l.s4 1966171168
    %v1781 = vunpack.c.0.s8 %v1780
    %v1782 = vlaneseq
    %v1783 = vshrl.u32 %v1782, 7
    %v1784 = vsub.s32 %v1781, %v1783
    %v1785 = vrot.slane %v1747, %v1784
    %v1786 = vcombine.low %v1764, %v1771
    %v1787 = vcombine.low %v1778, %v1785
    %v1789 = vunpack.c.l.s4 1966171168
    %v1790 = vunpack.c.0.s8 %v1789
    %v1791 = vlaneseq
    %v1792 = vshrl.u32 %v1791, 7
    %v1793 = vsub.s32 %v1790, %v1792
    %v1794 = vrot.slane %v1786, %v1793
    %v1796 = vunpack.c.l.s4 1966171168
    %v1797 = vunpack.c.0.s8 %v1796
    %v1798 = vlaneseq
    %v1799 = vshrl.u32 %v1798, 7
    %v1800 = vsub.s32 %v1797, %v1799
    %v1801 = vrot.slane %v1787, %v1800
    %v1802 = vcombine.low %v1794, %v1801
    %v1804 = vlaneseq
    %vm1805 = vcmp.ge.s32.totalorder %v1804, 0
    %vm1806 = vcmp.lt.s32.totalorder %v1804, 800
    %vm1807 = vmand %vm1805, %vm1806
    %1808 = vst.msk [vmem:[#allocation2] ss:$2 sm:$0x7f] %vm1807, %v1802
    %s1809 = scalar_lea.vmem %s0, 64
    %v1810 = vld [vmem:[%s1809] sm:$0xff]
    %v1811 = vld [vmem:[%s1809 + $0x8] sm:$0xff]
    %v1812 = vld [vmem:[%s1809 + $0x10] sm:$0x77]
    %v1813 = vld [vmem:[%s1809 + $0x18] sm:$0x77]
    %v1814 = vld [vmem:[%s1] sm:$0xff]
    %v1815 = vld [vmem:[%s1 + $0x8] sm:$0xff]
    %v1816 = vld [vmem:[%s1 + $0x10] sm:$0xff]
    %v1817 = vld [vmem:[%s1 + $0x18] sm:$0xff]
    %v1818 = vld [vmem:[%s1 + $0x20] sm:$0xff]
    %v1819 = vld [vmem:[%s1 + $0x28] sm:$0xff]
    %v1820 = vld [vmem:[%s1 + $0x30] sm:$0xff]
    %v1821 = vld [vmem:[%s1 + $0x38] sm:$0xff]
    %v1822 = vld [vmem:[%s1 + $0x40] sm:$0xff]
    %v1823 = vld [vmem:[%s1 + $0x48] sm:$0xff]
    %v1824 = vld [vmem:[%s1 + $0x50] sm:$0xff]
    %v1825 = vld [vmem:[%s1 + $0x58] sm:$0xff]
    %v1826 = vld [vmem:[%s1 + $0x60] sm:$0xff]
    %v1827 = vld [vmem:[%s1 + $0x68] sm:$0xff]
    %v1828 = vld [vmem:[%s1 + $0x70] sm:$0xff]
    %v1829 = vld [vmem:[%s1 + $0x78] sm:$0xff]
    %v1830 = vld [vmem:[%s1 + $0x80] sm:$0xff]
    %v1831 = vld [vmem:[%s1 + $0x88] sm:$0xff]
    %v1832 = vld [vmem:[%s1 + $0x90] sm:$0xff]
    %v1833 = vld [vmem:[%s1 + $0x98] sm:$0xff]
    %v1834 = vld [vmem:[%s1 + $0xa0] sm:$0xff]
    %v1835 = vld [vmem:[%s1 + $0xa8] sm:$0xff]
    %v1836 = vld [vmem:[%s1 + $0xb0] sm:$0xff]
    %v1837 = vld [vmem:[%s1 + $0xb8] sm:$0xff]
    %v1838 = vld [vmem:[%s1 + $0xc0] sm:$0xff]
    %v1839 = vld [vmem:[%s1 + $0xc8] sm:$0xff]
    %v1840 = vld [vmem:[%s1 + $0xd0] sm:$0xff]
    %v1841 = vld [vmem:[%s1 + $0xd8] sm:$0xff]
    %v1842 = vld [vmem:[%s1 + $0xe0] sm:$0xff]
    %v1843 = vld [vmem:[%s1 + $0xe8] sm:$0xff]
    %v1844 = vld [vmem:[%s1 + $0xf0] sm:$0xff]
    %v1845 = vld [vmem:[%s1 + $0xf8] sm:$0xff]
    %v1846 = vld [vmem:[%s1 + $0x100] sm:$0xff]
    %v1847 = vld [vmem:[%s1 + $0x108] sm:$0xff]
    %v1848 = vld [vmem:[%s1 + $0x110] sm:$0xff]
    %v1849 = vld [vmem:[%s1 + $0x118] sm:$0xff]
    %v1850 = vld [vmem:[%s1 + $0x120] sm:$0xff]
    %v1851 = vld [vmem:[%s1 + $0x128] sm:$0xff]
    %v1852 = vld [vmem:[%s1 + $0x130] sm:$0xff]
    %v1853 = vld [vmem:[%s1 + $0x138] sm:$0xff]
    %v1854 = vld [vmem:[%s1 + $0x140] sm:$0xff]
    %v1855 = vld [vmem:[%s1 + $0x148] sm:$0xff]
    %v1856 = vld [vmem:[%s1 + $0x150] sm:$0xff]
    %v1857 = vld [vmem:[%s1 + $0x158] sm:$0xff]
    %v1858 = vld [vmem:[%s1 + $0x160] sm:$0xff]
    %v1859 = vld [vmem:[%s1 + $0x168] sm:$0xff]
    %v1860 = vld [vmem:[%s1 + $0x170] sm:$0xff]
    %v1861 = vld [vmem:[%s1 + $0x178] sm:$0xff]
    %v1862 = vld [vmem:[%s1 + $0x180] sm:$0xff]
    %v1863 = vld [vmem:[%s1 + $0x188] sm:$0xff]
    %v1864 = vld [vmem:[%s1 + $0x190] sm:$0xff]
    %v1865 = vld [vmem:[%s1 + $0x198] sm:$0xff]
    %v1866 = vld [vmem:[%s1 + $0x1a0] sm:$0xff]
    %v1867 = vld [vmem:[%s1 + $0x1a8] sm:$0xff]
    %v1868 = vld [vmem:[%s1 + $0x1b0] sm:$0xff]
    %v1869 = vld [vmem:[%s1 + $0x1b8] sm:$0xff]
    %v1870 = vld [vmem:[%s1 + $0x1c0] sm:$0xff]
    %v1871 = vld [vmem:[%s1 + $0x1c8] sm:$0xff]
    %v1872 = vld [vmem:[%s1 + $0x1d0] sm:$0xff]
    %v1873 = vld [vmem:[%s1 + $0x1d8] sm:$0xff]
    %v1878 = vunpack.c.l.b16 %v1810
    %v1879 = vunpack.c.h.b16 %v1810
    %v1880 = vunpack.c.l.b16 %v1811
    %v1881 = vunpack.c.h.b16 %v1811
    %v1882 = vunpack.c.l.b16 %v1812
    %v1883 = vunpack.c.h.b16 %v1812
    %v1884 = vunpack.c.l.b16 %v1813
    %v1885 = vunpack.c.h.b16 %v1813
    %v1886 = vpack.c.b16 %v1882, %v1878
    %v1887 = vpack.c.b16 %v1883, %v1879
    %v1888 = vpack.c.b16 %v1884, %v1880
    %v1889 = vpack.c.b16 %v1885, %v1881
    %v1953 = vunpack.c.l.b16 %v1814
    %v1954 = vunpack.c.h.b16 %v1814
    %v1955 = vunpack.c.l.b16 %v1815
    %v1956 = vunpack.c.h.b16 %v1815
    %v1957 = vunpack.c.l.b16 %v1816
    %v1958 = vunpack.c.h.b16 %v1816
    %v1959 = vunpack.c.l.b16 %v1817
    %v1960 = vunpack.c.h.b16 %v1817
    %v1961 = vunpack.c.l.b16 %v1818
    %v1962 = vunpack.c.h.b16 %v1818
    %v1963 = vunpack.c.l.b16 %v1819
    %v1964 = vunpack.c.h.b16 %v1819
    %v1965 = vunpack.c.l.b16 %v1820
    %v1966 = vunpack.c.h.b16 %v1820
    %v1967 = vunpack.c.l.b16 %v1821
    %v1968 = vunpack.c.h.b16 %v1821
    %v1969 = vunpack.c.l.b16 %v1822
    %v1970 = vunpack.c.h.b16 %v1822
    %v1971 = vunpack.c.l.b16 %v1823
    %v1972 = vunpack.c.h.b16 %v1823
    %v1973 = vunpack.c.l.b16 %v1824
    %v1974 = vunpack.c.h.b16 %v1824
    %v1975 = vunpack.c.l.b16 %v1825
    %v1976 = vunpack.c.h.b16 %v1825
    %v1977 = vunpack.c.l.b16 %v1826
    %v1978 = vunpack.c.h.b16 %v1826
    %v1979 = vunpack.c.l.b16 %v1827
    %v1980 = vunpack.c.h.b16 %v1827
    %v1981 = vunpack.c.l.b16 %v1828
    %v1982 = vunpack.c.h.b16 %v1828
    %v1983 = vunpack.c.l.b16 %v1829
    %v1984 = vunpack.c.h.b16 %v1829
    %v1985 = vunpack.c.l.b16 %v1830
    %v1986 = vunpack.c.h.b16 %v1830
    %v1987 = vunpack.c.l.b16 %v1831
    %v1988 = vunpack.c.h.b16 %v1831
    %v1989 = vunpack.c.l.b16 %v1832
    %v1990 = vunpack.c.h.b16 %v1832
    %v1991 = vunpack.c.l.b16 %v1833
    %v1992 = vunpack.c.h.b16 %v1833
    %v1993 = vunpack.c.l.b16 %v1834
    %v1994 = vunpack.c.h.b16 %v1834
    %v1995 = vunpack.c.l.b16 %v1835
    %v1996 = vunpack.c.h.b16 %v1835
    %v1997 = vunpack.c.l.b16 %v1836
    %v1998 = vunpack.c.h.b16 %v1836
    %v1999 = vunpack.c.l.b16 %v1837
    %v2000 = vunpack.c.h.b16 %v1837
    %v2001 = vunpack.c.l.b16 %v1838
    %v2002 = vunpack.c.h.b16 %v1838
    %v2003 = vunpack.c.l.b16 %v1839
    %v2004 = vunpack.c.h.b16 %v1839
    %v2005 = vunpack.c.l.b16 %v1840
    %v2006 = vunpack.c.h.b16 %v1840
    %v2007 = vunpack.c.l.b16 %v1841
    %v2008 = vunpack.c.h.b16 %v1841
    %v2009 = vunpack.c.l.b16 %v1842
    %v2010 = vunpack.c.h.b16 %v1842
    %v2011 = vunpack.c.l.b16 %v1843
    %v2012 = vunpack.c.h.b16 %v1843
    %v2013 = vunpack.c.l.b16 %v1844
    %v2014 = vunpack.c.h.b16 %v1844
    %v2015 = vunpack.c.l.b16 %v1845
    %v2016 = vunpack.c.h.b16 %v1845
    %v2017 = vunpack.c.l.b16 %v1846
    %v2018 = vunpack.c.h.b16 %v1846
    %v2019 = vunpack.c.l.b16 %v1847
    %v2020 = vunpack.c.h.b16 %v1847
    %v2021 = vunpack.c.l.b16 %v1848
    %v2022 = vunpack.c.h.b16 %v1848
    %v2023 = vunpack.c.l.b16 %v1849
    %v2024 = vunpack.c.h.b16 %v1849
    %v2025 = vunpack.c.l.b16 %v1850
    %v2026 = vunpack.c.h.b16 %v1850
    %v2027 = vunpack.c.l.b16 %v1851
    %v2028 = vunpack.c.h.b16 %v1851
    %v2029 = vunpack.c.l.b16 %v1852
    %v2030 = vunpack.c.h.b16 %v1852
    %v2031 = vunpack.c.l.b16 %v1853
    %v2032 = vunpack.c.h.b16 %v1853
    %v2033 = vunpack.c.l.b16 %v1854
    %v2034 = vunpack.c.h.b16 %v1854
    %v2035 = vunpack.c.l.b16 %v1855
    %v2036 = vunpack.c.h.b16 %v1855
    %v2037 = vunpack.c.l.b16 %v1856
    %v2038 = vunpack.c.h.b16 %v1856
    %v2039 = vunpack.c.l.b16 %v1857
    %v2040 = vunpack.c.h.b16 %v1857
    %v2041 = vunpack.c.l.b16 %v1858
    %v2042 = vunpack.c.h.b16 %v1858
    %v2043 = vunpack.c.l.b16 %v1859
    %v2044 = vunpack.c.h.b16 %v1859
    %v2045 = vunpack.c.l.b16 %v1860
    %v2046 = vunpack.c.h.b16 %v1860
    %v2047 = vunpack.c.l.b16 %v1861
    %v2048 = vunpack.c.h.b16 %v1861
    %v2049 = vunpack.c.l.b16 %v1862
    %v2050 = vunpack.c.h.b16 %v1862
    %v2051 = vunpack.c.l.b16 %v1863
    %v2052 = vunpack.c.h.b16 %v1863
    %v2053 = vunpack.c.l.b16 %v1864
    %v2054 = vunpack.c.h.b16 %v1864
    %v2055 = vunpack.c.l.b16 %v1865
    %v2056 = vunpack.c.h.b16 %v1865
    %v2057 = vunpack.c.l.b16 %v1866
    %v2058 = vunpack.c.h.b16 %v1866
    %v2059 = vunpack.c.l.b16 %v1867
    %v2060 = vunpack.c.h.b16 %v1867
    %v2061 = vunpack.c.l.b16 %v1868
    %v2062 = vunpack.c.h.b16 %v1868
    %v2063 = vunpack.c.l.b16 %v1869
    %v2064 = vunpack.c.h.b16 %v1869
    %v2065 = vunpack.c.l.b16 %v1870
    %v2066 = vunpack.c.h.b16 %v1870
    %v2067 = vunpack.c.l.b16 %v1871
    %v2068 = vunpack.c.h.b16 %v1871
    %v2069 = vunpack.c.l.b16 %v1872
    %v2070 = vunpack.c.h.b16 %v1872
    %v2071 = vunpack.c.l.b16 %v1873
    %v2072 = vunpack.c.h.b16 %v1873
    %v2073 = vpack.c.b16 %v1955, %v1953
    %v2074 = vpack.c.b16 %v1956, %v1954
    %v2075 = vpack.c.b16 %v1959, %v1957
    %v2076 = vpack.c.b16 %v1960, %v1958
    %v2077 = vpack.c.b16 %v1963, %v1961
    %v2078 = vpack.c.b16 %v1964, %v1962
    %v2079 = vpack.c.b16 %v1967, %v1965
    %v2080 = vpack.c.b16 %v1968, %v1966
    %v2081 = vpack.c.b16 %v1971, %v1969
    %v2082 = vpack.c.b16 %v1972, %v1970
    %v2083 = vpack.c.b16 %v1975, %v1973
    %v2084 = vpack.c.b16 %v1976, %v1974
    %v2085 = vpack.c.b16 %v1979, %v1977
    %v2086 = vpack.c.b16 %v1980, %v1978
    %v2087 = vpack.c.b16 %v1983, %v1981
    %v2088 = vpack.c.b16 %v1984, %v1982
    %v2089 = vpack.c.b16 %v1987, %v1985
    %v2090 = vpack.c.b16 %v1988, %v1986
    %v2091 = vpack.c.b16 %v1991, %v1989
    %v2092 = vpack.c.b16 %v1992, %v1990
    %v2093 = vpack.c.b16 %v1995, %v1993
    %v2094 = vpack.c.b16 %v1996, %v1994
    %v2095 = vpack.c.b16 %v1999, %v1997
    %v2096 = vpack.c.b16 %v2000, %v1998
    %v2097 = vpack.c.b16 %v2003, %v2001
    %v2098 = vpack.c.b16 %v2004, %v2002
    %v2099 = vpack.c.b16 %v2007, %v2005
    %v2100 = vpack.c.b16 %v2008, %v2006
    %v2101 = vpack.c.b16 %v2011, %v2009
    %v2102 = vpack.c.b16 %v2012, %v2010
    %v2103 = vpack.c.b16 %v2015, %v2013
    %v2104 = vpack.c.b16 %v2016, %v2014
    %v2105 = vpack.c.b16 %v2019, %v2017
    %v2106 = vpack.c.b16 %v2020, %v2018
    %v2107 = vpack.c.b16 %v2023, %v2021
    %v2108 = vpack.c.b16 %v2024, %v2022
    %v2109 = vpack.c.b16 %v2027, %v2025
    %v2110 = vpack.c.b16 %v2028, %v2026
    %v2111 = vpack.c.b16 %v2031, %v2029
    %v2112 = vpack.c.b16 %v2032, %v2030
    %v2113 = vpack.c.b16 %v2035, %v2033
    %v2114 = vpack.c.b16 %v2036, %v2034
    %v2115 = vpack.c.b16 %v2039, %v2037
    %v2116 = vpack.c.b16 %v2040, %v2038
    %v2117 = vpack.c.b16 %v2043, %v2041
    %v2118 = vpack.c.b16 %v2044, %v2042
    %v2119 = vpack.c.b16 %v2047, %v2045
    %v2120 = vpack.c.b16 %v2048, %v2046
    %v2121 = vpack.c.b16 %v2051, %v2049
    %v2122 = vpack.c.b16 %v2052, %v2050
    %v2123 = vpack.c.b16 %v2055, %v2053
    %v2124 = vpack.c.b16 %v2056, %v2054
    %v2125 = vpack.c.b16 %v2059, %v2057
    %v2126 = vpack.c.b16 %v2060, %v2058
    %v2127 = vpack.c.b16 %v2063, %v2061
    %v2128 = vpack.c.b16 %v2064, %v2062
    %v2129 = vpack.c.b16 %v2067, %v2065
    %v2130 = vpack.c.b16 %v2068, %v2066
    %v2131 = vpack.c.b16 %v2071, %v2069
    %v2132 = vpack.c.b16 %v2072, %v2070
    %v2194 = vsel %vm436, %v1889, 0
    %2196 = vmatprep.subr.bf16.mxu0 %v2074
    %2197 = vmatpush1.bf16.msra.mxu0 %v2073
    %2198 = vmatprep.subr.bf16.mxu0 %v2076
    %2199 = vmatpush1.bf16.msra.mxu0 %v2075
    %2200 = vmatprep.subr.bf16.mxu0 %v2078
    %2201 = vmatpush1.bf16.msra.mxu0 %v2077
    %2202 = vmatprep.subr.bf16.mxu0 %v2080
    %2203 = vmatpush1.bf16.msra.mxu0 %v2079
    %2204 = vmatprep.subr.bf16.mxu0 %v2082
    %2205 = vmatpush1.bf16.msra.mxu0 %v2081
    %2206 = vmatprep.subr.bf16.mxu0 %v2084
    %2207 = vmatpush1.bf16.msra.mxu0 %v2083
    %2208 = vmatprep.subr.bf16.mxu0 %v2086
    %2209 = vmatpush1.bf16.msra.mxu0 %v2085
    %2210 = vmatprep.subr.bf16.mxu0 %v2088
    %2211 = vmatpush1.bf16.msra.mxu0 %v2087
    %2212 = vmatprep.subr.bf16.mxu0 %v2090
    %2213 = vmatpush1.bf16.msra.mxu0 %v2089
    %2214 = vmatprep.subr.bf16.mxu0 %v2092
    %2215 = vmatpush1.bf16.msra.mxu0 %v2091
    %2216 = vmatprep.subr.bf16.mxu0 %v2094
    %2217 = vmatpush1.bf16.msra.mxu0 %v2093
    %2218 = vmatprep.subr.bf16.mxu0 %v2096
    %2219 = vmatpush1.bf16.msra.mxu0 %v2095
    %2220 = vmatprep.subr.bf16.mxu0 %v2098
    %2221 = vmatpush1.bf16.msra.mxu0 %v2097
    %2222 = vmatprep.subr.bf16.mxu0 %v2100
    %2223 = vmatpush1.bf16.msra.mxu0 %v2099
    %2224 = vmatprep.subr.bf16.mxu0 %v2102
    %2225 = vmatpush1.bf16.msra.mxu0 %v2101
    %2226 = vmatprep.subr.bf16.mxu0 %v2104
    %2227 = vmatpush1.bf16.msra.mxu0 %v2103
    %2228 = vmatprep.mubr.bf16.mxu0 %v1887
    %2229 = vmatmul.mubr.bf16.gmra.mrb[0].mxu0 %v1886
    %v2230 = vpop.f32.mrb[0].mxu0
    %v2231 = vadd.f32 0.0, %v2230
    %v2232 = vpop.f32.mrb[0].mxu0
    %v2233 = vadd.f32 0.0, %v2232
    %v2234 = vpop.f32.mrb[0].mxu0
    %v2235 = vadd.f32 0.0, %v2234
    %v2236 = vpop.f32.mrb[0].mxu0
    %v2237 = vadd.f32 0.0, %v2236
    %2238 = vdwg.mxu0
    %2239 = vmatprep.subr.bf16.mxu0 %v2106
    %2240 = vmatpush1.bf16.msra.mxu0 %v2105
    %2241 = vmatprep.subr.bf16.mxu0 %v2108
    %2242 = vmatpush1.bf16.msra.mxu0 %v2107
    %2243 = vmatprep.subr.bf16.mxu0 %v2110
    %2244 = vmatpush1.bf16.msra.mxu0 %v2109
    %2245 = vmatprep.subr.bf16.mxu0 %v2112
    %2246 = vmatpush1.bf16.msra.mxu0 %v2111
    %2247 = vmatprep.subr.bf16.mxu0 %v2114
    %2248 = vmatpush1.bf16.msra.mxu0 %v2113
    %2249 = vmatprep.subr.bf16.mxu0 %v2116
    %2250 = vmatpush1.bf16.msra.mxu0 %v2115
    %2251 = vmatprep.subr.bf16.mxu0 %v2118
    %2252 = vmatpush1.bf16.msra.mxu0 %v2117
    %2253 = vmatprep.subr.bf16.mxu0 %v2120
    %2254 = vmatpush1.bf16.msra.mxu0 %v2119
    %2255 = vmatprep.subr.bf16.mxu0 %v2122
    %2256 = vmatpush1.bf16.msra.mxu0 %v2121
    %2257 = vmatprep.subr.bf16.mxu0 %v2124
    %2258 = vmatpush1.bf16.msra.mxu0 %v2123
    %2259 = vmatprep.subr.bf16.mxu0 %v2126
    %2260 = vmatpush1.bf16.msra.mxu0 %v2125
    %2261 = vmatprep.subr.bf16.mxu0 %v2128
    %2262 = vmatpush1.bf16.msra.mxu0 %v2127
    %2263 = vmatprep.subr.bf16.mxu0 %v2130
    %2264 = vmatpush1.bf16.msra.mxu0 %v2129
    %2265 = vmatprep.subr.bf16.mxu0 %v2132
    %2266 = vmatpush1.bf16.msra.mxu0 %v2131
    %2267 = vmatprep.subr.bf16.mxu0 0
    %2268 = vmatpush1.bf16.msra.mxu0 0
    %2269 = vmatprep.subr.bf16.mxu0 0
    %2270 = vmatpush1.bf16.msra.mxu0 0
    %2271 = vmatprep.mubr.bf16.mxu0 %v2194
    %2272 = vmatmul.mubr.bf16.gmra.mrb[0].mxu0 %v1888
    %v2273 = vpop.f32.mrb[0].mxu0
    %v2274 = vadd.f32 %v2231, %v2273
    %v2275 = vpop.f32.mrb[0].mxu0
    %v2276 = vadd.f32 %v2233, %v2275
    %v2277 = vpop.f32.mrb[0].mxu0
    %v2278 = vadd.f32 %v2235, %v2277
    %v2279 = vpop.f32.mrb[0].mxu0
    %v2280 = vadd.f32 %v2237, %v2279
    %2281 = vdwg.mxu0
    %s2282 = scalar_lea.vmem %s0, 96
    %v2283 = vld [vmem:[%s2282] sm:$0xff]
    %v2284 = vld [vmem:[%s2282 + $0x8] sm:$0xff]
    %v2285 = vld [vmem:[%s2282 + $0x10] sm:$0x77]
    %v2286 = vld [vmem:[%s2282 + $0x18] sm:$0x77]
    %v2291 = vunpack.c.l.b16 %v2283
    %v2292 = vunpack.c.h.b16 %v2283
    %v2293 = vunpack.c.l.b16 %v2284
    %v2294 = vunpack.c.h.b16 %v2284
    %v2295 = vunpack.c.l.b16 %v2285
    %v2296 = vunpack.c.h.b16 %v2285
    %v2297 = vunpack.c.l.b16 %v2286
    %v2298 = vunpack.c.h.b16 %v2286
    %v2299 = vpack.c.b16 %v2295, %v2291
    %v2300 = vpack.c.b16 %v2296, %v2292
    %v2301 = vpack.c.b16 %v2297, %v2293
    %v2302 = vpack.c.b16 %v2298, %v2294
    %v2307 = vsel %vm436, %v2302, 0
    %2309 = vmatprep.subr.bf16.mxu0 %v2074
    %2310 = vmatpush1.bf16.msra.mxu0 %v2073
    %2311 = vmatprep.subr.bf16.mxu0 %v2076
    %2312 = vmatpush1.bf16.msra.mxu0 %v2075
    %2313 = vmatprep.subr.bf16.mxu0 %v2078
    %2314 = vmatpush1.bf16.msra.mxu0 %v2077
    %2315 = vmatprep.subr.bf16.mxu0 %v2080
    %2316 = vmatpush1.bf16.msra.mxu0 %v2079
    %2317 = vmatprep.subr.bf16.mxu0 %v2082
    %2318 = vmatpush1.bf16.msra.mxu0 %v2081
    %2319 = vmatprep.subr.bf16.mxu0 %v2084
    %2320 = vmatpush1.bf16.msra.mxu0 %v2083
    %2321 = vmatprep.subr.bf16.mxu0 %v2086
    %2322 = vmatpush1.bf16.msra.mxu0 %v2085
    %2323 = vmatprep.subr.bf16.mxu0 %v2088
    %2324 = vmatpush1.bf16.msra.mxu0 %v2087
    %2325 = vmatprep.subr.bf16.mxu0 %v2090
    %2326 = vmatpush1.bf16.msra.mxu0 %v2089
    %2327 = vmatprep.subr.bf16.mxu0 %v2092
    %2328 = vmatpush1.bf16.msra.mxu0 %v2091
    %2329 = vmatprep.subr.bf16.mxu0 %v2094
    %2330 = vmatpush1.bf16.msra.mxu0 %v2093
    %2331 = vmatprep.subr.bf16.mxu0 %v2096
    %2332 = vmatpush1.bf16.msra.mxu0 %v2095
    %2333 = vmatprep.subr.bf16.mxu0 %v2098
    %2334 = vmatpush1.bf16.msra.mxu0 %v2097
    %2335 = vmatprep.subr.bf16.mxu0 %v2100
    %2336 = vmatpush1.bf16.msra.mxu0 %v2099
    %2337 = vmatprep.subr.bf16.mxu0 %v2102
    %2338 = vmatpush1.bf16.msra.mxu0 %v2101
    %2339 = vmatprep.subr.bf16.mxu0 %v2104
    %2340 = vmatpush1.bf16.msra.mxu0 %v2103
    %2341 = vmatprep.mubr.bf16.mxu0 %v2300
    %2342 = vmatmul.mubr.bf16.gmra.mrb[0].mxu0 %v2299
    %v2343 = vpop.f32.mrb[0].mxu0
    %v2344 = vadd.f32 0.0, %v2343
    %v2345 = vpop.f32.mrb[0].mxu0
    %v2346 = vadd.f32 0.0, %v2345
    %v2347 = vpop.f32.mrb[0].mxu0
    %v2348 = vadd.f32 0.0, %v2347
    %v2349 = vpop.f32.mrb[0].mxu0
    %v2350 = vadd.f32 0.0, %v2349
    %2351 = vdwg.mxu0
    %2352 = vmatprep.subr.bf16.mxu0 %v2106
    %2353 = vmatpush1.bf16.msra.mxu0 %v2105
    %2354 = vmatprep.subr.bf16.mxu0 %v2108
    %2355 = vmatpush1.bf16.msra.mxu0 %v2107
    %2356 = vmatprep.subr.bf16.mxu0 %v2110
    %2357 = vmatpush1.bf16.msra.mxu0 %v2109
    %2358 = vmatprep.subr.bf16.mxu0 %v2112
    %2359 = vmatpush1.bf16.msra.mxu0 %v2111
    %2360 = vmatprep.subr.bf16.mxu0 %v2114
    %2361 = vmatpush1.bf16.msra.mxu0 %v2113
    %2362 = vmatprep.subr.bf16.mxu0 %v2116
    %2363 = vmatpush1.bf16.msra.mxu0 %v2115
    %2364 = vmatprep.subr.bf16.mxu0 %v2118
    %2365 = vmatpush1.bf16.msra.mxu0 %v2117
    %2366 = vmatprep.subr.bf16.mxu0 %v2120
    %2367 = vmatpush1.bf16.msra.mxu0 %v2119
    %2368 = vmatprep.subr.bf16.mxu0 %v2122
    %2369 = vmatpush1.bf16.msra.mxu0 %v2121
    %2370 = vmatprep.subr.bf16.mxu0 %v2124
    %2371 = vmatpush1.bf16.msra.mxu0 %v2123
    %2372 = vmatprep.subr.bf16.mxu0 %v2126
    %2373 = vmatpush1.bf16.msra.mxu0 %v2125
    %2374 = vmatprep.subr.bf16.mxu0 %v2128
    %2375 = vmatpush1.bf16.msra.mxu0 %v2127
    %2376 = vmatprep.subr.bf16.mxu0 %v2130
    %2377 = vmatpush1.bf16.msra.mxu0 %v2129
    %2378 = vmatprep.subr.bf16.mxu0 %v2132
    %2379 = vmatpush1.bf16.msra.mxu0 %v2131
    %2380 = vmatprep.subr.bf16.mxu0 0
    %2381 = vmatpush1.bf16.msra.mxu0 0
    %2382 = vmatprep.subr.bf16.mxu0 0
    %2383 = vmatpush1.bf16.msra.mxu0 0
    %2384 = vmatprep.mubr.bf16.mxu0 %v2307
    %2385 = vmatmul.mubr.bf16.gmra.mrb[0].mxu0 %v2301
    %v2386 = vpop.f32.mrb[0].mxu0
    %v2387 = vadd.f32 %v2344, %v2386
    %v2388 = vpop.f32.mrb[0].mxu0
    %v2389 = vadd.f32 %v2346, %v2388
    %v2390 = vpop.f32.mrb[0].mxu0
    %v2391 = vadd.f32 %v2348, %v2390
    %v2392 = vpop.f32.mrb[0].mxu0
    %v2393 = vadd.f32 %v2350, %v2392
    %2394 = vdwg.mxu0
    %v2395 = vmax.f32 %v2274, %v2387
    %v2396 = vmax.f32 %v2276, %v2389
    %v2397 = vmax.f32 %v2278, %v2391
    %v2398 = vmax.f32 %v2280, %v2393
    %2403 = vrot.lane.b32.xlu0 %v2395, 122
    %v2404 = vpop.permute.xlu0 %2403
    %2405 = vrot.lane.b32.xlu0 %v2396, 122
    %v2406 = vpop.permute.xlu0 %2405
    %2407 = vrot.lane.b32.xlu0 %v2397, 122
    %v2408 = vpop.permute.xlu0 %2407
    %2409 = vrot.lane.b32.xlu0 %v2398, 122
    %v2410 = vpop.permute.xlu0 %2409
    %v2411 = vsel %vm655, %v2404, %v2406
    %v2412 = vsel %vm655, %v2408, %v2410
    %2417 = vrot.lane.b32.xlu0 %v2395, 34
    %v2418 = vpop.permute.xlu0 %2417
    %2419 = vrot.lane.b32.xlu0 %v2397, 34
    %v2420 = vpop.permute.xlu0 %2419
    %v2423 = vsel %vm668, %v2406, %v2418
    %v2424 = vsel %vm668, %v2410, %v2420
    %v2425 = vmax.f32 %v2395, %v2411
    %v2426 = vmax.f32 %v2396, %v2423
    %v2427 = vmax.f32 %v2397, %v2412
    %v2428 = vmax.f32 %v2398, %v2424
    %v2429 = vadd.f32 %v2425, %v45
    %v2430 = vadd.f32 %v2426, %v49
    %v2431 = vadd.f32 %v2427, %v45
    %v2432 = vadd.f32 %v2428, %v49
    %v2433 = vmax.f32 %v2429, 0.0
    %v2434 = vmax.f32 %v2430, 0.0
    %v2435 = vmax.f32 %v2431, 0.0
    %v2436 = vmax.f32 %v2432, 0.0
    %v2441 = vrot.slane %v2433, 1
    %v2442 = vrot.slane %v2435, 1
    %v2443 = vsel %vm687, %v2441, %v2442
    %v2444 = vrot.slane %v2434, 1
    %v2445 = vrot.slane %v2436, 1
    %v2446 = vsel %vm687, %v2444, %v2445
    %2447 = vrot.lane.b32.xlu0 %v2443, 40
    %v2448 = vpop.permute.xlu0 %2447
    %2449 = vrot.lane.b32.xlu0 %v2446, 40
    %v2450 = vpop.permute.xlu0 %2449
    %2451 = vrot.lane.b32.xlu0 %v2442, 40
    %v2452 = vpop.permute.xlu0 %2451
    %2453 = vrot.lane.b32.xlu0 %v2445, 40
    %v2454 = vpop.permute.xlu0 %2453
    %v2455 = vsel %vm702, %v2448, %v2450
    %v2456 = vsel %vm702, %v2452, %v2454
    %v2461 = vrot.slane %v2433, 2
    %v2462 = vrot.slane %v2435, 2
    %v2463 = vsel %vm709, %v2461, %v2462
    %v2464 = vrot.slane %v2434, 2
    %v2465 = vrot.slane %v2436, 2
    %v2466 = vsel %vm709, %v2464, %v2465
    %2467 = vrot.lane.b32.xlu0 %v2463, 80
    %v2468 = vpop.permute.xlu0 %2467
    %2469 = vrot.lane.b32.xlu0 %v2466, 80
    %v2470 = vpop.permute.xlu0 %2469
    %2471 = vrot.lane.b32.xlu0 %v2462, 80
    %v2472 = vpop.permute.xlu0 %2471
    %2473 = vrot.lane.b32.xlu0 %v2465, 80
    %v2474 = vpop.permute.xlu0 %2473
    %v2475 = vsel %vm724, %v2468, %v2470
    %v2476 = vsel %vm724, %v2472, %v2474
    %v2481 = vrot.slane %v2433, 3
    %v2482 = vrot.slane %v2435, 3
    %v2483 = vsel %vm731, %v2481, %v2482
    %v2484 = vrot.slane %v2434, 3
    %v2485 = vrot.slane %v2436, 3
    %v2486 = vsel %vm731, %v2484, %v2485
    %2487 = vrot.lane.b32.xlu0 %v2483, 120
    %v2488 = vpop.permute.xlu0 %2487
    %2489 = vrot.lane.b32.xlu0 %v2486, 120
    %v2490 = vpop.permute.xlu0 %2489
    %2491 = vrot.lane.b32.xlu0 %v2482, 120
    %v2492 = vpop.permute.xlu0 %2491
    %2493 = vrot.lane.b32.xlu0 %v2485, 120
    %v2494 = vpop.permute.xlu0 %2493
    %v2495 = vsel %vm746, %v2488, %v2490
    %v2496 = vsel %vm746, %v2492, %v2494
    %v2503 = vrot.slane %v2433, 4
    %v2504 = vrot.slane %v2435, 4
    %v2505 = vsel %vm755, %v2503, %v2504
    %v2506 = vrot.slane %v2434, 4
    %v2507 = vrot.slane %v2436, 4
    %v2508 = vsel %vm755, %v2506, %v2507
    %2509 = vrot.lane.b32.xlu0 %v2505, 32
    %v2510 = vpop.permute.xlu0 %2509
    %2511 = vrot.lane.b32.xlu0 %v2508, 32
    %v2512 = vpop.permute.xlu0 %2511
    %2513 = vrot.lane.b32.xlu0 %v2504, 32
    %v2514 = vpop.permute.xlu0 %2513
    %2515 = vrot.lane.b32.xlu0 %v2507, 32
    %v2516 = vpop.permute.xlu0 %2515
    %v2517 = vsel %vm770, %v2510, %v2512
    %v2518 = vsel %vm770, %v2514, %v2516
    %v2523 = vsel %vm702, %v2434, %v2448
    %v2524 = vsel %vm702, %v2436, %v2452
    %v2525 = vsel %vm724, %v2455, %v2468
    %v2526 = vsel %vm724, %v2456, %v2472
    %v2527 = vsel %vm746, %v2475, %v2488
    %v2528 = vsel %vm746, %v2476, %v2492
    %v2529 = vsel %vm770, %v2490, %v2510
    %v2530 = vsel %vm770, %v2494, %v2514
    %v2531 = vpack.c.bf16 %v2435, %v2433
    %v2532 = vpack.c.bf16 %v2524, %v2523
    %v2533 = vpack.c.bf16 %v2526, %v2525
    %v2534 = vpack.c.bf16 %v2528, %v2527
    %v2535 = vpack.c.bf16 %v2496, %v2495
    %v2536 = vpack.c.bf16 %v2530, %v2529
    %v2537 = vpack.c.bf16 %v2518, %v2517
    %v2538 = vld [vmem:[%s3] sm:$0xff]
    %v2539 = vld [vmem:[%s3 + $0x8] sm:$0xff]
    %v2540 = vld [vmem:[%s3 + $0x10] sm:$0xff]
    %v2541 = vld [vmem:[%s3 + $0x18] sm:$0xff]
    %v2542 = vld [vmem:[%s3 + $0x20] sm:$0xff]
    %v2543 = vld [vmem:[%s3 + $0x28] sm:$0xff]
    %v2544 = vld [vmem:[%s3 + $0x30] sm:$0xff]
    %v2545 = vld [vmem:[%s3 + $0x38] sm:$0xff]
    %v2546 = vld [vmem:[%s3 + $0x40] sm:$0xff]
    %v2547 = vld [vmem:[%s3 + $0x48] sm:$0xff]
    %v2548 = vld [vmem:[%s3 + $0x50] sm:$0xff]
    %v2549 = vld [vmem:[%s3 + $0x58] sm:$0xff]
    %v2550 = vld [vmem:[%s3 + $0x60] sm:$0xff]
    %v2551 = vld [vmem:[%s3 + $0x68] sm:$0xff]
    %v2552 = vld [vmem:[%s3 + $0x70] sm:$0xff]
    %v2553 = vld [vmem:[%s3 + $0x78] sm:$0xff]
    %v2554 = vld [vmem:[%s3 + $0x80] sm:$0xff]
    %v2555 = vld [vmem:[%s3 + $0x88] sm:$0xff]
    %v2556 = vld [vmem:[%s3 + $0x90] sm:$0xff]
    %v2557 = vld [vmem:[%s3 + $0x98] sm:$0xff]
    %v2558 = vld [vmem:[%s3 + $0xa0] sm:$0xff]
    %v2559 = vld [vmem:[%s3 + $0xa8] sm:$0xff]
    %v2560 = vld [vmem:[%s3 + $0xb0] sm:$0xff]
    %v2561 = vld [vmem:[%s3 + $0xb8] sm:$0xff]
    %v2562 = vld [vmem:[%s3 + $0xc0] sm:$0xff]
    %v2563 = vld [vmem:[%s3 + $0xc8] sm:$0xff]
    %v2564 = vld [vmem:[%s3 + $0xd0] sm:$0xff]
    %v2565 = vld [vmem:[%s3 + $0xd8] sm:$0xff]
    %v2566 = vld [vmem:[%s3 + $0xe0] sm:$0xff]
    %v2567 = vld [vmem:[%s3 + $0xe8] sm:$0xff]
    %v2568 = vld [vmem:[%s3 + $0xf0] sm:$0xff]
    %v2569 = vld [vmem:[%s3 + $0xf8] sm:$0xff]
    %v2570 = vld [vmem:[%s3 + $0x100] sm:$0xff]
    %v2571 = vld [vmem:[%s3 + $0x108] sm:$0xff]
    %v2572 = vld [vmem:[%s3 + $0x110] sm:$0xff]
    %v2573 = vld [vmem:[%s3 + $0x118] sm:$0xff]
    %v2574 = vld [vmem:[%s3 + $0x120] sm:$0xff]
    %v2575 = vld [vmem:[%s3 + $0x128] sm:$0xff]
    %v2576 = vld [vmem:[%s3 + $0x130] sm:$0xff]
    %v2577 = vld [vmem:[%s3 + $0x138] sm:$0xff]
    %v2578 = vld [vmem:[%s3 + $0x140] sm:$0xff]
    %v2579 = vld [vmem:[%s3 + $0x148] sm:$0xff]
    %v2580 = vld [vmem:[%s3 + $0x150] sm:$0xff]
    %v2581 = vld [vmem:[%s3 + $0x158] sm:$0xff]
    %v2582 = vld [vmem:[%s3 + $0x160] sm:$0xff]
    %v2583 = vld [vmem:[%s3 + $0x168] sm:$0xff]
    %v2584 = vld [vmem:[%s3 + $0x170] sm:$0xff]
    %v2585 = vld [vmem:[%s3 + $0x178] sm:$0xff]
    %v2586 = vld [vmem:[%s3 + $0x180] sm:$0xff]
    %v2587 = vld [vmem:[%s3 + $0x188] sm:$0xff]
    %v2588 = vld [vmem:[%s3 + $0x190] sm:$0xff]
    %v2589 = vld [vmem:[%s3 + $0x198] sm:$0xff]
    %v2590 = vld [vmem:[%s3 + $0x1a0] sm:$0xff]
    %v2591 = vld [vmem:[%s3 + $0x1a8] sm:$0xff]
    %v2592 = vld [vmem:[%s3 + $0x1b0] sm:$0xff]
    %v2593 = vld [vmem:[%s3 + $0x1b8] sm:$0xff]
    %v2594 = vld [vmem:[%s3 + $0x1c0] sm:$0xff]
    %v2595 = vld [vmem:[%s3 + $0x1c8] sm:$0xff]
    %v2596 = vld [vmem:[%s3 + $0x1d0] sm:$0xff]
    %v2597 = vld [vmem:[%s3 + $0x1d8] sm:$0xff]
    %v2598 = vld [vmem:[%s3 + $0x1e0] sm:$0xff]
    %v2599 = vld [vmem:[%s3 + $0x1e8] sm:$0xff]
    %v2600 = vld [vmem:[%s3 + $0x1f0] sm:$0xff]
    %v2601 = vld [vmem:[%s3 + $0x1f8] sm:$0xff]
    %v2602 = vld [vmem:[%s3 + $0x200] sm:$0xff]
    %v2603 = vld [vmem:[%s3 + $0x208] sm:$0xff]
    %v2604 = vld [vmem:[%s3 + $0x210] sm:$0xff]
    %v2605 = vld [vmem:[%s3 + $0x218] sm:$0xff]
    %v2606 = vld [vmem:[%s3 + $0x220] sm:$0xff]
    %v2607 = vld [vmem:[%s3 + $0x228] sm:$0xff]
    %v2608 = vld [vmem:[%s3 + $0x230] sm:$0xff]
    %v2609 = vld [vmem:[%s3 + $0x238] sm:$0xff]
    %v2610 = vld [vmem:[%s3 + $0x240] sm:$0xff]
    %v2611 = vld [vmem:[%s3 + $0x248] sm:$0xff]
    %v2612 = vld [vmem:[%s3 + $0x250] sm:$0xff]
    %v2613 = vld [vmem:[%s3 + $0x258] sm:$0xff]
    %v2614 = vld [vmem:[%s3 + $0x260] sm:$0xff]
    %v2615 = vld [vmem:[%s3 + $0x268] sm:$0xff]
    %v2616 = vld [vmem:[%s3 + $0x270] sm:$0xff]
    %v2617 = vld [vmem:[%s3 + $0x278] sm:$0xff]
    %v2618 = vld [vmem:[%s3 + $0x280] sm:$0xff]
    %v2619 = vld [vmem:[%s3 + $0x288] sm:$0xff]
    %v2620 = vld [vmem:[%s3 + $0x290] sm:$0xff]
    %v2621 = vld [vmem:[%s3 + $0x298] sm:$0xff]
    %v2622 = vld [vmem:[%s3 + $0x2a0] sm:$0xff]
    %v2623 = vld [vmem:[%s3 + $0x2a8] sm:$0xff]
    %v2624 = vld [vmem:[%s3 + $0x2b0] sm:$0xff]
    %v2625 = vld [vmem:[%s3 + $0x2b8] sm:$0xff]
    %v2626 = vld [vmem:[%s3 + $0x2c0] sm:$0xff]
    %v2627 = vld [vmem:[%s3 + $0x2c8] sm:$0xff]
    %v2628 = vld [vmem:[%s3 + $0x2d0] sm:$0xff]
    %v2629 = vld [vmem:[%s3 + $0x2d8] sm:$0xff]
    %v2630 = vld [vmem:[%s3 + $0x2e0] sm:$0xff]
    %v2631 = vld [vmem:[%s3 + $0x2e8] sm:$0xff]
    %v2632 = vld [vmem:[%s3 + $0x2f0] sm:$0xff]
    %v2633 = vld [vmem:[%s3 + $0x2f8] sm:$0xff]
    %v2634 = vld [vmem:[%s3 + $0x300] sm:$0xff]
    %v2635 = vld [vmem:[%s3 + $0x308] sm:$0xff]
    %v2636 = vld [vmem:[%s3 + $0x310] sm:$0xff]
    %v2637 = vld [vmem:[%s3 + $0x318] sm:$0xff]
    %v2638 = vld [vmem:[%s3 + $0x320] sm:$0xff]
    %v2639 = vld [vmem:[%s3 + $0x328] sm:$0xff]
    %v2640 = vld [vmem:[%s3 + $0x330] sm:$0xff]
    %v2641 = vld [vmem:[%s3 + $0x338] sm:$0xff]
    %v2642 = vld [vmem:[%s3 + $0x340] sm:$0xff]
    %v2748 = vunpack.c.l.b16 %v2538
    %v2749 = vunpack.c.h.b16 %v2538
    %v2750 = vunpack.c.l.b16 %v2539
    %v2751 = vunpack.c.h.b16 %v2539
    %v2752 = vunpack.c.l.b16 %v2540
    %v2753 = vunpack.c.h.b16 %v2540
    %v2754 = vunpack.c.l.b16 %v2541
    %v2755 = vunpack.c.h.b16 %v2541
    %v2756 = vunpack.c.l.b16 %v2542
    %v2757 = vunpack.c.h.b16 %v2542
    %v2758 = vunpack.c.l.b16 %v2543
    %v2759 = vunpack.c.h.b16 %v2543
    %v2760 = vunpack.c.l.b16 %v2544
    %v2761 = vunpack.c.h.b16 %v2544
    %v2762 = vunpack.c.l.b16 %v2545
    %v2763 = vunpack.c.h.b16 %v2545
    %v2764 = vunpack.c.l.b16 %v2546
    %v2765 = vunpack.c.h.b16 %v2546
    %v2766 = vunpack.c.l.b16 %v2547
    %v2767 = vunpack.c.h.b16 %v2547
    %v2768 = vunpack.c.l.b16 %v2548
    %v2769 = vunpack.c.h.b16 %v2548
    %v2770 = vunpack.c.l.b16 %v2549
    %v2771 = vunpack.c.h.b16 %v2549
    %v2772 = vunpack.c.l.b16 %v2550
    %v2773 = vunpack.c.h.b16 %v2550
    %v2774 = vunpack.c.l.b16 %v2551
    %v2775 = vunpack.c.h.b16 %v2551
    %v2776 = vunpack.c.l.b16 %v2552
    %v2777 = vunpack.c.h.b16 %v2552
    %v2778 = vunpack.c.l.b16 %v2553
    %v2779 = vunpack.c.h.b16 %v2553
    %v2780 = vunpack.c.l.b16 %v2554
    %v2781 = vunpack.c.h.b16 %v2554
    %v2782 = vunpack.c.l.b16 %v2555
    %v2783 = vunpack.c.h.b16 %v2555
    %v2784 = vunpack.c.l.b16 %v2556
    %v2785 = vunpack.c.h.b16 %v2556
    %v2786 = vunpack.c.l.b16 %v2557
    %v2787 = vunpack.c.h.b16 %v2557
    %v2788 = vunpack.c.l.b16 %v2558
    %v2789 = vunpack.c.h.b16 %v2558
    %v2790 = vunpack.c.l.b16 %v2559
    %v2791 = vunpack.c.h.b16 %v2559
    %v2792 = vunpack.c.l.b16 %v2560
    %v2793 = vunpack.c.h.b16 %v2560
    %v2794 = vunpack.c.l.b16 %v2561
    %v2795 = vunpack.c.h.b16 %v2561
    %v2796 = vunpack.c.l.b16 %v2562
    %v2797 = vunpack.c.h.b16 %v2562
    %v2798 = vunpack.c.l.b16 %v2563
    %v2799 = vunpack.c.h.b16 %v2563
    %v2800 = vunpack.c.l.b16 %v2564
    %v2801 = vunpack.c.h.b16 %v2564
    %v2802 = vunpack.c.l.b16 %v2565
    %v2803 = vunpack.c.h.b16 %v2565
    %v2804 = vunpack.c.l.b16 %v2566
    %v2805 = vunpack.c.h.b16 %v2566
    %v2806 = vunpack.c.l.b16 %v2567
    %v2807 = vunpack.c.h.b16 %v2567
    %v2808 = vunpack.c.l.b16 %v2568
    %v2809 = vunpack.c.h.b16 %v2568
    %v2810 = vunpack.c.l.b16 %v2569
    %v2811 = vunpack.c.h.b16 %v2569
    %v2812 = vunpack.c.l.b16 %v2570
    %v2813 = vunpack.c.h.b16 %v2570
    %v2814 = vunpack.c.l.b16 %v2571
    %v2815 = vunpack.c.h.b16 %v2571
    %v2816 = vunpack.c.l.b16 %v2572
    %v2817 = vunpack.c.h.b16 %v2572
    %v2818 = vunpack.c.l.b16 %v2573
    %v2819 = vunpack.c.h.b16 %v2573
    %v2820 = vunpack.c.l.b16 %v2574
    %v2821 = vunpack.c.h.b16 %v2574
    %v2822 = vunpack.c.l.b16 %v2575
    %v2823 = vunpack.c.h.b16 %v2575
    %v2824 = vunpack.c.l.b16 %v2576
    %v2825 = vunpack.c.h.b16 %v2576
    %v2826 = vunpack.c.l.b16 %v2577
    %v2827 = vunpack.c.h.b16 %v2577
    %v2828 = vunpack.c.l.b16 %v2578
    %v2829 = vunpack.c.h.b16 %v2578
    %v2830 = vunpack.c.l.b16 %v2579
    %v2831 = vunpack.c.h.b16 %v2579
    %v2832 = vunpack.c.l.b16 %v2580
    %v2833 = vunpack.c.h.b16 %v2580
    %v2834 = vunpack.c.l.b16 %v2581
    %v2835 = vunpack.c.h.b16 %v2581
    %v2836 = vunpack.c.l.b16 %v2582
    %v2837 = vunpack.c.h.b16 %v2582
    %v2838 = vunpack.c.l.b16 %v2583
    %v2839 = vunpack.c.h.b16 %v2583
    %v2840 = vunpack.c.l.b16 %v2584
    %v2841 = vunpack.c.h.b16 %v2584
    %v2842 = vunpack.c.l.b16 %v2585
    %v2843 = vunpack.c.h.b16 %v2585
    %v2844 = vunpack.c.l.b16 %v2586
    %v2845 = vunpack.c.h.b16 %v2586
    %v2846 = vunpack.c.l.b16 %v2587
    %v2847 = vunpack.c.h.b16 %v2587
    %v2848 = vunpack.c.l.b16 %v2588
    %v2849 = vunpack.c.h.b16 %v2588
    %v2850 = vunpack.c.l.b16 %v2589
    %v2851 = vunpack.c.h.b16 %v2589
    %v2852 = vunpack.c.l.b16 %v2590
    %v2853 = vunpack.c.h.b16 %v2590
    %v2854 = vunpack.c.l.b16 %v2591
    %v2855 = vunpack.c.h.b16 %v2591
    %v2856 = vunpack.c.l.b16 %v2592
    %v2857 = vunpack.c.h.b16 %v2592
    %v2858 = vunpack.c.l.b16 %v2593
    %v2859 = vunpack.c.h.b16 %v2593
    %v2860 = vunpack.c.l.b16 %v2594
    %v2861 = vunpack.c.h.b16 %v2594
    %v2862 = vunpack.c.l.b16 %v2595
    %v2863 = vunpack.c.h.b16 %v2595
    %v2864 = vunpack.c.l.b16 %v2596
    %v2865 = vunpack.c.h.b16 %v2596
    %v2866 = vunpack.c.l.b16 %v2597
    %v2867 = vunpack.c.h.b16 %v2597
    %v2868 = vunpack.c.l.b16 %v2598
    %v2869 = vunpack.c.h.b16 %v2598
    %v2870 = vunpack.c.l.b16 %v2599
    %v2871 = vunpack.c.h.b16 %v2599
    %v2872 = vunpack.c.l.b16 %v2600
    %v2873 = vunpack.c.h.b16 %v2600
    %v2874 = vunpack.c.l.b16 %v2601
    %v2875 = vunpack.c.h.b16 %v2601
    %v2876 = vunpack.c.l.b16 %v2602
    %v2877 = vunpack.c.h.b16 %v2602
    %v2878 = vunpack.c.l.b16 %v2603
    %v2879 = vunpack.c.h.b16 %v2603
    %v2880 = vunpack.c.l.b16 %v2604
    %v2881 = vunpack.c.h.b16 %v2604
    %v2882 = vunpack.c.l.b16 %v2605
    %v2883 = vunpack.c.h.b16 %v2605
    %v2884 = vunpack.c.l.b16 %v2606
    %v2885 = vunpack.c.h.b16 %v2606
    %v2886 = vunpack.c.l.b16 %v2607
    %v2887 = vunpack.c.h.b16 %v2607
    %v2888 = vunpack.c.l.b16 %v2608
    %v2889 = vunpack.c.h.b16 %v2608
    %v2890 = vunpack.c.l.b16 %v2609
    %v2891 = vunpack.c.h.b16 %v2609
    %v2892 = vunpack.c.l.b16 %v2610
    %v2893 = vunpack.c.h.b16 %v2610
    %v2894 = vunpack.c.l.b16 %v2611
    %v2895 = vunpack.c.h.b16 %v2611
    %v2896 = vunpack.c.l.b16 %v2612
    %v2897 = vunpack.c.h.b16 %v2612
    %v2898 = vunpack.c.l.b16 %v2613
    %v2899 = vunpack.c.h.b16 %v2613
    %v2900 = vunpack.c.l.b16 %v2614
    %v2901 = vunpack.c.h.b16 %v2614
    %v2902 = vunpack.c.l.b16 %v2615
    %v2903 = vunpack.c.h.b16 %v2615
    %v2904 = vunpack.c.l.b16 %v2616
    %v2905 = vunpack.c.h.b16 %v2616
    %v2906 = vunpack.c.l.b16 %v2617
    %v2907 = vunpack.c.h.b16 %v2617
    %v2908 = vunpack.c.l.b16 %v2618
    %v2909 = vunpack.c.h.b16 %v2618
    %v2910 = vunpack.c.l.b16 %v2619
    %v2911 = vunpack.c.h.b16 %v2619
    %v2912 = vunpack.c.l.b16 %v2620
    %v2913 = vunpack.c.h.b16 %v2620
    %v2914 = vunpack.c.l.b16 %v2621
    %v2915 = vunpack.c.h.b16 %v2621
    %v2916 = vunpack.c.l.b16 %v2622
    %v2917 = vunpack.c.h.b16 %v2622
    %v2918 = vunpack.c.l.b16 %v2623
    %v2919 = vunpack.c.h.b16 %v2623
    %v2920 = vunpack.c.l.b16 %v2624
    %v2921 = vunpack.c.h.b16 %v2624
    %v2922 = vunpack.c.l.b16 %v2625
    %v2923 = vunpack.c.h.b16 %v2625
    %v2924 = vunpack.c.l.b16 %v2626
    %v2925 = vunpack.c.h.b16 %v2626
    %v2926 = vunpack.c.l.b16 %v2627
    %v2927 = vunpack.c.h.b16 %v2627
    %v2928 = vunpack.c.l.b16 %v2628
    %v2929 = vunpack.c.h.b16 %v2628
    %v2930 = vunpack.c.l.b16 %v2629
    %v2931 = vunpack.c.h.b16 %v2629
    %v2932 = vunpack.c.l.b16 %v2630
    %v2933 = vunpack.c.h.b16 %v2630
    %v2934 = vunpack.c.l.b16 %v2631
    %v2935 = vunpack.c.h.b16 %v2631
    %v2936 = vunpack.c.l.b16 %v2632
    %v2937 = vunpack.c.h.b16 %v2632
    %v2938 = vunpack.c.l.b16 %v2633
    %v2939 = vunpack.c.h.b16 %v2633
    %v2940 = vunpack.c.l.b16 %v2634
    %v2941 = vunpack.c.h.b16 %v2634
    %v2942 = vunpack.c.l.b16 %v2635
    %v2943 = vunpack.c.h.b16 %v2635
    %v2944 = vunpack.c.l.b16 %v2636
    %v2945 = vunpack.c.h.b16 %v2636
    %v2946 = vunpack.c.l.b16 %v2637
    %v2947 = vunpack.c.h.b16 %v2637
    %v2948 = vunpack.c.l.b16 %v2638
    %v2949 = vunpack.c.h.b16 %v2638
    %v2950 = vunpack.c.l.b16 %v2639
    %v2951 = vunpack.c.h.b16 %v2639
    %v2952 = vunpack.c.l.b16 %v2640
    %v2953 = vunpack.c.h.b16 %v2640
    %v2954 = vunpack.c.l.b16 %v2641
    %v2955 = vunpack.c.h.b16 %v2641
    %v2956 = vunpack.c.l.b16 %v2642
    %v2957 = vunpack.c.h.b16 %v2642
    %v2958 = vpack.c.b16 %v2750, %v2748
    %v2959 = vpack.c.b16 %v2751, %v2749
    %v2960 = vpack.c.b16 %v2754, %v2752
    %v2961 = vpack.c.b16 %v2755, %v2753
    %v2962 = vpack.c.b16 %v2758, %v2756
    %v2963 = vpack.c.b16 %v2759, %v2757
    %v2964 = vpack.c.b16 %v2762, %v2760
    %v2965 = vpack.c.b16 %v2763, %v2761
    %v2966 = vpack.c.b16 %v2766, %v2764
    %v2967 = vpack.c.b16 %v2767, %v2765
    %v2968 = vpack.c.b16 %v2770, %v2768
    %v2969 = vpack.c.b16 %v2771, %v2769
    %v2970 = vpack.c.b16 %v2774, %v2772
    %v2971 = vpack.c.b16 %v2775, %v2773
    %v2972 = vpack.c.b16 %v2778, %v2776
    %v2973 = vpack.c.b16 %v2779, %v2777
    %v2974 = vpack.c.b16 %v2782, %v2780
    %v2975 = vpack.c.b16 %v2783, %v2781
    %v2976 = vpack.c.b16 %v2786, %v2784
    %v2977 = vpack.c.b16 %v2787, %v2785
    %v2978 = vpack.c.b16 %v2790, %v2788
    %v2979 = vpack.c.b16 %v2791, %v2789
    %v2980 = vpack.c.b16 %v2794, %v2792
    %v2981 = vpack.c.b16 %v2795, %v2793
    %v2982 = vpack.c.b16 %v2798, %v2796
    %v2983 = vpack.c.b16 %v2799, %v2797
    %v2984 = vpack.c.b16 %v2802, %v2800
    %v2985 = vpack.c.b16 %v2803, %v2801
    %v2986 = vpack.c.b16 %v2806, %v2804
    %v2987 = vpack.c.b16 %v2807, %v2805
    %v2988 = vpack.c.b16 %v2810, %v2808
    %v2989 = vpack.c.b16 %v2811, %v2809
    %v2990 = vpack.c.b16 %v2814, %v2812
    %v2991 = vpack.c.b16 %v2815, %v2813
    %v2992 = vpack.c.b16 %v2818, %v2816
    %v2993 = vpack.c.b16 %v2819, %v2817
    %v2994 = vpack.c.b16 %v2822, %v2820
    %v2995 = vpack.c.b16 %v2823, %v2821
    %v2996 = vpack.c.b16 %v2826, %v2824
    %v2997 = vpack.c.b16 %v2827, %v2825
    %v2998 = vpack.c.b16 %v2830, %v2828
    %v2999 = vpack.c.b16 %v2831, %v2829
    %v3000 = vpack.c.b16 %v2834, %v2832
    %v3001 = vpack.c.b16 %v2835, %v2833
    %v3002 = vpack.c.b16 %v2838, %v2836
    %v3003 = vpack.c.b16 %v2839, %v2837
    %v3004 = vpack.c.b16 %v2842, %v2840
    %v3005 = vpack.c.b16 %v2843, %v2841
    %v3006 = vpack.c.b16 %v2846, %v2844
    %v3007 = vpack.c.b16 %v2847, %v2845
    %v3008 = vpack.c.b16 %v2850, %v2848
    %v3009 = vpack.c.b16 %v2851, %v2849
    %v3010 = vpack.c.b16 %v2854, %v2852
    %v3011 = vpack.c.b16 %v2855, %v2853
    %v3012 = vpack.c.b16 %v2858, %v2856
    %v3013 = vpack.c.b16 %v2859, %v2857
    %v3014 = vpack.c.b16 %v2862, %v2860
    %v3015 = vpack.c.b16 %v2863, %v2861
    %v3016 = vpack.c.b16 %v2866, %v2864
    %v3017 = vpack.c.b16 %v2867, %v2865
    %v3018 = vpack.c.b16 %v2870, %v2868
    %v3019 = vpack.c.b16 %v2871, %v2869
    %v3020 = vpack.c.b16 %v2874, %v2872
    %v3021 = vpack.c.b16 %v2875, %v2873
    %v3022 = vpack.c.b16 %v2878, %v2876
    %v3023 = vpack.c.b16 %v2879, %v2877
    %v3024 = vpack.c.b16 %v2882, %v2880
    %v3025 = vpack.c.b16 %v2883, %v2881
    %v3026 = vpack.c.b16 %v2886, %v2884
    %v3027 = vpack.c.b16 %v2887, %v2885
    %v3028 = vpack.c.b16 %v2890, %v2888
    %v3029 = vpack.c.b16 %v2891, %v2889
    %v3030 = vpack.c.b16 %v2894, %v2892
    %v3031 = vpack.c.b16 %v2895, %v2893
    %v3032 = vpack.c.b16 %v2898, %v2896
    %v3033 = vpack.c.b16 %v2899, %v2897
    %v3034 = vpack.c.b16 %v2902, %v2900
    %v3035 = vpack.c.b16 %v2903, %v2901
    %v3036 = vpack.c.b16 %v2906, %v2904
    %v3037 = vpack.c.b16 %v2907, %v2905
    %v3038 = vpack.c.b16 %v2910, %v2908
    %v3039 = vpack.c.b16 %v2911, %v2909
    %v3040 = vpack.c.b16 %v2914, %v2912
    %v3041 = vpack.c.b16 %v2915, %v2913
    %v3042 = vpack.c.b16 %v2918, %v2916
    %v3043 = vpack.c.b16 %v2919, %v2917
    %v3044 = vpack.c.b16 %v2922, %v2920
    %v3045 = vpack.c.b16 %v2923, %v2921
    %v3046 = vpack.c.b16 %v2926, %v2924
    %v3047 = vpack.c.b16 %v2927, %v2925
    %v3048 = vpack.c.b16 %v2930, %v2928
    %v3049 = vpack.c.b16 %v2931, %v2929
    %v3050 = vpack.c.b16 %v2934, %v2932
    %v3051 = vpack.c.b16 %v2935, %v2933
    %v3052 = vpack.c.b16 %v2938, %v2936
    %v3053 = vpack.c.b16 %v2939, %v2937
    %v3054 = vpack.c.b16 %v2942, %v2940
    %v3055 = vpack.c.b16 %v2943, %v2941
    %v3056 = vpack.c.b16 %v2946, %v2944
    %v3057 = vpack.c.b16 %v2947, %v2945
    %v3058 = vpack.c.b16 %v2950, %v2948
    %v3059 = vpack.c.b16 %v2951, %v2949
    %v3060 = vpack.c.b16 %v2954, %v2952
    %v3061 = vpack.c.b16 %v2955, %v2953
    %v3062 = vpack.c.b16 %v2956, %v2956
    %v3063 = vpack.c.b16 %v2957, %v2957
    %v3169 = vsel %vm1422, %v2537, 0
    %v3172 = vsel %vm755, %v3062, 0
    %v3175 = vsel %vm755, %v3063, 0
    %3177 = vmatprep.subr.bf16.mxu0 %v2959
    %3178 = vmatpush1.bf16.msra.mxu0 %v2958
    %3179 = vmatprep.subr.bf16.mxu0 %v2961
    %3180 = vmatpush1.bf16.msra.mxu0 %v2960
    %3181 = vmatprep.subr.bf16.mxu0 %v2963
    %3182 = vmatpush1.bf16.msra.mxu0 %v2962
    %3183 = vmatprep.subr.bf16.mxu0 %v2965
    %3184 = vmatpush1.bf16.msra.mxu0 %v2964
    %3185 = vmatprep.subr.bf16.mxu0 %v2967
    %3186 = vmatpush1.bf16.msra.mxu0 %v2966
    %3187 = vmatprep.subr.bf16.mxu0 %v2969
    %3188 = vmatpush1.bf16.msra.mxu0 %v2968
    %3189 = vmatprep.subr.bf16.mxu0 %v2971
    %3190 = vmatpush1.bf16.msra.mxu0 %v2970
    %3191 = vmatprep.subr.bf16.mxu0 %v2973
    %3192 = vmatpush1.bf16.msra.mxu0 %v2972
    %3193 = vmatprep.subr.bf16.mxu0 %v2975
    %3194 = vmatpush1.bf16.msra.mxu0 %v2974
    %3195 = vmatprep.subr.bf16.mxu0 %v2977
    %3196 = vmatpush1.bf16.msra.mxu0 %v2976
    %3197 = vmatprep.subr.bf16.mxu0 %v2979
    %3198 = vmatpush1.bf16.msra.mxu0 %v2978
    %3199 = vmatprep.subr.bf16.mxu0 %v2981
    %3200 = vmatpush1.bf16.msra.mxu0 %v2980
    %3201 = vmatprep.subr.bf16.mxu0 %v2983
    %3202 = vmatpush1.bf16.msra.mxu0 %v2982
    %3203 = vmatprep.subr.bf16.mxu0 %v2985
    %3204 = vmatpush1.bf16.msra.mxu0 %v2984
    %3205 = vmatprep.subr.bf16.mxu0 %v2987
    %3206 = vmatpush1.bf16.msra.mxu0 %v2986
    %3207 = vmatprep.subr.bf16.mxu0 %v2989
    %3208 = vmatpush1.bf16.msra.mxu0 %v2988
    %3209 = vmatprep.mubr.bf16.mxu0 %v2532
    %3210 = vmatmul.mubr.bf16.gmra.mrb[0].mxu0 %v2531
    %v3211 = vpop.f32.mrb[0].mxu0
    %v3212 = vadd.f32 0.0, %v3211
    %v3213 = vpop.f32.mrb[0].mxu0
    %v3214 = vadd.f32 0.0, %v3213
    %v3215 = vpop.f32.mrb[0].mxu0
    %v3216 = vadd.f32 0.0, %v3215
    %v3217 = vpop.f32.mrb[0].mxu0
    %v3218 = vadd.f32 0.0, %v3217
    %3219 = vdwg.mxu0
    %3220 = vmatprep.subr.bf16.mxu0 %v2991
    %3221 = vmatpush1.bf16.msra.mxu0 %v2990
    %3222 = vmatprep.subr.bf16.mxu0 %v2993
    %3223 = vmatpush1.bf16.msra.mxu0 %v2992
    %3224 = vmatprep.subr.bf16.mxu0 %v2995
    %3225 = vmatpush1.bf16.msra.mxu0 %v2994
    %3226 = vmatprep.subr.bf16.mxu0 %v2997
    %3227 = vmatpush1.bf16.msra.mxu0 %v2996
    %3228 = vmatprep.subr.bf16.mxu0 %v2999
    %3229 = vmatpush1.bf16.msra.mxu0 %v2998
    %3230 = vmatprep.subr.bf16.mxu0 %v3001
    %3231 = vmatpush1.bf16.msra.mxu0 %v3000
    %3232 = vmatprep.subr.bf16.mxu0 %v3003
    %3233 = vmatpush1.bf16.msra.mxu0 %v3002
    %3234 = vmatprep.subr.bf16.mxu0 %v3005
    %3235 = vmatpush1.bf16.msra.mxu0 %v3004
    %3236 = vmatprep.subr.bf16.mxu0 %v3007
    %3237 = vmatpush1.bf16.msra.mxu0 %v3006
    %3238 = vmatprep.subr.bf16.mxu0 %v3009
    %3239 = vmatpush1.bf16.msra.mxu0 %v3008
    %3240 = vmatprep.subr.bf16.mxu0 %v3011
    %3241 = vmatpush1.bf16.msra.mxu0 %v3010
    %3242 = vmatprep.subr.bf16.mxu0 %v3013
    %3243 = vmatpush1.bf16.msra.mxu0 %v3012
    %3244 = vmatprep.subr.bf16.mxu0 %v3015
    %3245 = vmatpush1.bf16.msra.mxu0 %v3014
    %3246 = vmatprep.subr.bf16.mxu0 %v3017
    %3247 = vmatpush1.bf16.msra.mxu0 %v3016
    %3248 = vmatprep.subr.bf16.mxu0 %v3019
    %3249 = vmatpush1.bf16.msra.mxu0 %v3018
    %3250 = vmatprep.subr.bf16.mxu0 %v3021
    %3251 = vmatpush1.bf16.msra.mxu0 %v3020
    %3252 = vmatprep.mubr.bf16.mxu0 %v2534
    %3253 = vmatmul.mubr.bf16.gmra.mrb[0].mxu0 %v2533
    %v3254 = vpop.f32.mrb[0].mxu0
    %v3255 = vadd.f32 %v3212, %v3254
    %v3256 = vpop.f32.mrb[0].mxu0
    %v3257 = vadd.f32 %v3214, %v3256
    %v3258 = vpop.f32.mrb[0].mxu0
    %v3259 = vadd.f32 %v3216, %v3258
    %v3260 = vpop.f32.mrb[0].mxu0
    %v3261 = vadd.f32 %v3218, %v3260
    %3262 = vdwg.mxu0
    %3263 = vmatprep.subr.bf16.mxu0 %v3023
    %3264 = vmatpush1.bf16.msra.mxu0 %v3022
    %3265 = vmatprep.subr.bf16.mxu0 %v3025
    %3266 = vmatpush1.bf16.msra.mxu0 %v3024
    %3267 = vmatprep.subr.bf16.mxu0 %v3027
    %3268 = vmatpush1.bf16.msra.mxu0 %v3026
    %3269 = vmatprep.subr.bf16.mxu0 %v3029
    %3270 = vmatpush1.bf16.msra.mxu0 %v3028
    %3271 = vmatprep.subr.bf16.mxu0 %v3031
    %3272 = vmatpush1.bf16.msra.mxu0 %v3030
    %3273 = vmatprep.subr.bf16.mxu0 %v3033
    %3274 = vmatpush1.bf16.msra.mxu0 %v3032
    %3275 = vmatprep.subr.bf16.mxu0 %v3035
    %3276 = vmatpush1.bf16.msra.mxu0 %v3034
    %3277 = vmatprep.subr.bf16.mxu0 %v3037
    %3278 = vmatpush1.bf16.msra.mxu0 %v3036
    %3279 = vmatprep.subr.bf16.mxu0 %v3039
    %3280 = vmatpush1.bf16.msra.mxu0 %v3038
    %3281 = vmatprep.subr.bf16.mxu0 %v3041
    %3282 = vmatpush1.bf16.msra.mxu0 %v3040
    %3283 = vmatprep.subr.bf16.mxu0 %v3043
    %3284 = vmatpush1.bf16.msra.mxu0 %v3042
    %3285 = vmatprep.subr.bf16.mxu0 %v3045
    %3286 = vmatpush1.bf16.msra.mxu0 %v3044
    %3287 = vmatprep.subr.bf16.mxu0 %v3047
    %3288 = vmatpush1.bf16.msra.mxu0 %v3046
    %3289 = vmatprep.subr.bf16.mxu0 %v3049
    %3290 = vmatpush1.bf16.msra.mxu0 %v3048
    %3291 = vmatprep.subr.bf16.mxu0 %v3051
    %3292 = vmatpush1.bf16.msra.mxu0 %v3050
    %3293 = vmatprep.subr.bf16.mxu0 %v3053
    %3294 = vmatpush1.bf16.msra.mxu0 %v3052
    %3295 = vmatprep.mubr.bf16.mxu0 %v2536
    %3296 = vmatmul.mubr.bf16.gmra.mrb[0].mxu0 %v2535
    %v3297 = vpop.f32.mrb[0].mxu0
    %v3298 = vadd.f32 %v3255, %v3297
    %v3299 = vpop.f32.mrb[0].mxu0
    %v3300 = vadd.f32 %v3257, %v3299
    %v3301 = vpop.f32.mrb[0].mxu0
    %v3302 = vadd.f32 %v3259, %v3301
    %v3303 = vpop.f32.mrb[0].mxu0
    %v3304 = vadd.f32 %v3261, %v3303
    %3305 = vdwg.mxu0
    %3306 = vmatprep.subr.bf16.mxu0 %v3055
    %3307 = vmatpush1.bf16.msra.mxu0 %v3054
    %3308 = vmatprep.subr.bf16.mxu0 %v3057
    %3309 = vmatpush1.bf16.msra.mxu0 %v3056
    %3310 = vmatprep.subr.bf16.mxu0 %v3059
    %3311 = vmatpush1.bf16.msra.mxu0 %v3058
    %3312 = vmatprep.subr.bf16.mxu0 %v3061
    %3313 = vmatpush1.bf16.msra.mxu0 %v3060
    %3314 = vmatprep.subr.bf16.mxu0 %v3175
    %3315 = vmatpush1.bf16.msra.mxu0 %v3172
    %3316 = vmatprep.subr.bf16.mxu0 0
    %3317 = vmatpush1.bf16.msra.mxu0 0
    %3318 = vmatprep.subr.bf16.mxu0 0
    %3319 = vmatpush1.bf16.msra.mxu0 0
    %3320 = vmatprep.subr.bf16.mxu0 0
    %3321 = vmatpush1.bf16.msra.mxu0 0
    %3322 = vmatprep.subr.bf16.mxu0 0
    %3323 = vmatpush1.bf16.msra.mxu0 0
    %3324 = vmatprep.subr.bf16.mxu0 0
    %3325 = vmatpush1.bf16.msra.mxu0 0
    %3326 = vmatprep.subr.bf16.mxu0 0
    %3327 = vmatpush1.bf16.msra.mxu0 0
    %3328 = vmatprep.subr.bf16.mxu0 0
    %3329 = vmatpush1.bf16.msra.mxu0 0
    %3330 = vmatprep.subr.bf16.mxu0 0
    %3331 = vmatpush1.bf16.msra.mxu0 0
    %3332 = vmatprep.subr.bf16.mxu0 0
    %3333 = vmatpush1.bf16.msra.mxu0 0
    %3334 = vmatprep.subr.bf16.mxu0 0
    %3335 = vmatpush1.bf16.msra.mxu0 0
    %3336 = vmatprep.subr.bf16.mxu0 0
    %3337 = vmatpush1.bf16.msra.mxu0 0
    %3338 = vmatprep.mubr.bf16.mxu0 0
    %3339 = vmatmul.mubr.bf16.gmra.mrb[0].mxu0 %v3169
    %v3340 = vpop.f32.mrb[0].mxu0
    %v3341 = vadd.f32 %v3298, %v3340
    %v3342 = vpop.f32.mrb[0].mxu0
    %v3343 = vadd.f32 %v3300, %v3342
    %v3344 = vpop.f32.mrb[0].mxu0
    %v3345 = vadd.f32 %v3302, %v3344
    %v3346 = vpop.f32.mrb[0].mxu0
    %v3347 = vadd.f32 %v3304, %v3346
    %3348 = vdwg.mxu0
    %v3351 = vrot.slane %v3341, 1
    %v3352 = vrot.slane %v3343, 1
    %v3355 = vmax.f32 %v3341, %v3351
    %v3356 = vmax.f32 %v3343, %v3352
    %v3359 = vrot.slane %v3345, 1
    %v3360 = vrot.slane %v3347, 1
    %v3363 = vmax.f32 %v3345, %v3359
    %v3364 = vmax.f32 %v3347, %v3360
    %v3367 = vrot.slane %v3355, 2
    %v3368 = vrot.slane %v3356, 2
    %3369 = vrot.lane.b32.xlu0 %v3367, 32
    %v3370 = vpop.permute.xlu0 %3369
    %3371 = vrot.lane.b32.xlu0 %v3368, 32
    %v3372 = vpop.permute.xlu0 %3371
    %v3373 = vsel %vm770, %v3370, %v3372
    %v3376 = vrot.slane %v3355, 4
    %v3377 = vrot.slane %v3356, 4
    %3378 = vrot.lane.b32.xlu0 %v3376, 64
    %v3379 = vpop.permute.xlu0 %3378
    %3380 = vrot.lane.b32.xlu0 %v3377, 64
    %v3381 = vpop.permute.xlu0 %3380
    %v3382 = vsel %vm1637, %v3379, %v3381
    %v3385 = vrot.slane %v3355, 6
    %v3386 = vrot.slane %v3356, 6
    %3387 = vrot.lane.b32.xlu0 %v3385, 96
    %v3388 = vpop.permute.xlu0 %3387
    %3389 = vrot.lane.b32.xlu0 %v3386, 96
    %v3390 = vpop.permute.xlu0 %3389
    %v3391 = vsel %vm436, %v3388, %v3390
    %v3394 = vsel %vm770, %v3356, %v3370
    %v3395 = vsel %vm1637, %v3373, %v3379
    %v3396 = vsel %vm436, %v3382, %v3388
    %3402 = vrot.lane.b32.xlu0 %v3355, 112
    %v3403 = vpop.permute.xlu0 %3402
    %3404 = vrot.lane.b32.xlu0 %v3394, 112
    %v3405 = vpop.permute.xlu0 %3404
    %3406 = vrot.lane.b32.xlu0 %v3395, 112
    %v3407 = vpop.permute.xlu0 %3406
    %3408 = vrot.lane.b32.xlu0 %v3396, 112
    %v3409 = vpop.permute.xlu0 %3408
    %3410 = vrot.lane.b32.xlu0 %v3391, 112
    %v3411 = vpop.permute.xlu0 %3410
    %3412 = vrot.lane.b32.xlu0 %v3363, 112
    %v3413 = vpop.permute.xlu0 %3412
    %3414 = vrot.lane.b32.xlu0 %v3364, 112
    %v3415 = vpop.permute.xlu0 %3414
    %v3416 = vsel %vm1672, %v3403, %v3405
    %v3417 = vsel %vm1672, %v3405, %v3407
    %v3418 = vsel %vm1672, %v3407, %v3409
    %v3419 = vsel %vm1672, %v3409, %v3411
    %v3420 = vsel %vm1672, %v3411, %v3413
    %v3421 = vsel %vm1672, %v3413, %v3415
    %3429 = vrot.lane.b32.xlu0 %v3355, 16
    %v3430 = vpop.permute.xlu0 %3429
    %v3432 = vsel %vm1689, %v3415, %v3430
    %v3433 = vmax.f32 %v3355, %v3416
    %v3434 = vmax.f32 %v3394, %v3417
    %v3435 = vmax.f32 %v3395, %v3418
    %v3436 = vmax.f32 %v3396, %v3419
    %v3437 = vmax.f32 %v3391, %v3420
    %v3438 = vmax.f32 %v3363, %v3421
    %v3439 = vmax.f32 %v3364, %v3432
    %v3440 = vadd.f32 %v3433, %v1702
    %v3441 = vadd.f32 %v3434, %v1706
    %v3442 = vadd.f32 %v3435, %v1710
    %v3443 = vadd.f32 %v3436, %v1714
    %v3444 = vadd.f32 %v3437, %v1718
    %v3445 = vadd.f32 %v3438, %v1722
    %v3446 = vadd.f32 %v3439, %v1726
    %v3447 = vmax.f32 %v3440, 0.0
    %v3448 = vmax.f32 %v3441, 0.0
    %v3449 = vmax.f32 %v3442, 0.0
    %v3450 = vmax.f32 %v3443, 0.0
    %v3451 = vmax.f32 %v3444, 0.0
    %v3452 = vmax.f32 %v3445, 0.0
    %v3453 = vmax.f32 %v3446, 0.0
    %v3461 = vcombine.low %v3447, %v3448
    %v3462 = vcombine.low %v3449, %v3450
    %v3463 = vcombine.low %v3451, %v3452
    %v3465 = vunpack.c.l.s4 1966171168
    %v3466 = vunpack.c.0.s8 %v3465
    %v3467 = vlaneseq
    %v3468 = vshrl.u32 %v3467, 7
    %v3469 = vsub.s32 %v3466, %v3468
    %v3470 = vrot.slane %v3461, %v3469
    %v3472 = vunpack.c.l.s4 1966171168
    %v3473 = vunpack.c.0.s8 %v3472
    %v3474 = vlaneseq
    %v3475 = vshrl.u32 %v3474, 7
    %v3476 = vsub.s32 %v3473, %v3475
    %v3477 = vrot.slane %v3462, %v3476
    %v3479 = vunpack.c.l.s4 1966171168
    %v3480 = vunpack.c.0.s8 %v3479
    %v3481 = vlaneseq
    %v3482 = vshrl.u32 %v3481, 7
    %v3483 = vsub.s32 %v3480, %v3482
    %v3484 = vrot.slane %v3463, %v3483
    %v3486 = vunpack.c.l.s4 1966171168
    %v3487 = vunpack.c.0.s8 %v3486
    %v3488 = vlaneseq
    %v3489 = vshrl.u32 %v3488, 7
    %v3490 = vsub.s32 %v3487, %v3489
    %v3491 = vrot.slane %v3453, %v3490
    %v3492 = vcombine.low %v3470, %v3477
    %v3493 = vcombine.low %v3484, %v3491
    %v3495 = vunpack.c.l.s4 1966171168
    %v3496 = vunpack.c.0.s8 %v3495
    %v3497 = vlaneseq
    %v3498 = vshrl.u32 %v3497, 7
    %v3499 = vsub.s32 %v3496, %v3498
    %v3500 = vrot.slane %v3492, %v3499
    %v3502 = vunpack.c.l.s4 1966171168
    %v3503 = vunpack.c.0.s8 %v3502
    %v3504 = vlaneseq
    %v3505 = vshrl.u32 %v3504, 7
    %v3506 = vsub.s32 %v3503, %v3505
    %v3507 = vrot.slane %v3493, %v3506
    %v3508 = vcombine.low %v3500, %v3507
    %s3510 = scalar_lea.vmem [#allocation2], 1
    %3511 = vst.msk [vmem:[%s3510] ss:$2 sm:$0x7f] %vm1807, %v3508
    %v3512 = vld [vmem:[#allocation2] sm:$0xff]
    %v3513 = vld [vmem:[#allocation2 + $0x8] sm:$0x3f]
    %v3516 = vcombine.high %v3512, %v3512
    %v3518 = vunpack.c.l.s4 1983009808
    %v3519 = vunpack.c.0.s8 %v3518
    %v3520 = vlaneseq
    %v3521 = vshrl.u32 %v3520, 7
    %v3522 = vsub.s32 %v3519, %v3521
    %v3523 = vrot.slane %v3512, %v3522
    %v3525 = vunpack.c.l.s4 1983009808
    %v3526 = vunpack.c.0.s8 %v3525
    %v3527 = vlaneseq
    %v3528 = vshrl.u32 %v3527, 7
    %v3529 = vsub.s32 %v3526, %v3528
    %v3530 = vrot.slane %v3516, %v3529
    %v3531 = vcombine.high %v3523, %v3523
    %v3532 = vcombine.high %v3530, %v3530
    %v3533 = vcombine.high %v3513, %v3513
    %v3535 = vunpack.c.l.s4 1983009808
    %v3536 = vunpack.c.0.s8 %v3535
    %v3537 = vlaneseq
    %v3538 = vshrl.u32 %v3537, 7
    %v3539 = vsub.s32 %v3536, %v3538
    %v3540 = vrot.slane %v3513, %v3539
    %v3542 = vunpack.c.l.s4 1983009808
    %v3543 = vunpack.c.0.s8 %v3542
    %v3544 = vlaneseq
    %v3545 = vshrl.u32 %v3544, 7
    %v3546 = vsub.s32 %v3543, %v3545
    %v3547 = vrot.slane %v3533, %v3546
    %v3548 = vcombine.high %v3540, %v3540
    %v3556 = vpack.c.bf16 %v3523, %v3523
    %v3557 = vpack.c.bf16 %v3531, %v3531
    %v3558 = vpack.c.bf16 %v3530, %v3530
    %v3559 = vpack.c.bf16 %v3532, %v3532
    %v3560 = vpack.c.bf16 %v3540, %v3540
    %v3561 = vpack.c.bf16 %v3548, %v3548
    %v3562 = vpack.c.bf16 %v3547, %v3547
    %v3563 = vld [vmem:[%s5] sm:$0xf]
    %v3564 = vld [vmem:[%s5 + $0x4] sm:$0xf]
    %v3565 = vld [vmem:[%s5 + $0x8] sm:$0xf]
    %v3566 = vld [vmem:[%s5 + $0xc] sm:$0xf]
    %v3567 = vld [vmem:[%s5 + $0x10] sm:$0xf]
    %v3568 = vld [vmem:[%s5 + $0x14] sm:$0xf]
    %v3569 = vld [vmem:[%s5 + $0x18] sm:$0xf]
    %v3570 = vld [vmem:[%s5 + $0x1c] sm:$0xf]
    %v3571 = vld [vmem:[%s5 + $0x20] sm:$0xf]
    %v3572 = vld [vmem:[%s5 + $0x24] sm:$0xf]
    %v3573 = vld [vmem:[%s5 + $0x28] sm:$0xf]
    %v3574 = vld [vmem:[%s5 + $0x2c] sm:$0xf]
    %v3575 = vld [vmem:[%s5 + $0x30] sm:$0xf]
    %v3576 = vld [vmem:[%s5 + $0x34] sm:$0xf]
    %v3577 = vld [vmem:[%s5 + $0x38] sm:$0xf]
    %v3578 = vld [vmem:[%s5 + $0x3c] sm:$0xf]
    %v3579 = vld [vmem:[%s5 + $0x40] sm:$0xf]
    %v3580 = vld [vmem:[%s5 + $0x44] sm:$0xf]
    %v3581 = vld [vmem:[%s5 + $0x48] sm:$0xf]
    %v3582 = vld [vmem:[%s5 + $0x4c] sm:$0xf]
    %v3583 = vld [vmem:[%s5 + $0x50] sm:$0xf]
    %v3584 = vld [vmem:[%s5 + $0x54] sm:$0xf]
    %v3585 = vld [vmem:[%s5 + $0x58] sm:$0xf]
    %v3586 = vld [vmem:[%s5 + $0x5c] sm:$0xf]
    %v3587 = vld [vmem:[%s5 + $0x60] sm:$0xf]
    %v3588 = vld [vmem:[%s5 + $0x64] sm:$0xf]
    %v3589 = vld [vmem:[%s5 + $0x68] sm:$0xf]
    %v3590 = vld [vmem:[%s5 + $0x6c] sm:$0xf]
    %v3591 = vld [vmem:[%s5 + $0x70] sm:$0xf]
    %v3592 = vld [vmem:[%s5 + $0x74] sm:$0xf]
    %v3593 = vld [vmem:[%s5 + $0x78] sm:$0xf]
    %v3594 = vld [vmem:[%s5 + $0x7c] sm:$0xf]
    %v3595 = vld [vmem:[%s5 + $0x80] sm:$0xf]
    %v3596 = vld [vmem:[%s5 + $0x84] sm:$0xf]
    %v3597 = vld [vmem:[%s5 + $0x88] sm:$0xf]
    %v3598 = vld [vmem:[%s5 + $0x8c] sm:$0xf]
    %v3599 = vld [vmem:[%s5 + $0x90] sm:$0xf]
    %v3600 = vld [vmem:[%s5 + $0x94] sm:$0xf]
    %v3601 = vld [vmem:[%s5 + $0x98] sm:$0xf]
    %v3602 = vld [vmem:[%s5 + $0x9c] sm:$0xf]
    %v3603 = vld [vmem:[%s5 + $0xa0] sm:$0xf]
    %v3604 = vld [vmem:[%s5 + $0xa4] sm:$0xf]
    %v3605 = vld [vmem:[%s5 + $0xa8] sm:$0xf]
    %v3606 = vld [vmem:[%s5 + $0xac] sm:$0xf]
    %v3607 = vld [vmem:[%s5 + $0xb0] sm:$0xf]
    %v3608 = vld [vmem:[%s5 + $0xb4] sm:$0xf]
    %v3609 = vld [vmem:[%s5 + $0xb8] sm:$0xf]
    %v3610 = vld [vmem:[%s5 + $0xbc] sm:$0xf]
    %v3611 = vld [vmem:[%s5 + $0xc0] sm:$0xf]
    %v3612 = vld [vmem:[%s5 + $0xc4] sm:$0xf]
    %v3613 = vld [vmem:[%s5 + $0xc8] sm:$0xf]
    %v3614 = vld [vmem:[%s5 + $0xcc] sm:$0xf]
    %v3615 = vld [vmem:[%s5 + $0xd0] sm:$0xf]
    %v3616 = vld [vmem:[%s5 + $0xd4] sm:$0xf]
    %v3617 = vld [vmem:[%s5 + $0xd8] sm:$0xf]
    %v3618 = vld [vmem:[%s5 + $0xdc] sm:$0xf]
    %v3619 = vld [vmem:[%s5 + $0xe0] sm:$0xf]
    %v3620 = vld [vmem:[%s5 + $0xe4] sm:$0xf]
    %v3621 = vld [vmem:[%s5 + $0xe8] sm:$0xf]
    %v3622 = vld [vmem:[%s5 + $0xec] sm:$0xf]
    %v3623 = vld [vmem:[%s5 + $0xf0] sm:$0xf]
    %v3624 = vld [vmem:[%s5 + $0xf4] sm:$0xf]
    %v3625 = vld [vmem:[%s5 + $0xf8] sm:$0xf]
    %v3626 = vld [vmem:[%s5 + $0xfc] sm:$0xf]
    %v3627 = vld [vmem:[%s5 + $0x100] sm:$0xf]
    %v3628 = vld [vmem:[%s5 + $0x104] sm:$0xf]
    %v3629 = vld [vmem:[%s5 + $0x108] sm:$0xf]
    %v3630 = vld [vmem:[%s5 + $0x10c] sm:$0xf]
    %v3631 = vld [vmem:[%s5 + $0x110] sm:$0xf]
    %v3632 = vld [vmem:[%s5 + $0x114] sm:$0xf]
    %v3633 = vld [vmem:[%s5 + $0x118] sm:$0xf]
    %v3634 = vld [vmem:[%s5 + $0x11c] sm:$0xf]
    %v3635 = vld [vmem:[%s5 + $0x120] sm:$0xf]
    %v3636 = vld [vmem:[%s5 + $0x124] sm:$0xf]
    %v3637 = vld [vmem:[%s5 + $0x128] sm:$0xf]
    %v3638 = vld [vmem:[%s5 + $0x12c] sm:$0xf]
    %v3639 = vld [vmem:[%s5 + $0x130] sm:$0xf]
    %v3640 = vld [vmem:[%s5 + $0x134] sm:$0xf]
    %v3641 = vld [vmem:[%s5 + $0x138] sm:$0xf]
    %v3642 = vld [vmem:[%s5 + $0x13c] sm:$0xf]
    %v3643 = vld [vmem:[%s5 + $0x140] sm:$0xf]
    %v3644 = vld [vmem:[%s5 + $0x144] sm:$0xf]
    %v3645 = vld [vmem:[%s5 + $0x148] sm:$0xf]
    %v3646 = vld [vmem:[%s5 + $0x14c] sm:$0xf]
    %v3647 = vld [vmem:[%s5 + $0x150] sm:$0xf]
    %v3648 = vld [vmem:[%s5 + $0x154] sm:$0xf]
    %v3649 = vld [vmem:[%s5 + $0x158] sm:$0xf]
    %v3650 = vld [vmem:[%s5 + $0x15c] sm:$0xf]
    %v3651 = vld [vmem:[%s5 + $0x160] sm:$0xf]
    %v3652 = vld [vmem:[%s5 + $0x164] sm:$0xf]
    %v3653 = vld [vmem:[%s5 + $0x168] sm:$0xf]
    %v3654 = vld [vmem:[%s5 + $0x16c] sm:$0xf]
    %v3655 = vld [vmem:[%s5 + $0x170] sm:$0xf]
    %v3656 = vld [vmem:[%s5 + $0x174] sm:$0xf]
    %v3657 = vld [vmem:[%s5 + $0x178] sm:$0xf]
    %v3658 = vld [vmem:[%s5 + $0x17c] sm:$0xf]
    %v3659 = vld [vmem:[%s5 + $0x180] sm:$0xf]
    %v3660 = vld [vmem:[%s5 + $0x184] sm:$0xf]
    %v3661 = vld [vmem:[%s5 + $0x188] sm:$0xf]
    %v3662 = vld [vmem:[%s5 + $0x18c] sm:$0xf]
    %v3663 = vld [vmem:[%s6] sm:$0x1]
    %v3665 = vlaneseq
    %v3666 = vshrl.u32 %v3665, 7
    %v3667 = vsub.s32 0, %v3666
    %v3668 = vrot.slane %v3663, %v3667
    %v3770 = vunpack.c.l.b16 %v3563
    %v3771 = vunpack.c.l.b16 %v3564
    %v3772 = vunpack.c.l.b16 %v3565
    %v3773 = vunpack.c.l.b16 %v3566
    %v3774 = vunpack.c.l.b16 %v3567
    %v3775 = vunpack.c.l.b16 %v3568
    %v3776 = vunpack.c.l.b16 %v3569
    %v3777 = vunpack.c.l.b16 %v3570
    %v3778 = vunpack.c.l.b16 %v3571
    %v3779 = vunpack.c.l.b16 %v3572
    %v3780 = vunpack.c.l.b16 %v3573
    %v3781 = vunpack.c.l.b16 %v3574
    %v3782 = vunpack.c.l.b16 %v3575
    %v3783 = vunpack.c.l.b16 %v3576
    %v3784 = vunpack.c.l.b16 %v3577
    %v3785 = vunpack.c.l.b16 %v3578
    %v3786 = vunpack.c.l.b16 %v3579
    %v3787 = vunpack.c.l.b16 %v3580
    %v3788 = vunpack.c.l.b16 %v3581
    %v3789 = vunpack.c.l.b16 %v3582
    %v3790 = vunpack.c.l.b16 %v3583
    %v3791 = vunpack.c.l.b16 %v3584
    %v3792 = vunpack.c.l.b16 %v3585
    %v3793 = vunpack.c.l.b16 %v3586
    %v3794 = vunpack.c.l.b16 %v3587
    %v3795 = vunpack.c.l.b16 %v3588
    %v3796 = vunpack.c.l.b16 %v3589
    %v3797 = vunpack.c.l.b16 %v3590
    %v3798 = vunpack.c.l.b16 %v3591
    %v3799 = vunpack.c.l.b16 %v3592
    %v3800 = vunpack.c.l.b16 %v3593
    %v3801 = vunpack.c.l.b16 %v3594
    %v3802 = vunpack.c.l.b16 %v3595
    %v3803 = vunpack.c.l.b16 %v3596
    %v3804 = vunpack.c.l.b16 %v3597
    %v3805 = vunpack.c.l.b16 %v3598
    %v3806 = vunpack.c.l.b16 %v3599
    %v3807 = vunpack.c.l.b16 %v3600
    %v3808 = vunpack.c.l.b16 %v3601
    %v3809 = vunpack.c.l.b16 %v3602
    %v3810 = vunpack.c.l.b16 %v3603
    %v3811 = vunpack.c.l.b16 %v3604
    %v3812 = vunpack.c.l.b16 %v3605
    %v3813 = vunpack.c.l.b16 %v3606
    %v3814 = vunpack.c.l.b16 %v3607
    %v3815 = vunpack.c.l.b16 %v3608
    %v3816 = vunpack.c.l.b16 %v3609
    %v3817 = vunpack.c.l.b16 %v3610
    %v3818 = vunpack.c.l.b16 %v3611
    %v3819 = vunpack.c.l.b16 %v3612
    %v3820 = vunpack.c.l.b16 %v3613
    %v3821 = vunpack.c.l.b16 %v3614
    %v3822 = vunpack.c.l.b16 %v3615
    %v3823 = vunpack.c.l.b16 %v3616
    %v3824 = vunpack.c.l.b16 %v3617
    %v3825 = vunpack.c.l.b16 %v3618
    %v3826 = vunpack.c.l.b16 %v3619
    %v3827 = vunpack.c.l.b16 %v3620
    %v3828 = vunpack.c.l.b16 %v3621
    %v3829 = vunpack.c.l.b16 %v3622
    %v3830 = vunpack.c.l.b16 %v3623
    %v3831 = vunpack.c.l.b16 %v3624
    %v3832 = vunpack.c.l.b16 %v3625
    %v3833 = vunpack.c.l.b16 %v3626
    %v3834 = vunpack.c.l.b16 %v3627
    %v3835 = vunpack.c.l.b16 %v3628
    %v3836 = vunpack.c.l.b16 %v3629
    %v3837 = vunpack.c.l.b16 %v3630
    %v3838 = vunpack.c.l.b16 %v3631
    %v3839 = vunpack.c.l.b16 %v3632
    %v3840 = vunpack.c.l.b16 %v3633
    %v3841 = vunpack.c.l.b16 %v3634
    %v3842 = vunpack.c.l.b16 %v3635
    %v3843 = vunpack.c.l.b16 %v3636
    %v3844 = vunpack.c.l.b16 %v3637
    %v3845 = vunpack.c.l.b16 %v3638
    %v3846 = vunpack.c.l.b16 %v3639
    %v3847 = vunpack.c.l.b16 %v3640
    %v3848 = vunpack.c.l.b16 %v3641
    %v3849 = vunpack.c.l.b16 %v3642
    %v3850 = vunpack.c.l.b16 %v3643
    %v3851 = vunpack.c.l.b16 %v3644
    %v3852 = vunpack.c.l.b16 %v3645
    %v3853 = vunpack.c.l.b16 %v3646
    %v3854 = vunpack.c.l.b16 %v3647
    %v3855 = vunpack.c.l.b16 %v3648
    %v3856 = vunpack.c.l.b16 %v3649
    %v3857 = vunpack.c.l.b16 %v3650
    %v3858 = vunpack.c.l.b16 %v3651
    %v3859 = vunpack.c.l.b16 %v3652
    %v3860 = vunpack.c.l.b16 %v3653
    %v3861 = vunpack.c.l.b16 %v3654
    %v3862 = vunpack.c.l.b16 %v3655
    %v3863 = vunpack.c.l.b16 %v3656
    %v3864 = vunpack.c.l.b16 %v3657
    %v3865 = vunpack.c.l.b16 %v3658
    %v3866 = vunpack.c.l.b16 %v3659
    %v3867 = vunpack.c.l.b16 %v3660
    %v3868 = vunpack.c.l.b16 %v3661
    %v3869 = vunpack.c.l.b16 %v3662
    %v3870 = vpack.c.b16 %v3771, %v3770
    %v3871 = vpack.c.b16 %v3773, %v3772
    %v3872 = vpack.c.b16 %v3775, %v3774
    %v3873 = vpack.c.b16 %v3777, %v3776
    %v3874 = vpack.c.b16 %v3779, %v3778
    %v3875 = vpack.c.b16 %v3781, %v3780
    %v3876 = vpack.c.b16 %v3783, %v3782
    %v3877 = vpack.c.b16 %v3785, %v3784
    %v3878 = vpack.c.b16 %v3787, %v3786
    %v3879 = vpack.c.b16 %v3789, %v3788
    %v3880 = vpack.c.b16 %v3791, %v3790
    %v3881 = vpack.c.b16 %v3793, %v3792
    %v3882 = vpack.c.b16 %v3795, %v3794
    %v3883 = vpack.c.b16 %v3797, %v3796
    %v3884 = vpack.c.b16 %v3799, %v3798
    %v3885 = vpack.c.b16 %v3801, %v3800
    %v3886 = vpack.c.b16 %v3803, %v3802
    %v3887 = vpack.c.b16 %v3805, %v3804
    %v3888 = vpack.c.b16 %v3807, %v3806
    %v3889 = vpack.c.b16 %v3809, %v3808
    %v3890 = vpack.c.b16 %v3811, %v3810
    %v3891 = vpack.c.b16 %v3813, %v3812
    %v3892 = vpack.c.b16 %v3815, %v3814
    %v3893 = vpack.c.b16 %v3817, %v3816
    %v3894 = vpack.c.b16 %v3819, %v3818
    %v3895 = vpack.c.b16 %v3821, %v3820
    %v3896 = vpack.c.b16 %v3823, %v3822
    %v3897 = vpack.c.b16 %v3825, %v3824
    %v3898 = vpack.c.b16 %v3827, %v3826
    %v3899 = vpack.c.b16 %v3829, %v3828
    %v3900 = vpack.c.b16 %v3831, %v3830
    %v3901 = vpack.c.b16 %v3833, %v3832
    %v3902 = vpack.c.b16 %v3835, %v3834
    %v3903 = vpack.c.b16 %v3837, %v3836
    %v3904 = vpack.c.b16 %v3839, %v3838
    %v3905 = vpack.c.b16 %v3841, %v3840
    %v3906 = vpack.c.b16 %v3843, %v3842
    %v3907 = vpack.c.b16 %v3845, %v3844
    %v3908 = vpack.c.b16 %v3847, %v3846
    %v3909 = vpack.c.b16 %v3849, %v3848
    %v3910 = vpack.c.b16 %v3851, %v3850
    %v3911 = vpack.c.b16 %v3853, %v3852
    %v3912 = vpack.c.b16 %v3855, %v3854
    %v3913 = vpack.c.b16 %v3857, %v3856
    %v3914 = vpack.c.b16 %v3859, %v3858
    %v3915 = vpack.c.b16 %v3861, %v3860
    %v3916 = vpack.c.b16 %v3863, %v3862
    %v3917 = vpack.c.b16 %v3865, %v3864
    %v3918 = vpack.c.b16 %v3867, %v3866
    %v3919 = vpack.c.b16 %v3869, %v3868
    %v3971 = vsel %vm770, %v3562, 0
    %3973 = vmatprep.subr.bf16.mxu0 0
    %3974 = vmatpush1.bf16.msra.mxu0 %v3870
    %3975 = vmatprep.subr.bf16.mxu0 0
    %3976 = vmatpush1.bf16.msra.mxu0 %v3871
    %3977 = vmatprep.subr.bf16.mxu0 0
    %3978 = vmatpush1.bf16.msra.mxu0 %v3872
    %3979 = vmatprep.subr.bf16.mxu0 0
    %3980 = vmatpush1.bf16.msra.mxu0 %v3873
    %3981 = vmatprep.subr.bf16.mxu0 0
    %3982 = vmatpush1.bf16.msra.mxu0 %v3874
    %3983 = vmatprep.subr.bf16.mxu0 0
    %3984 = vmatpush1.bf16.msra.mxu0 %v3875
    %3985 = vmatprep.subr.bf16.mxu0 0
    %3986 = vmatpush1.bf16.msra.mxu0 %v3876
    %3987 = vmatprep.subr.bf16.mxu0 0
    %3988 = vmatpush1.bf16.msra.mxu0 %v3877
    %3989 = vmatprep.subr.bf16.mxu0 0
    %3990 = vmatpush1.bf16.msra.mxu0 %v3878
    %3991 = vmatprep.subr.bf16.mxu0 0
    %3992 = vmatpush1.bf16.msra.mxu0 %v3879
    %3993 = vmatprep.subr.bf16.mxu0 0
    %3994 = vmatpush1.bf16.msra.mxu0 %v3880
    %3995 = vmatprep.subr.bf16.mxu0 0
    %3996 = vmatpush1.bf16.msra.mxu0 %v3881
    %3997 = vmatprep.subr.bf16.mxu0 0
    %3998 = vmatpush1.bf16.msra.mxu0 %v3882
    %3999 = vmatprep.subr.bf16.mxu0 0
    %4000 = vmatpush1.bf16.msra.mxu0 %v3883
    %4001 = vmatprep.subr.bf16.mxu0 0
    %4002 = vmatpush1.bf16.msra.mxu0 %v3884
    %4003 = vmatprep.subr.bf16.mxu0 0
    %4004 = vmatpush1.bf16.msra.mxu0 %v3885
    %4005 = vmatprep.mubr.bf16.mxu0 %v3557
    %4006 = vmatmul.mubr.bf16.gmra.mrb[0].mxu0 %v3556
    %v4007 = vpop.f32.mrb[0].mxu0
    %v4008 = vadd.f32 %v3668, %v4007
    %v4009 = vpop.f32.mrb[0].mxu0
    %v4010 = vpop.f32.mrb[0].mxu0
    %v4011 = vpop.f32.mrb[0].mxu0
    %4012 = vdwg.mxu0
    %4013 = vmatprep.subr.bf16.mxu0 0
    %4014 = vmatpush1.bf16.msra.mxu0 %v3886
    %4015 = vmatprep.subr.bf16.mxu0 0
    %4016 = vmatpush1.bf16.msra.mxu0 %v3887
    %4017 = vmatprep.subr.bf16.mxu0 0
    %4018 = vmatpush1.bf16.msra.mxu0 %v3888
    %4019 = vmatprep.subr.bf16.mxu0 0
    %4020 = vmatpush1.bf16.msra.mxu0 %v3889
    %4021 = vmatprep.subr.bf16.mxu0 0
    %4022 = vmatpush1.bf16.msra.mxu0 %v3890
    %4023 = vmatprep.subr.bf16.mxu0 0
    %4024 = vmatpush1.bf16.msra.mxu0 %v3891
    %4025 = vmatprep.subr.bf16.mxu0 0
    %4026 = vmatpush1.bf16.msra.mxu0 %v3892
    %4027 = vmatprep.subr.bf16.mxu0 0
    %4028 = vmatpush1.bf16.msra.mxu0 %v3893
    %4029 = vmatprep.subr.bf16.mxu0 0
    %4030 = vmatpush1.bf16.msra.mxu0 %v3894
    %4031 = vmatprep.subr.bf16.mxu0 0
    %4032 = vmatpush1.bf16.msra.mxu0 %v3895
    %4033 = vmatprep.subr.bf16.mxu0 0
    %4034 = vmatpush1.bf16.msra.mxu0 %v3896
    %4035 = vmatprep.subr.bf16.mxu0 0
    %4036 = vmatpush1.bf16.msra.mxu0 %v3897
    %4037 = vmatprep.subr.bf16.mxu0 0
    %4038 = vmatpush1.bf16.msra.mxu0 %v3898
    %4039 = vmatprep.subr.bf16.mxu0 0
    %4040 = vmatpush1.bf16.msra.mxu0 %v3899
    %4041 = vmatprep.subr.bf16.mxu0 0
    %4042 = vmatpush1.bf16.msra.mxu0 %v3900
    %4043 = vmatprep.subr.bf16.mxu0 0
    %4044 = vmatpush1.bf16.msra.mxu0 %v3901
    %4045 = vmatprep.mubr.bf16.mxu0 %v3559
    %4046 = vmatmul.mubr.bf16.gmra.mrb[0].mxu0 %v3558
    %v4047 = vpop.f32.mrb[0].mxu0
    %v4048 = vadd.f32 %v4008, %v4047
    %v4049 = vpop.f32.mrb[0].mxu0
    %v4050 = vpop.f32.mrb[0].mxu0
    %v4051 = vpop.f32.mrb[0].mxu0
    %4052 = vdwg.mxu0
    %4053 = vmatprep.subr.bf16.mxu0 0
    %4054 = vmatpush1.bf16.msra.mxu0 %v3902
    %4055 = vmatprep.subr.bf16.mxu0 0
    %4056 = vmatpush1.bf16.msra.mxu0 %v3903
    %4057 = vmatprep.subr.bf16.mxu0 0
    %4058 = vmatpush1.bf16.msra.mxu0 %v3904
    %4059 = vmatprep.subr.bf16.mxu0 0
    %4060 = vmatpush1.bf16.msra.mxu0 %v3905
    %4061 = vmatprep.subr.bf16.mxu0 0
    %4062 = vmatpush1.bf16.msra.mxu0 %v3906
    %4063 = vmatprep.subr.bf16.mxu0 0
    %4064 = vmatpush1.bf16.msra.mxu0 %v3907
    %4065 = vmatprep.subr.bf16.mxu0 0
    %4066 = vmatpush1.bf16.msra.mxu0 %v3908
    %4067 = vmatprep.subr.bf16.mxu0 0
    %4068 = vmatpush1.bf16.msra.mxu0 %v3909
    %4069 = vmatprep.subr.bf16.mxu0 0
    %4070 = vmatpush1.bf16.msra.mxu0 %v3910
    %4071 = vmatprep.subr.bf16.mxu0 0
    %4072 = vmatpush1.bf16.msra.mxu0 %v3911
    %4073 = vmatprep.subr.bf16.mxu0 0
    %4074 = vmatpush1.bf16.msra.mxu0 %v3912
    %4075 = vmatprep.subr.bf16.mxu0 0
    %4076 = vmatpush1.bf16.msra.mxu0 %v3913
    %4077 = vmatprep.subr.bf16.mxu0 0
    %4078 = vmatpush1.bf16.msra.mxu0 %v3914
    %4079 = vmatprep.subr.bf16.mxu0 0
    %4080 = vmatpush1.bf16.msra.mxu0 %v3915
    %4081 = vmatprep.subr.bf16.mxu0 0
    %4082 = vmatpush1.bf16.msra.mxu0 %v3916
    %4083 = vmatprep.subr.bf16.mxu0 0
    %4084 = vmatpush1.bf16.msra.mxu0 %v3917
    %4085 = vmatprep.mubr.bf16.mxu0 %v3561
    %4086 = vmatmul.mubr.bf16.gmra.mrb[0].mxu0 %v3560
    %v4087 = vpop.f32.mrb[0].mxu0
    %v4088 = vadd.f32 %v4048, %v4087
    %v4089 = vpop.f32.mrb[0].mxu0
    %v4090 = vpop.f32.mrb[0].mxu0
    %v4091 = vpop.f32.mrb[0].mxu0
    %4092 = vdwg.mxu0
    %4093 = vmatprep.subr.bf16.mxu0 0
    %4094 = vmatpush1.bf16.msra.mxu0 %v3918
    %4095 = vmatprep.subr.bf16.mxu0 0
    %4096 = vmatpush1.bf16.msra.mxu0 %v3919
    %4097 = vmatprep.subr.bf16.mxu0 0
    %4098 = vmatpush1.bf16.msra.mxu0 0
    %4099 = vmatprep.subr.bf16.mxu0 0
    %4100 = vmatpush1.bf16.msra.mxu0 0
    %4101 = vmatprep.subr.bf16.mxu0 0
    %4102 = vmatpush1.bf16.msra.mxu0 0
    %4103 = vmatprep.subr.bf16.mxu0 0
    %4104 = vmatpush1.bf16.msra.mxu0 0
    %4105 = vmatprep.subr.bf16.mxu0 0
    %4106 = vmatpush1.bf16.msra.mxu0 0
    %4107 = vmatprep.subr.bf16.mxu0 0
    %4108 = vmatpush1.bf16.msra.mxu0 0
    %4109 = vmatprep.subr.bf16.mxu0 0
    %4110 = vmatpush1.bf16.msra.mxu0 0
    %4111 = vmatprep.subr.bf16.mxu0 0
    %4112 = vmatpush1.bf16.msra.mxu0 0
    %4113 = vmatprep.subr.bf16.mxu0 0
    %4114 = vmatpush1.bf16.msra.mxu0 0
    %4115 = vmatprep.subr.bf16.mxu0 0
    %4116 = vmatpush1.bf16.msra.mxu0 0
    %4117 = vmatprep.subr.bf16.mxu0 0
    %4118 = vmatpush1.bf16.msra.mxu0 0
    %4119 = vmatprep.subr.bf16.mxu0 0
    %4120 = vmatpush1.bf16.msra.mxu0 0
    %4121 = vmatprep.subr.bf16.mxu0 0
    %4122 = vmatpush1.bf16.msra.mxu0 0
    %4123 = vmatprep.subr.bf16.mxu0 0
    %4124 = vmatpush1.bf16.msra.mxu0 0
    %4125 = vmatprep.mubr.bf16.mxu0 0
    %4126 = vmatmul.mubr.bf16.gmra.mrb[0].mxu0 %v3971
    %v4127 = vpop.f32.mrb[0].mxu0
    %v4128 = vadd.f32 %v4088, %v4127
    %v4129 = vpop.f32.mrb[0].mxu0
    %v4130 = vpop.f32.mrb[0].mxu0
    %v4131 = vpop.f32.mrb[0].mxu0
    %4132 = vdwg.mxu0
    %v4133 = vmax.f32 %v4128, 0.0
    %v4134 = vpack.c.bf16 %v4133, %v4133
    %v4135 = vld [vmem:[%s7] sm:$0xf]
    %v4136 = vld [vmem:[%s7 + $0x4] sm:$0xf]
    %v4137 = vld [vmem:[%s7 + $0x8] sm:$0xf]
    %v4138 = vld [vmem:[%s7 + $0xc] sm:$0xf]
    %v4139 = vld [vmem:[%s7 + $0x10] sm:$0xf]
    %v4140 = vld [vmem:[%s7 + $0x14] sm:$0xf]
    %v4141 = vld [vmem:[%s7 + $0x18] sm:$0xf]
    %v4142 = vld [vmem:[%s7 + $0x1c] sm:$0xf]
    %v4143 = vld [vmem:[%s7 + $0x20] sm:$0xf]
    %v4144 = vld [vmem:[%s7 + $0x24] sm:$0xf]
    %v4145 = vld [vmem:[%s7 + $0x28] sm:$0xf]
    %v4146 = vld [vmem:[%s7 + $0x2c] sm:$0xf]
    %v4147 = vld [vmem:[%s7 + $0x30] sm:$0xf]
    %v4148 = vld [vmem:[%s7 + $0x34] sm:$0xf]
    %v4149 = vld [vmem:[%s7 + $0x38] sm:$0xf]
    %v4150 = vld [vmem:[%s8] sm:$0x1]
    %v4152 = vlaneseq
    %v4153 = vshrl.u32 %v4152, 7
    %v4154 = vsub.s32 0, %v4153
    %v4155 = vrot.slane %v4150, %v4154
    %v4172 = vunpack.c.l.b16 %v4135
    %v4173 = vunpack.c.l.b16 %v4136
    %v4174 = vunpack.c.l.b16 %v4137
    %v4175 = vunpack.c.l.b16 %v4138
    %v4176 = vunpack.c.l.b16 %v4139
    %v4177 = vunpack.c.l.b16 %v4140
    %v4178 = vunpack.c.l.b16 %v4141
    %v4179 = vunpack.c.l.b16 %v4142
    %v4180 = vunpack.c.l.b16 %v4143
    %v4181 = vunpack.c.l.b16 %v4144
    %v4182 = vunpack.c.l.b16 %v4145
    %v4183 = vunpack.c.l.b16 %v4146
    %v4184 = vunpack.c.l.b16 %v4147
    %v4185 = vunpack.c.l.b16 %v4148
    %v4186 = vunpack.c.l.b16 %v4149
    %v4187 = vpack.c.b16 %v4173, %v4172
    %v4188 = vpack.c.b16 %v4175, %v4174
    %v4189 = vpack.c.b16 %v4177, %v4176
    %v4190 = vpack.c.b16 %v4179, %v4178
    %v4191 = vpack.c.b16 %v4181, %v4180
    %v4192 = vpack.c.b16 %v4183, %v4182
    %v4193 = vpack.c.b16 %v4185, %v4184
    %v4194 = vpack.c.b16 %v4186, %v4186
    %v4203 = vsel %vm746, %v4134, 0
    %v4206 = vsel %vm755, %v4194, 0
    %4208 = vmatprep.subr.bf16.mxu0 0
    %4209 = vmatpush1.bf16.msra.mxu0 %v4187
    %4210 = vmatprep.subr.bf16.mxu0 0
    %4211 = vmatpush1.bf16.msra.mxu0 %v4188
    %4212 = vmatprep.subr.bf16.mxu0 0
    %4213 = vmatpush1.bf16.msra.mxu0 %v4189
    %4214 = vmatprep.subr.bf16.mxu0 0
    %4215 = vmatpush1.bf16.msra.mxu0 %v4190
    %4216 = vmatprep.subr.bf16.mxu0 0
    %4217 = vmatpush1.bf16.msra.mxu0 %v4191
    %4218 = vmatprep.subr.bf16.mxu0 0
    %4219 = vmatpush1.bf16.msra.mxu0 %v4192
    %4220 = vmatprep.subr.bf16.mxu0 0
    %4221 = vmatpush1.bf16.msra.mxu0 %v4193
    %4222 = vmatprep.subr.bf16.mxu0 0
    %4223 = vmatpush1.bf16.msra.mxu0 %v4206
    %4224 = vmatprep.subr.bf16.mxu0 0
    %4225 = vmatpush1.bf16.msra.mxu0 0
    %4226 = vmatprep.subr.bf16.mxu0 0
    %4227 = vmatpush1.bf16.msra.mxu0 0
    %4228 = vmatprep.subr.bf16.mxu0 0
    %4229 = vmatpush1.bf16.msra.mxu0 0
    %4230 = vmatprep.subr.bf16.mxu0 0
    %4231 = vmatpush1.bf16.msra.mxu0 0
    %4232 = vmatprep.subr.bf16.mxu0 0
    %4233 = vmatpush1.bf16.msra.mxu0 0
    %4234 = vmatprep.subr.bf16.mxu0 0
    %4235 = vmatpush1.bf16.msra.mxu0 0
    %4236 = vmatprep.subr.bf16.mxu0 0
    %4237 = vmatpush1.bf16.msra.mxu0 0
    %4238 = vmatprep.subr.bf16.mxu0 0
    %4239 = vmatpush1.bf16.msra.mxu0 0
    %4240 = vmatprep.mubr.bf16.mxu0 0
    %4241 = vmatmul.mubr.bf16.gmra.mrb[0].mxu0 %v4203
    %v4242 = vpop.f32.mrb[0].mxu0
    %v4243 = vadd.f32 %v4155, %v4242
    %v4244 = vpop.f32.mrb[0].mxu0
    %v4245 = vpop.f32.mrb[0].mxu0
    %v4246 = vpop.f32.mrb[0].mxu0
    %4247 = vdwg.mxu0
    %v4248 = vmax.f32 %v4243, 0.0
    %v4249 = vpack.c.bf16 %v4248, %v4248
    %v4250 = vld [vmem:[%s9] sm:$0xf]
    %v4251 = vld [vmem:[%s9 + $0x4] sm:$0xf]
    %v4252 = vld [vmem:[%s9 + $0x8] sm:$0xf]
    %v4253 = vld [vmem:[%s9 + $0xc] sm:$0xf]
    %v4254 = vld [vmem:[%s9 + $0x10] sm:$0xf]
    %v4255 = vld [vmem:[%s9 + $0x14] sm:$0xf]
    %v4256 = vld [vmem:[%s9 + $0x18] sm:$0xf]
    %v4257 = vld [vmem:[%s9 + $0x1c] sm:$0xf]
    %v4258 = vld [vmem:[%s9 + $0x20] sm:$0xf]
    %v4259 = vld [vmem:[%s9 + $0x24] sm:$0xf]
    %v4260 = vld [vmem:[%s9 + $0x28] sm:$0x3]
    %v4261 = vld [vmem:[%s10] sm:$0x1]
    %v4263 = vlaneseq
    %v4264 = vshrl.u32 %v4263, 7
    %v4265 = vsub.s32 0, %v4264
    %v4266 = vrot.slane %v4261, %v4265
    %v4279 = vunpack.c.l.b16 %v4250
    %v4280 = vunpack.c.l.b16 %v4251
    %v4281 = vunpack.c.l.b16 %v4252
    %v4282 = vunpack.c.l.b16 %v4253
    %v4283 = vunpack.c.l.b16 %v4254
    %v4284 = vunpack.c.l.b16 %v4255
    %v4285 = vunpack.c.l.b16 %v4256
    %v4286 = vunpack.c.l.b16 %v4257
    %v4287 = vunpack.c.l.b16 %v4258
    %v4288 = vunpack.c.l.b16 %v4259
    %v4289 = vunpack.c.l.b16 %v4260
    %v4290 = vpack.c.b16 %v4280, %v4279
    %v4291 = vpack.c.b16 %v4282, %v4281
    %v4292 = vpack.c.b16 %v4284, %v4283
    %v4293 = vpack.c.b16 %v4286, %v4285
    %v4294 = vpack.c.b16 %v4288, %v4287
    %v4295 = vpack.c.b16 %v4289, %v4289
    %vm4301 = vcmask 687104
    %v4303 = vsel %vm4301, %v4249, 0
    %vm4305 = vcmask 1041408
    %v4307 = vsel %vm4305, %v4295, 0
    %4309 = vmatprep.subr.bf16.mxu0 0
    %4310 = vmatpush1.bf16.msra.mxu0 %v4290
    %4311 = vmatprep.subr.bf16.mxu0 0
    %4312 = vmatpush1.bf16.msra.mxu0 %v4291
    %4313 = vmatprep.subr.bf16.mxu0 0
    %4314 = vmatpush1.bf16.msra.mxu0 %v4292
    %4315 = vmatprep.subr.bf16.mxu0 0
    %4316 = vmatpush1.bf16.msra.mxu0 %v4293
    %4317 = vmatprep.subr.bf16.mxu0 0
    %4318 = vmatpush1.bf16.msra.mxu0 %v4294
    %4319 = vmatprep.subr.bf16.mxu0 0
    %4320 = vmatpush1.bf16.msra.mxu0 %v4307
    %4321 = vmatprep.subr.bf16.mxu0 0
    %4322 = vmatpush1.bf16.msra.mxu0 0
    %4323 = vmatprep.subr.bf16.mxu0 0
    %4324 = vmatpush1.bf16.msra.mxu0 0
    %4325 = vmatprep.subr.bf16.mxu0 0
    %4326 = vmatpush1.bf16.msra.mxu0 0
    %4327 = vmatprep.subr.bf16.mxu0 0
    %4328 = vmatpush1.bf16.msra.mxu0 0
    %4329 = vmatprep.subr.bf16.mxu0 0
    %4330 = vmatpush1.bf16.msra.mxu0 0
    %4331 = vmatprep.subr.bf16.mxu0 0
    %4332 = vmatpush1.bf16.msra.mxu0 0
    %4333 = vmatprep.subr.bf16.mxu0 0
    %4334 = vmatpush1.bf16.msra.mxu0 0
    %4335 = vmatprep.subr.bf16.mxu0 0
    %4336 = vmatpush1.bf16.msra.mxu0 0
    %4337 = vmatprep.subr.bf16.mxu0 0
    %4338 = vmatpush1.bf16.msra.mxu0 0
    %4339 = vmatprep.subr.bf16.mxu0 0
    %4340 = vmatpush1.bf16.msra.mxu0 0
    %4341 = vmatprep.mubr.bf16.mxu0 0
    %4342 = vmatmul.mubr.bf16.gmra.mrb[0].mxu0 %v4303
    %v4343 = vpop.f32.mrb[0].mxu0
    %v4344 = vadd.f32 %v4266, %v4343
    %v4345 = vpop.f32.mrb[0].mxu0
    %v4346 = vpop.f32.mrb[0].mxu0
    %v4347 = vpop.f32.mrb[0].mxu0
    %4348 = vdwg.mxu0
    %4349 = vst [vmem:[#allocation3] sm:$0x3] %v4344
    // Predicated region
    $region46: #{coolnet_forward.1} parent=1 // pred_check
      _
    $region47: #{coolnet_forward.1} parent=1 // pred_check_branch
      %4351 = sbr.rel (0) target = $region49
    $region48: #{coolnet_forward.1} parent=1 // pred_region
      %s4353 = ssub.s32 32, 32
      %4354 = vsyncadd [#allocation4], %s4353
      %s4356 = sshll.u32 [#allocation3], 4
      %s4357 = int_to_ptr.vmem [resolvable:$true] %s4356
      %4359 = dma.vmem_to_hbm [thread:$0]  %s4357, 32, %s11, [#allocation4]
    $region49: #{coolnet_forward.1} parent=1 // pred_fallthru
      _
    // Predicated region
    $region50: #{coolnet_forward.1} parent=1 // pred_check
      _
    $region51: #{coolnet_forward.1} parent=1 // pred_check_branch
      %4361 = sbr.rel (0) target = $region53
    $region52: #{coolnet_forward.1} parent=1 // pred_region
      %4362 = dma.done [#allocation4], 32
    $region53: #{coolnet_forward.1} parent=1 // pred_fallthru
      _
    %4363 = vsyncpa [#allocation4], 1

</llo_original>
